<compile_context>
chip_gen: v6e
topology: v6e:2x2x1
jax: 0.10.0
libtpu: 0.0.40
codegen_flags: <defaults>
</compile_context>

<pallas_src>
from functools import partial

import numpy as np
import jax
import jax.numpy as jnp
from jax.experimental import pallas as pl
from jax.experimental.pallas import tpu as pltpu

PLANET_DIMENSION = 6
NUM_HEADS = 2
HEAD_DIM = PLANET_DIMENSION // NUM_HEADS
DP = 8                                   # feature dim padded to one sublane tile
PAD = 512                                # joint-distribution side
MIN_FLOAT = float(np.nextafter(-np.inf, 0, dtype=np.float32))   # -3.4028235e38
NEG_BIG = -1e30                          # additive bias that removes padded keys


def _round_up(x, m):
    return ((x + m - 1) // m) * m


def _vmem():
    return pl.BlockSpec(memory_space=pltpu.MemorySpace.VMEM)


def _smem():
    return pl.BlockSpec(memory_space=pltpu.MemorySpace.SMEM)


# --------------------------------------------------------------------------
# Shared attention + conv-score math (traced inside both kernels).
# Activations are (DP, NP): features on sublanes, planets on lanes.
# --------------------------------------------------------------------------
def _attn_conv_scores(q_t, kv_t, w_ref, n_real, n_pad):
    # Packed weights: [0:8]=Wq*scale, [8:16]=Wk, [16:24]=Wv, [24:32]=Wo,
    # [32:40] bias block (cols: bq*scale, bk, bv, bo, conv_w, [cb,...]).
    wq = w_ref[0:8, :]
    wk = w_ref[8:16, :]
    wv = w_ref[16:24, :]
    wo = w_ref[24:32, :]
    bq = w_ref[32:40, 0:1]
    bk = w_ref[32:40, 1:2]
    bv = w_ref[32:40, 2:3]
    bo = w_ref[32:40, 3:4]
    cw = w_ref[32:40, 4:5]
    cb = w_ref[32:33, 5:6]

    q = jnp.dot(wq, q_t, preferred_element_type=jnp.float32) + bq    # (8, NP)
    k = jnp.dot(wk, kv_t, preferred_element_type=jnp.float32) + bk   # (8, NP)
    v = jnp.dot(wv, kv_t, preferred_element_type=jnp.float32) + bv   # (8, NP)

    # additive key mask for padded (non-existent) planets; keys sit on sublanes
    if n_pad > n_real:
        key_sub = jax.lax.broadcasted_iota(jnp.int32, (n_pad, 1), 0)
        key_bias = jnp.where(key_sub >= n_real,
                             jnp.float32(NEG_BIG), jnp.float32(0.0))
    else:
        key_bias = None

    sub = jax.lax.broadcasted_iota(jnp.int32, (DP, 1), 0)
    concat = jnp.zeros((DP, n_pad), jnp.float32)
    for h in range(NUM_HEADS):   # static unroll (2 heads)
        hmask = ((sub >= h * HEAD_DIM) &
                 (sub < (h + 1) * HEAD_DIM)).astype(jnp.float32)      # (8,1)
        qh = q * hmask
        vh = v * hmask
        # logits with keys on sublanes, queries on lanes: s[j, i] = k_j . q_i
        s = jax.lax.dot_general(k, qh, (((0,), (0,)), ((), ())),
                                preferred_element_type=jnp.float32)   # (NP, NP)
        if key_bias is not None:
            s = s + key_bias
        m = jnp.max(s, axis=0, keepdims=True)                          # (1, NP)
        e = jnp.exp(s - m)
        l = jnp.sum(e, axis=0, keepdims=True)                          # (1, NP)
        # deferred normalization: scale the small (8, NP) result, not (NP, NP)
        ho = jnp.dot(vh, e, preferred_element_type=jnp.float32)        # (8, NP)
        concat = concat + ho * pl.reciprocal(l, approx=True)

    attn = jnp.dot(wo, concat, preferred_element_type=jnp.float32) + bo  # (8,NP)
    # Conv1d(in=D, out=1, kernel_size=1) == weighted sum over the feature axis
    score = jnp.sum(attn * cw, axis=0, keepdims=True) + cb               # (1,NP)
    return score


# --------------------------------------------------------------------------
# Kernel 1: source-planet attention.  Emits raw masked log-scores (for
# sampling) and the normalized planet distribution (for the joint).
# --------------------------------------------------------------------------
def _source_kernel(x_ref, w_ref, score_ref, prob_ref, *, n_real, n_pad):
    x_t = x_ref[...]                                                   # (8, NP)
    score = _attn_conv_scores(x_t, x_t, w_ref, n_real, n_pad)          # (1, NP)

    lane = jax.lax.broadcasted_iota(jnp.int32, (1, n_pad), 1)
    not_owned = x_t[0:1, :] == 0.0          # un-owned real planets and all pads
    masked = not_owned | (lane >= n_real)
    score = jnp.where(masked, jnp.float32(MIN_FLOAT), score)
    score_ref[...] = score

    m = jnp.max(score, axis=1, keepdims=True)
    e = jnp.exp(score - m)
    prob_ref[...] = e / jnp.sum(e, axis=1, keepdims=True)


def source_scores(x_t, w_packed, n_real):
    n_pad = x_t.shape[1]
    kernel = partial(_source_kernel, n_real=n_real, n_pad=n_pad)
    return pl.pallas_call(
        kernel,
        out_shape=(jax.ShapeDtypeStruct((1, n_pad), jnp.float32),
                   jax.ShapeDtypeStruct((1, n_pad), jnp.float32)),
        in_specs=[_vmem(), _vmem()],
        out_specs=(_vmem(), _vmem()),
    )(x_t, w_packed)


# --------------------------------------------------------------------------
# Kernel 2: destination-planet attention fused with the (512, 512) joint
# probability distribution.  src_idx arrives as an SMEM scalar; the
# modulation row and the destination mask are derived in-kernel.
# --------------------------------------------------------------------------
def _dest_kernel(x_ref, w_ref, s1_ref, idx_ref, score_ref, joint_ref,
                 *, n_real, n_pad):
    x_t = x_ref[...]                                                   # (8, NP)
    idx = idx_ref[0]

    lane = jax.lax.broadcasted_iota(jnp.int32, (1, n_pad), 1)
    sel = (lane == idx).astype(jnp.float32)                            # one-hot
    mod = jnp.sum(x_t * sel, axis=1, keepdims=True)                    # (8, 1)
    q_t = x_t + mod                                                    # query = planets + planets[src]

    score = _attn_conv_scores(q_t, x_t, w_ref, n_real, n_pad)          # (1, NP)
    masked = (lane == idx) | (lane >= n_real)
    score = jnp.where(masked, jnp.float32(MIN_FLOAT), score)
    score_ref[...] = score

    m = jnp.max(score, axis=1, keepdims=True)
    e = jnp.exp(score - m)
    p2 = e / jnp.sum(e, axis=1, keepdims=True)                         # (1, NP)

    # joint[i, j] = p1[i] * p2[j]; columns >= NP are zero padding.
    s1_col = s1_ref[...]                                               # (512, 1)
    joint_ref[:, 0:n_pad] = s1_col * p2                                # (512, NP)
    if n_pad < PAD:
        joint_ref[:, n_pad:PAD] = jnp.zeros((PAD, PAD - n_pad), jnp.float32)


def dest_scores_and_joint(x_t, w_packed, s1_col, src_idx, n_real):
    n_pad = x_t.shape[1]
    kernel = partial(_dest_kernel, n_real=n_real, n_pad=n_pad)
    return pl.pallas_call(
        kernel,
        out_shape=(jax.ShapeDtypeStruct((1, n_pad), jnp.float32),
                   jax.ShapeDtypeStruct((PAD, PAD), jnp.float32)),
        in_specs=[_vmem(), _vmem(), _vmem(), _smem()],
        out_specs=(_vmem(), _vmem()),
    )(x_t, w_packed, s1_col, src_idx)


# --------------------------------------------------------------------------
# Parameter packing (one aligned buffer per attention module -> one DMA).
# --------------------------------------------------------------------------
def pack_attention_params(in_w, in_b, out_w, out_b, conv_w, conv_b):
    D = PLANET_DIMENSION
    scale = 1.0 / np.sqrt(HEAD_DIM)          # folded into Wq / bq (torch scaling)
    wq, wk, wv = in_w[:D], in_w[D:2 * D], in_w[2 * D:]
    bq, bk, bv = in_b[:D], in_b[D:2 * D], in_b[2 * D:]

    def pad88(m):
        return jnp.zeros((8, 8), jnp.float32).at[:D, :D].set(m)

    bias = jnp.zeros((8, 8), jnp.float32)
    bias = bias.at[:D, 0].set(bq * scale)
    bias = bias.at[:D, 1].set(bk)
    bias = bias.at[:D, 2].set(bv)
    bias = bias.at[:D, 3].set(out_b)
    bias = bias.at[:D, 4].set(conv_w.reshape(D))
    bias = bias.at[0, 5].set(conv_b[0])

    return jnp.concatenate(
        [pad88(wq * scale), pad88(wk), pad88(wv), pad88(out_w), bias], axis=0)


def init_params(key):
    D = PLANET_DIMENSION
    ks = jax.random.split(key, 6)

    def mha_params(k):
        k1, k2, k3, k4 = jax.random.split(k, 4)
        return (jax.random.normal(k1, (3 * D, D), jnp.float32) * 0.4,
                jax.random.normal(k2, (3 * D,), jnp.float32) * 0.1,
                jax.random.normal(k3, (D, D), jnp.float32) * 0.4,
                jax.random.normal(k4, (D,), jnp.float32) * 0.1)

    def conv_params(k):
        k1, k2 = jax.random.split(k, 2)
        return (jax.random.normal(k1, (1, D, 1), jnp.float32) * 0.4,
                jax.random.normal(k2, (1,), jnp.float32) * 0.1)

    src = pack_attention_params(*mha_params(ks[0]), *conv_params(ks[1]))
    dst = pack_attention_params(*mha_params(ks[2]), *conv_params(ks[3]))
    vW = jax.random.normal(ks[4], (1, 2 * D), jnp.float32) * 0.3
    vb = jax.random.normal(ks[5], (1,), jnp.float32) * 0.1
    return dict(src=src, dst=dst, vW=vW, vb=vb)


# --------------------------------------------------------------------------
# Forward pass (mirrors Net.forward).
# --------------------------------------------------------------------------
def net_forward(X, params, key):
    assert X.shape[0] == 1 and 0 < X.shape[1] <= PAD and X.shape[2] == PLANET_DIMENSION
    n = X.shape[1]
    n_pad = max(128, _round_up(n, 128))
    planets = X[0]                                                    # (N, 6)

    # transposed, lane-dense layout: features on sublanes, planets on lanes
    x_t = jnp.zeros((DP, n_pad), jnp.float32).at[:PLANET_DIMENSION, :n].set(planets.T)

    score1, p1 = source_scores(x_t, params["src"], n)                 # (1, NP) x2

    key, k1 = jax.random.split(key)
    src_idx = jax.random.categorical(k1, score1[0, :n])               # raw log-scores

    s1_col = jnp.pad(p1, ((0, 0), (0, PAD - n_pad))).reshape(PAD, 1)  # (512, 1)

    score2, joint = dest_scores_and_joint(
        x_t, params["dst"], s1_col, src_idx.astype(jnp.int32).reshape(1), n)

    key, k2 = jax.random.split(key)
    dst_idx = jax.random.categorical(k2, score2[0, :n])

    # vantage value head: Linear(2D -> 1) + sigmoid (tiny glue matmul)
    sel = jnp.concatenate([planets[src_idx], planets[dst_idx]])[None, :]   # (1, 12)
    v_out = jax.nn.sigmoid(sel @ params["vW"].T + params["vb"])            # (1, 1)

    p_out = joint.reshape(1, PAD * PAD)                                    # (1, 262144)
    return p_out, v_out, src_idx, dst_idx


# --------------------------------------------------------------------------
if __name__ == "__main__":
    key = jax.random.PRNGKey(0)
    kx, kp, ks = jax.random.split(key, 3)

    N = 8
    X = jax.random.normal(kx, (1, N, PLANET_DIMENSION), jnp.float32)
    # ownership bit (feature 0): planet 0 owned, last planet not owned,
    # matching the asserts inside my_planets_mask of the original module.
    owner = jnp.array([1.0, 1.0, 0.0, 1.0, 0.0, 0.0, 1.0, 0.0], jnp.float32)
    X = X.at[0, :, 0].set(owner)

    params = init_params(kp)
    fwd = jax.jit(net_forward)
    p_out, v_out, src_idx, dst_idx = fwd(X, params, ks)
    jax.block_until_ready((p_out, v_out, src_idx, dst_idx))

    assert p_out.shape == (1, PAD * PAD), p_out.shape
    assert v_out.shape == (1, 1), v_out.shape
    total = float(jnp.sum(p_out))
    assert total > 0.99, f"joint dist sums to {total}"
    assert 0.0 < float(v_out[0, 0]) < 1.0
    si, di = int(src_idx), int(dst_idx)
    assert float(owner[si]) != 0.0, "sampled source planet must be owned"
    assert di != si, "destination planet must differ from the (masked) source"

    print("KERNEL_OK")
</pallas_src>

<mosaic_0001>
module attributes {stable_mosaic.version = 11 : i64} {
  func.func @_dest_kernel(%arg0: memref<8x128xf32, #tpu.memory_space<vmem>>, %arg1: memref<40x8xf32, #tpu.memory_space<vmem>>, %arg2: memref<512x1xf32, #tpu.memory_space<vmem>>, %arg3: memref<1xi32, #tpu.memory_space<smem>>, %arg4: memref<1x128xf32, #tpu.memory_space<vmem>>, %arg5: memref<512x512xf32, #tpu.memory_space<vmem>>) attributes {dimension_semantics = [], scalar_prefetch = 0 : i64, scratch_operands = 0 : i64, tpu.core_type = #tpu.core_type<tc>} {
    %c0 = arith.constant 0 : index
    %c0_0 = arith.constant 0 : index
    %0 = vector.load %arg0[%c0, %c0_0] : memref<8x128xf32, #tpu.memory_space<vmem>>, vector<8x128xf32>
    %c0_1 = arith.constant 0 : index
    %1 = memref.load %arg3[%c0_1] : memref<1xi32, #tpu.memory_space<smem>>
    %2 = tpu.iota {dimensions = array<i32: 1>} : vector<1x128xi32>
    %3 = vector.broadcast %1 : i32 to vector<1x128xi32>
    %4 = arith.cmpi eq, %2, %3 : vector<1x128xi32>
    %5 = arith.extui %4 : vector<1x128xi1> to vector<1x128xi32>
    %6 = arith.sitofp %5 : vector<1x128xi32> to vector<1x128xf32>
    %7 = vector.broadcast %6 : vector<1x128xf32> to vector<8x128xf32>
    %8 = arith.mulf %0, %7 : vector<8x128xf32>
    %cst = arith.constant dense<0.000000e+00> : vector<8xf32>
    %9 = vector.multi_reduction <add>, %8, %cst [1] : vector<8x128xf32> to vector<8xf32>
    %10 = vector.shape_cast %9 : vector<8xf32> to vector<8x1xf32>
    %11 = vector.broadcast %10 : vector<8x1xf32> to vector<8x128xf32>
    %12 = arith.addf %0, %11 : vector<8x128xf32>
    %c0_2 = arith.constant 0 : index
    %c0_3 = arith.constant 0 : index
    %13 = vector.load %arg1[%c0_2, %c0_3] : memref<40x8xf32, #tpu.memory_space<vmem>>, vector<8x8xf32>
    %c8 = arith.constant 8 : index
    %c0_4 = arith.constant 0 : index
    %14 = vector.load %arg1[%c8, %c0_4] : memref<40x8xf32, #tpu.memory_space<vmem>>, vector<8x8xf32>
    %c16 = arith.constant 16 : index
    %c0_5 = arith.constant 0 : index
    %15 = vector.load %arg1[%c16, %c0_5] : memref<40x8xf32, #tpu.memory_space<vmem>>, vector<8x8xf32>
    %c24 = arith.constant 24 : index
    %c0_6 = arith.constant 0 : index
    %16 = vector.load %arg1[%c24, %c0_6] : memref<40x8xf32, #tpu.memory_space<vmem>>, vector<8x8xf32>
    %c32 = arith.constant 32 : index
    %c0_7 = arith.constant 0 : index
    %17 = vector.load %arg1[%c32, %c0_7] : memref<40x8xf32, #tpu.memory_space<vmem>>, vector<8x1xf32>
    %c32_8 = arith.constant 32 : index
    %c1 = arith.constant 1 : index
    %18 = vector.load %arg1[%c32_8, %c1] : memref<40x8xf32, #tpu.memory_space<vmem>>, vector<8x1xf32>
    %c32_9 = arith.constant 32 : index
    %c2 = arith.constant 2 : index
    %19 = vector.load %arg1[%c32_9, %c2] : memref<40x8xf32, #tpu.memory_space<vmem>>, vector<8x1xf32>
    %c32_10 = arith.constant 32 : index
    %c3 = arith.constant 3 : index
    %20 = vector.load %arg1[%c32_10, %c3] : memref<40x8xf32, #tpu.memory_space<vmem>>, vector<8x1xf32>
    %c32_11 = arith.constant 32 : index
    %c4 = arith.constant 4 : index
    %21 = vector.load %arg1[%c32_11, %c4] : memref<40x8xf32, #tpu.memory_space<vmem>>, vector<8x1xf32>
    %c32_12 = arith.constant 32 : index
    %c5 = arith.constant 5 : index
    %22 = vector.load %arg1[%c32_12, %c5] : memref<40x8xf32, #tpu.memory_space<vmem>>, vector<1x1xf32>
    %cst_13 = arith.constant dense<0.000000e+00> : vector<8x128xf32>
    %23 = tpu.matmul %13, %12, %cst_13 {dimension_numbers = #tpu.dot_dimension_numbers<[1], [0], [0], [1], [0, 0, 1, 1], [], []>} : vector<8x8xf32>, vector<8x128xf32>, vector<8x128xf32> -> vector<8x128xf32>
    %24 = vector.broadcast %17 : vector<8x1xf32> to vector<8x128xf32>
    %25 = arith.addf %23, %24 : vector<8x128xf32>
    %cst_14 = arith.constant dense<0.000000e+00> : vector<8x128xf32>
    %26 = tpu.matmul %14, %0, %cst_14 {dimension_numbers = #tpu.dot_dimension_numbers<[1], [0], [0], [1], [0, 0, 1, 1], [], []>} : vector<8x8xf32>, vector<8x128xf32>, vector<8x128xf32> -> vector<8x128xf32>
    %27 = vector.broadcast %18 : vector<8x1xf32> to vector<8x128xf32>
    %28 = arith.addf %26, %27 : vector<8x128xf32>
    %cst_15 = arith.constant dense<0.000000e+00> : vector<8x128xf32>
    %29 = tpu.matmul %15, %0, %cst_15 {dimension_numbers = #tpu.dot_dimension_numbers<[1], [0], [0], [1], [0, 0, 1, 1], [], []>} : vector<8x8xf32>, vector<8x128xf32>, vector<8x128xf32> -> vector<8x128xf32>
    %30 = vector.broadcast %19 : vector<8x1xf32> to vector<8x128xf32>
    %31 = arith.addf %29, %30 : vector<8x128xf32>
    %32 = tpu.iota {dimensions = array<i32: 0>} : vector<128x1xi32>
    %c8_i32 = arith.constant 8 : i32
    %33 = vector.broadcast %c8_i32 : i32 to vector<128x1xi32>
    %34 = arith.cmpi sge, %32, %33 : vector<128x1xi32>
    %cst_16 = arith.constant -1.000000e+30 : f32
    %cst_17 = arith.constant 0.000000e+00 : f32
    %35 = vector.broadcast %cst_16 : f32 to vector<128x1xf32>
    %36 = vector.broadcast %cst_17 : f32 to vector<128x1xf32>
    %37 = arith.select %34, %35, %36 : vector<128x1xi1>, vector<128x1xf32>
    %38 = tpu.iota {dimensions = array<i32: 0>} : vector<8x1xi32>
    %cst_18 = arith.constant 0.000000e+00 : f32
    %39 = vector.broadcast %cst_18 : f32 to vector<8x128xf32>
    %c0_i32 = arith.constant 0 : i32
    %40 = vector.broadcast %c0_i32 : i32 to vector<8x1xi32>
    %41 = arith.cmpi sge, %38, %40 : vector<8x1xi32>
    %c3_i32 = arith.constant 3 : i32
    %42 = vector.broadcast %c3_i32 : i32 to vector<8x1xi32>
    %43 = arith.cmpi slt, %38, %42 : vector<8x1xi32>
    %44 = arith.andi %41, %43 : vector<8x1xi1>
    %45 = arith.extui %44 : vector<8x1xi1> to vector<8x1xi32>
    %46 = arith.sitofp %45 : vector<8x1xi32> to vector<8x1xf32>
    %47 = vector.broadcast %46 : vector<8x1xf32> to vector<8x128xf32>
    %48 = arith.mulf %25, %47 : vector<8x128xf32>
    %49 = vector.broadcast %46 : vector<8x1xf32> to vector<8x128xf32>
    %50 = arith.mulf %31, %49 : vector<8x128xf32>
    %cst_19 = arith.constant dense<0.000000e+00> : vector<128x128xf32>
    %51 = tpu.matmul %28, %48, %cst_19 {dimension_numbers = #tpu.dot_dimension_numbers<[0], [0], [1], [1], [0, 1, 1, 1], [], []>} : vector<8x128xf32>, vector<8x128xf32>, vector<128x128xf32> -> vector<128x128xf32>
    %52 = vector.broadcast %37 : vector<128x1xf32> to vector<128x128xf32>
    %53 = arith.addf %51, %52 : vector<128x128xf32>
    %cst_20 = arith.constant dense<0xFF800000> : vector<128xf32>
    %54 = vector.multi_reduction <maximumf>, %53, %cst_20 [0] : vector<128x128xf32> to vector<128xf32>
    %55 = vector.shape_cast %54 : vector<128xf32> to vector<1x128xf32>
    %56 = vector.broadcast %55 : vector<1x128xf32> to vector<128x128xf32>
    %57 = arith.subf %53, %56 : vector<128x128xf32>
    %58 = math.exp %57 : vector<128x128xf32>
    %cst_21 = arith.constant dense<0.000000e+00> : vector<128xf32>
    %59 = vector.multi_reduction <add>, %58, %cst_21 [0] : vector<128x128xf32> to vector<128xf32>
    %60 = vector.shape_cast %59 : vector<128xf32> to vector<1x128xf32>
    %cst_22 = arith.constant dense<0.000000e+00> : vector<8x128xf32>
    %61 = tpu.matmul %50, %58, %cst_22 {dimension_numbers = #tpu.dot_dimension_numbers<[1], [0], [0], [1], [0, 0, 1, 1], [], []>} : vector<8x128xf32>, vector<128x128xf32>, vector<8x128xf32> -> vector<8x128xf32>
    %62 = tpu.reciprocal %60 {approx = true} : vector<1x128xf32> -> vector<1x128xf32>
    %63 = vector.broadcast %62 : vector<1x128xf32> to vector<8x128xf32>
    %64 = arith.mulf %61, %63 : vector<8x128xf32>
    %65 = arith.addf %39, %64 : vector<8x128xf32>
    %c3_i32_23 = arith.constant 3 : i32
    %66 = vector.broadcast %c3_i32_23 : i32 to vector<8x1xi32>
    %67 = arith.cmpi sge, %38, %66 : vector<8x1xi32>
    %c6_i32 = arith.constant 6 : i32
    %68 = vector.broadcast %c6_i32 : i32 to vector<8x1xi32>
    %69 = arith.cmpi slt, %38, %68 : vector<8x1xi32>
    %70 = arith.andi %67, %69 : vector<8x1xi1>
    %71 = arith.extui %70 : vector<8x1xi1> to vector<8x1xi32>
    %72 = arith.sitofp %71 : vector<8x1xi32> to vector<8x1xf32>
    %73 = vector.broadcast %72 : vector<8x1xf32> to vector<8x128xf32>
    %74 = arith.mulf %25, %73 : vector<8x128xf32>
    %75 = vector.broadcast %72 : vector<8x1xf32> to vector<8x128xf32>
    %76 = arith.mulf %31, %75 : vector<8x128xf32>
    %cst_24 = arith.constant dense<0.000000e+00> : vector<128x128xf32>
    %77 = tpu.matmul %28, %74, %cst_24 {dimension_numbers = #tpu.dot_dimension_numbers<[0], [0], [1], [1], [0, 1, 1, 1], [], []>} : vector<8x128xf32>, vector<8x128xf32>, vector<128x128xf32> -> vector<128x128xf32>
    %78 = vector.broadcast %37 : vector<128x1xf32> to vector<128x128xf32>
    %79 = arith.addf %77, %78 : vector<128x128xf32>
    %cst_25 = arith.constant dense<0xFF800000> : vector<128xf32>
    %80 = vector.multi_reduction <maximumf>, %79, %cst_25 [0] : vector<128x128xf32> to vector<128xf32>
    %81 = vector.shape_cast %80 : vector<128xf32> to vector<1x128xf32>
    %82 = vector.broadcast %81 : vector<1x128xf32> to vector<128x128xf32>
    %83 = arith.subf %79, %82 : vector<128x128xf32>
    %84 = math.exp %83 : vector<128x128xf32>
    %cst_26 = arith.constant dense<0.000000e+00> : vector<128xf32>
    %85 = vector.multi_reduction <add>, %84, %cst_26 [0] : vector<128x128xf32> to vector<128xf32>
    %86 = vector.shape_cast %85 : vector<128xf32> to vector<1x128xf32>
    %cst_27 = arith.constant dense<0.000000e+00> : vector<8x128xf32>
    %87 = tpu.matmul %76, %84, %cst_27 {dimension_numbers = #tpu.dot_dimension_numbers<[1], [0], [0], [1], [0, 0, 1, 1], [], []>} : vector<8x128xf32>, vector<128x128xf32>, vector<8x128xf32> -> vector<8x128xf32>
    %88 = tpu.reciprocal %86 {approx = true} : vector<1x128xf32> -> vector<1x128xf32>
    %89 = vector.broadcast %88 : vector<1x128xf32> to vector<8x128xf32>
    %90 = arith.mulf %87, %89 : vector<8x128xf32>
    %91 = arith.addf %65, %90 : vector<8x128xf32>
    %cst_28 = arith.constant dense<0.000000e+00> : vector<8x128xf32>
    %92 = tpu.matmul %16, %91, %cst_28 {dimension_numbers = #tpu.dot_dimension_numbers<[1], [0], [0], [1], [0, 0, 1, 1], [], []>} : vector<8x8xf32>, vector<8x128xf32>, vector<8x128xf32> -> vector<8x128xf32>
    %93 = vector.broadcast %20 : vector<8x1xf32> to vector<8x128xf32>
    %94 = arith.addf %92, %93 : vector<8x128xf32>
    %95 = vector.broadcast %21 : vector<8x1xf32> to vector<8x128xf32>
    %96 = arith.mulf %94, %95 : vector<8x128xf32>
    %cst_29 = arith.constant dense<0.000000e+00> : vector<128xf32>
    %97 = vector.multi_reduction <add>, %96, %cst_29 [0] : vector<8x128xf32> to vector<128xf32>
    %98 = vector.shape_cast %97 : vector<128xf32> to vector<1x128xf32>
    %99 = vector.broadcast %22 : vector<1x1xf32> to vector<1x128xf32>
    %100 = arith.addf %98, %99 : vector<1x128xf32>
    %101 = vector.broadcast %1 : i32 to vector<1x128xi32>
    %102 = arith.cmpi eq, %2, %101 : vector<1x128xi32>
    %c8_i32_30 = arith.constant 8 : i32
    %103 = vector.broadcast %c8_i32_30 : i32 to vector<1x128xi32>
    %104 = arith.cmpi sge, %2, %103 : vector<1x128xi32>
    %105 = arith.ori %102, %104 : vector<1x128xi1>
    %cst_31 = arith.constant -3.40282347E+38 : f32
    %106 = vector.broadcast %cst_31 : f32 to vector<1x128xf32>
    %107 = arith.select %105, %106, %100 : vector<1x128xi1>, vector<1x128xf32>
    %c0_32 = arith.constant 0 : index
    %c0_33 = arith.constant 0 : index
    %108 = vector.load %arg4[%c0_32, %c0_33] : memref<1x128xf32, #tpu.memory_space<vmem>>, vector<1x128xf32>
    tpu.vector_store %arg4[%c0_32, %c0_33], %107 {strides = array<i32>} : memref<1x128xf32, #tpu.memory_space<vmem>>, vector<1x128xf32>,
    %cst_34 = arith.constant dense<0xFF800000> : vector<1xf32>
    %109 = vector.multi_reduction <maximumf>, %107, %cst_34 [1] : vector<1x128xf32> to vector<1xf32>
    %110 = vector.shape_cast %109 : vector<1xf32> to vector<1x1xf32>
    %111 = vector.broadcast %110 : vector<1x1xf32> to vector<1x128xf32>
    %112 = arith.subf %107, %111 : vector<1x128xf32>
    %113 = math.exp %112 : vector<1x128xf32>
    %cst_35 = arith.constant dense<0.000000e+00> : vector<1xf32>
    %114 = vector.multi_reduction <add>, %113, %cst_35 [1] : vector<1x128xf32> to vector<1xf32>
    %115 = vector.shape_cast %114 : vector<1xf32> to vector<1x1xf32>
    %116 = vector.broadcast %115 : vector<1x1xf32> to vector<1x128xf32>
    %117 = arith.divf %113, %116 : vector<1x128xf32>
    %c0_36 = arith.constant 0 : index
    %c0_37 = arith.constant 0 : index
    %118 = vector.load %arg2[%c0_36, %c0_37] : memref<512x1xf32, #tpu.memory_space<vmem>>, vector<512x1xf32>
    %119 = vector.broadcast %118 : vector<512x1xf32> to vector<512x128xf32>
    %120 = vector.broadcast %117 : vector<1x128xf32> to vector<512x128xf32>
    %121 = arith.mulf %119, %120 : vector<512x128xf32>
    %c0_38 = arith.constant 0 : index
    %c0_39 = arith.constant 0 : index
    %122 = vector.load %arg5[%c0_38, %c0_39] : memref<512x512xf32, #tpu.memory_space<vmem>>, vector<512x128xf32>
    tpu.vector_store %arg5[%c0_38, %c0_39], %121 {strides = array<i32>} : memref<512x512xf32, #tpu.memory_space<vmem>>, vector<512x128xf32>,
    %cst_40 = arith.constant 0.000000e+00 : f32
    %123 = vector.broadcast %cst_40 : f32 to vector<512x384xf32>
    %c0_41 = arith.constant 0 : index
    %c128 = arith.constant 128 : index
    %124 = vector.load %arg5[%c0_41, %c128] : memref<512x512xf32, #tpu.memory_space<vmem>>, vector<512x384xf32>
    tpu.vector_store %arg5[%c0_41, %c128], %123 {strides = array<i32>} : memref<512x512xf32, #tpu.memory_space<vmem>>, vector<512x384xf32>,
    return
  }
}

module attributes {stable_mosaic.version = 11 : i64} {
  func.func @_source_kernel(%arg0: memref<8x128xf32, #tpu.memory_space<vmem>>, %arg1: memref<40x8xf32, #tpu.memory_space<vmem>>, %arg2: memref<1x128xf32, #tpu.memory_space<vmem>>, %arg3: memref<1x128xf32, #tpu.memory_space<vmem>>) attributes {dimension_semantics = [], scalar_prefetch = 0 : i64, scratch_operands = 0 : i64, tpu.core_type = #tpu.core_type<tc>} {
    %c0 = arith.constant 0 : index
    %c0_0 = arith.constant 0 : index
    %0 = vector.load %arg0[%c0, %c0_0] : memref<8x128xf32, #tpu.memory_space<vmem>>, vector<8x128xf32>
    %c0_1 = arith.constant 0 : index
    %c0_2 = arith.constant 0 : index
    %1 = vector.load %arg1[%c0_1, %c0_2] : memref<40x8xf32, #tpu.memory_space<vmem>>, vector<8x8xf32>
    %c8 = arith.constant 8 : index
    %c0_3 = arith.constant 0 : index
    %2 = vector.load %arg1[%c8, %c0_3] : memref<40x8xf32, #tpu.memory_space<vmem>>, vector<8x8xf32>
    %c16 = arith.constant 16 : index
    %c0_4 = arith.constant 0 : index
    %3 = vector.load %arg1[%c16, %c0_4] : memref<40x8xf32, #tpu.memory_space<vmem>>, vector<8x8xf32>
    %c24 = arith.constant 24 : index
    %c0_5 = arith.constant 0 : index
    %4 = vector.load %arg1[%c24, %c0_5] : memref<40x8xf32, #tpu.memory_space<vmem>>, vector<8x8xf32>
    %c32 = arith.constant 32 : index
    %c0_6 = arith.constant 0 : index
    %5 = vector.load %arg1[%c32, %c0_6] : memref<40x8xf32, #tpu.memory_space<vmem>>, vector<8x1xf32>
    %c32_7 = arith.constant 32 : index
    %c1 = arith.constant 1 : index
    %6 = vector.load %arg1[%c32_7, %c1] : memref<40x8xf32, #tpu.memory_space<vmem>>, vector<8x1xf32>
    %c32_8 = arith.constant 32 : index
    %c2 = arith.constant 2 : index
    %7 = vector.load %arg1[%c32_8, %c2] : memref<40x8xf32, #tpu.memory_space<vmem>>, vector<8x1xf32>
    %c32_9 = arith.constant 32 : index
    %c3 = arith.constant 3 : index
    %8 = vector.load %arg1[%c32_9, %c3] : memref<40x8xf32, #tpu.memory_space<vmem>>, vector<8x1xf32>
    %c32_10 = arith.constant 32 : index
    %c4 = arith.constant 4 : index
    %9 = vector.load %arg1[%c32_10, %c4] : memref<40x8xf32, #tpu.memory_space<vmem>>, vector<8x1xf32>
    %c32_11 = arith.constant 32 : index
    %c5 = arith.constant 5 : index
    %10 = vector.load %arg1[%c32_11, %c5] : memref<40x8xf32, #tpu.memory_space<vmem>>, vector<1x1xf32>
    %cst = arith.constant dense<0.000000e+00> : vector<8x128xf32>
    %11 = tpu.matmul %1, %0, %cst {dimension_numbers = #tpu.dot_dimension_numbers<[1], [0], [0], [1], [0, 0, 1, 1], [], []>} : vector<8x8xf32>, vector<8x128xf32>, vector<8x128xf32> -> vector<8x128xf32>
    %12 = vector.broadcast %5 : vector<8x1xf32> to vector<8x128xf32>
    %13 = arith.addf %11, %12 : vector<8x128xf32>
    %cst_12 = arith.constant dense<0.000000e+00> : vector<8x128xf32>
    %14 = tpu.matmul %2, %0, %cst_12 {dimension_numbers = #tpu.dot_dimension_numbers<[1], [0], [0], [1], [0, 0, 1, 1], [], []>} : vector<8x8xf32>, vector<8x128xf32>, vector<8x128xf32> -> vector<8x128xf32>
    %15 = vector.broadcast %6 : vector<8x1xf32> to vector<8x128xf32>
    %16 = arith.addf %14, %15 : vector<8x128xf32>
    %cst_13 = arith.constant dense<0.000000e+00> : vector<8x128xf32>
    %17 = tpu.matmul %3, %0, %cst_13 {dimension_numbers = #tpu.dot_dimension_numbers<[1], [0], [0], [1], [0, 0, 1, 1], [], []>} : vector<8x8xf32>, vector<8x128xf32>, vector<8x128xf32> -> vector<8x128xf32>
    %18 = vector.broadcast %7 : vector<8x1xf32> to vector<8x128xf32>
    %19 = arith.addf %17, %18 : vector<8x128xf32>
    %20 = tpu.iota {dimensions = array<i32: 0>} : vector<128x1xi32>
    %c8_i32 = arith.constant 8 : i32
    %21 = vector.broadcast %c8_i32 : i32 to vector<128x1xi32>
    %22 = arith.cmpi sge, %20, %21 : vector<128x1xi32>
    %cst_14 = arith.constant -1.000000e+30 : f32
    %cst_15 = arith.constant 0.000000e+00 : f32
    %23 = vector.broadcast %cst_14 : f32 to vector<128x1xf32>
    %24 = vector.broadcast %cst_15 : f32 to vector<128x1xf32>
    %25 = arith.select %22, %23, %24 : vector<128x1xi1>, vector<128x1xf32>
    %26 = tpu.iota {dimensions = array<i32: 0>} : vector<8x1xi32>
    %cst_16 = arith.constant 0.000000e+00 : f32
    %27 = vector.broadcast %cst_16 : f32 to vector<8x128xf32>
    %c0_i32 = arith.constant 0 : i32
    %28 = vector.broadcast %c0_i32 : i32 to vector<8x1xi32>
    %29 = arith.cmpi sge, %26, %28 : vector<8x1xi32>
    %c3_i32 = arith.constant 3 : i32
    %30 = vector.broadcast %c3_i32 : i32 to vector<8x1xi32>
    %31 = arith.cmpi slt, %26, %30 : vector<8x1xi32>
    %32 = arith.andi %29, %31 : vector<8x1xi1>
    %33 = arith.extui %32 : vector<8x1xi1> to vector<8x1xi32>
    %34 = arith.sitofp %33 : vector<8x1xi32> to vector<8x1xf32>
    %35 = vector.broadcast %34 : vector<8x1xf32> to vector<8x128xf32>
    %36 = arith.mulf %13, %35 : vector<8x128xf32>
    %37 = vector.broadcast %34 : vector<8x1xf32> to vector<8x128xf32>
    %38 = arith.mulf %19, %37 : vector<8x128xf32>
    %cst_17 = arith.constant dense<0.000000e+00> : vector<128x128xf32>
    %39 = tpu.matmul %16, %36, %cst_17 {dimension_numbers = #tpu.dot_dimension_numbers<[0], [0], [1], [1], [0, 1, 1, 1], [], []>} : vector<8x128xf32>, vector<8x128xf32>, vector<128x128xf32> -> vector<128x128xf32>
    %40 = vector.broadcast %25 : vector<128x1xf32> to vector<128x128xf32>
    %41 = arith.addf %39, %40 : vector<128x128xf32>
    %cst_18 = arith.constant dense<0xFF800000> : vector<128xf32>
    %42 = vector.multi_reduction <maximumf>, %41, %cst_18 [0] : vector<128x128xf32> to vector<128xf32>
    %43 = vector.shape_cast %42 : vector<128xf32> to vector<1x128xf32>
    %44 = vector.broadcast %43 : vector<1x128xf32> to vector<128x128xf32>
    %45 = arith.subf %41, %44 : vector<128x128xf32>
    %46 = math.exp %45 : vector<128x128xf32>
    %cst_19 = arith.constant dense<0.000000e+00> : vector<128xf32>
    %47 = vector.multi_reduction <add>, %46, %cst_19 [0] : vector<128x128xf32> to vector<128xf32>
    %48 = vector.shape_cast %47 : vector<128xf32> to vector<1x128xf32>
    %cst_20 = arith.constant dense<0.000000e+00> : vector<8x128xf32>
    %49 = tpu.matmul %38, %46, %cst_20 {dimension_numbers = #tpu.dot_dimension_numbers<[1], [0], [0], [1], [0, 0, 1, 1], [], []>} : vector<8x128xf32>, vector<128x128xf32>, vector<8x128xf32> -> vector<8x128xf32>
    %50 = tpu.reciprocal %48 {approx = true} : vector<1x128xf32> -> vector<1x128xf32>
    %51 = vector.broadcast %50 : vector<1x128xf32> to vector<8x128xf32>
    %52 = arith.mulf %49, %51 : vector<8x128xf32>
    %53 = arith.addf %27, %52 : vector<8x128xf32>
    %c3_i32_21 = arith.constant 3 : i32
    %54 = vector.broadcast %c3_i32_21 : i32 to vector<8x1xi32>
    %55 = arith.cmpi sge, %26, %54 : vector<8x1xi32>
    %c6_i32 = arith.constant 6 : i32
    %56 = vector.broadcast %c6_i32 : i32 to vector<8x1xi32>
    %57 = arith.cmpi slt, %26, %56 : vector<8x1xi32>
    %58 = arith.andi %55, %57 : vector<8x1xi1>
    %59 = arith.extui %58 : vector<8x1xi1> to vector<8x1xi32>
    %60 = arith.sitofp %59 : vector<8x1xi32> to vector<8x1xf32>
    %61 = vector.broadcast %60 : vector<8x1xf32> to vector<8x128xf32>
    %62 = arith.mulf %13, %61 : vector<8x128xf32>
    %63 = vector.broadcast %60 : vector<8x1xf32> to vector<8x128xf32>
    %64 = arith.mulf %19, %63 : vector<8x128xf32>
    %cst_22 = arith.constant dense<0.000000e+00> : vector<128x128xf32>
    %65 = tpu.matmul %16, %62, %cst_22 {dimension_numbers = #tpu.dot_dimension_numbers<[0], [0], [1], [1], [0, 1, 1, 1], [], []>} : vector<8x128xf32>, vector<8x128xf32>, vector<128x128xf32> -> vector<128x128xf32>
    %66 = vector.broadcast %25 : vector<128x1xf32> to vector<128x128xf32>
    %67 = arith.addf %65, %66 : vector<128x128xf32>
    %cst_23 = arith.constant dense<0xFF800000> : vector<128xf32>
    %68 = vector.multi_reduction <maximumf>, %67, %cst_23 [0] : vector<128x128xf32> to vector<128xf32>
    %69 = vector.shape_cast %68 : vector<128xf32> to vector<1x128xf32>
    %70 = vector.broadcast %69 : vector<1x128xf32> to vector<128x128xf32>
    %71 = arith.subf %67, %70 : vector<128x128xf32>
    %72 = math.exp %71 : vector<128x128xf32>
    %cst_24 = arith.constant dense<0.000000e+00> : vector<128xf32>
    %73 = vector.multi_reduction <add>, %72, %cst_24 [0] : vector<128x128xf32> to vector<128xf32>
    %74 = vector.shape_cast %73 : vector<128xf32> to vector<1x128xf32>
    %cst_25 = arith.constant dense<0.000000e+00> : vector<8x128xf32>
    %75 = tpu.matmul %64, %72, %cst_25 {dimension_numbers = #tpu.dot_dimension_numbers<[1], [0], [0], [1], [0, 0, 1, 1], [], []>} : vector<8x128xf32>, vector<128x128xf32>, vector<8x128xf32> -> vector<8x128xf32>
    %76 = tpu.reciprocal %74 {approx = true} : vector<1x128xf32> -> vector<1x128xf32>
    %77 = vector.broadcast %76 : vector<1x128xf32> to vector<8x128xf32>
    %78 = arith.mulf %75, %77 : vector<8x128xf32>
    %79 = arith.addf %53, %78 : vector<8x128xf32>
    %cst_26 = arith.constant dense<0.000000e+00> : vector<8x128xf32>
    %80 = tpu.matmul %4, %79, %cst_26 {dimension_numbers = #tpu.dot_dimension_numbers<[1], [0], [0], [1], [0, 0, 1, 1], [], []>} : vector<8x8xf32>, vector<8x128xf32>, vector<8x128xf32> -> vector<8x128xf32>
    %81 = vector.broadcast %8 : vector<8x1xf32> to vector<8x128xf32>
    %82 = arith.addf %80, %81 : vector<8x128xf32>
    %83 = vector.broadcast %9 : vector<8x1xf32> to vector<8x128xf32>
    %84 = arith.mulf %82, %83 : vector<8x128xf32>
    %cst_27 = arith.constant dense<0.000000e+00> : vector<128xf32>
    %85 = vector.multi_reduction <add>, %84, %cst_27 [0] : vector<8x128xf32> to vector<128xf32>
    %86 = vector.shape_cast %85 : vector<128xf32> to vector<1x128xf32>
    %87 = vector.broadcast %10 : vector<1x1xf32> to vector<1x128xf32>
    %88 = arith.addf %86, %87 : vector<1x128xf32>
    %89 = tpu.iota {dimensions = array<i32: 1>} : vector<1x128xi32>
    %90 = vector.extract_strided_slice %0 {offsets = [0, 0], sizes = [1, 128], strides = [1, 1]} : vector<8x128xf32> to vector<1x128xf32>
    %cst_28 = arith.constant 0.000000e+00 : f32
    %91 = vector.broadcast %cst_28 : f32 to vector<1x128xf32>
    %92 = arith.cmpf oeq, %90, %91 : vector<1x128xf32>
    %c8_i32_29 = arith.constant 8 : i32
    %93 = vector.broadcast %c8_i32_29 : i32 to vector<1x128xi32>
    %94 = arith.cmpi sge, %89, %93 : vector<1x128xi32>
    %95 = arith.ori %92, %94 : vector<1x128xi1>
    %cst_30 = arith.constant -3.40282347E+38 : f32
    %96 = vector.broadcast %cst_30 : f32 to vector<1x128xf32>
    %97 = arith.select %95, %96, %88 : vector<1x128xi1>, vector<1x128xf32>
    %c0_31 = arith.constant 0 : index
    %c0_32 = arith.constant 0 : index
    %98 = vector.load %arg2[%c0_31, %c0_32] : memref<1x128xf32, #tpu.memory_space<vmem>>, vector<1x128xf32>
    tpu.vector_store %arg2[%c0_31, %c0_32], %97 {strides = array<i32>} : memref<1x128xf32, #tpu.memory_space<vmem>>, vector<1x128xf32>,
    %cst_33 = arith.constant dense<0xFF800000> : vector<1xf32>
    %99 = vector.multi_reduction <maximumf>, %97, %cst_33 [1] : vector<1x128xf32> to vector<1xf32>
    %100 = vector.shape_cast %99 : vector<1xf32> to vector<1x1xf32>
    %101 = vector.broadcast %100 : vector<1x1xf32> to vector<1x128xf32>
    %102 = arith.subf %97, %101 : vector<1x128xf32>
    %103 = math.exp %102 : vector<1x128xf32>
    %cst_34 = arith.constant dense<0.000000e+00> : vector<1xf32>
    %104 = vector.multi_reduction <add>, %103, %cst_34 [1] : vector<1x128xf32> to vector<1xf32>
    %105 = vector.shape_cast %104 : vector<1xf32> to vector<1x1xf32>
    %106 = vector.broadcast %105 : vector<1x1xf32> to vector<1x128xf32>
    %107 = arith.divf %103, %106 : vector<1x128xf32>
    %c0_35 = arith.constant 0 : index
    %c0_36 = arith.constant 0 : index
    %108 = vector.load %arg3[%c0_35, %c0_36] : memref<1x128xf32, #tpu.memory_space<vmem>>, vector<1x128xf32>
    tpu.vector_store %arg3[%c0_35, %c0_36], %107 {strides = array<i32>} : memref<1x128xf32, #tpu.memory_space<vmem>>, vector<1x128xf32>,
    return
  }
}

</mosaic_0001>

<llo_original>
// kernel: net_forward.2
$region0: #{net_forward.2}
  #allocation0 [shape = 'u32[]', space=smem, size = 0x4, offset = 0x4, fixed_abs, tag = 'smem constant byte address 0x4 - core index']
  #allocation1 [shape = 'u32[144,128]{1,0:T(1,128)}', space=vmem, size = 0x12000, scoped, tag = 'internal scratch']
  %s0 = inlined_call_operand.vmem [shape: f32[8,128], index: 0, kind: input, shape index: {}]
  %s1 = inlined_call_operand.vmem [shape: f32[40,8], index: 1, kind: input, shape index: {}]
  %s2 = inlined_call_operand.vmem [shape: f32[1,128], index: 2, kind: output, shape index: {0}]
  %s3 = inlined_call_operand.vmem [shape: f32[1,128], index: 3, kind: output, shape index: {1}]
  %4 = xla_tuple %s2, %s3
  %s5 = sld [smem:[#allocation0]]
  $region26: #{net_forward.2} parent=0
    _
  %s7 = ssub.s32 1, %s5
  %s8 = scalar_select 0, %s7, %s5
  // Predicated region
  $region2: #{net_forward.2} parent=0 // pred_check
    _
  $region3: #{net_forward.2} parent=0 // pred_check_branch
    %10 = sbr.rel (0) target = $region5
  $region4: #{net_forward.2} parent=0 // pred_region
    _
  $region5: #{net_forward.2} parent=0 // pred_fallthru
    _
  // Predicated region
  $region6: #{net_forward.2} parent=0 // pred_check
    _
  $region7: #{net_forward.2} parent=0 // pred_check_branch
    %12 = sbr.rel (0) target = $region9
  $region8: #{net_forward.2} parent=0 // pred_region
    _
  $region9: #{net_forward.2} parent=0 // pred_fallthru
    _
  %v13 = vld [vmem:[%s0] sm:$0xff]
  %v14 = vld [vmem:[%s1] sm:$0xff]
  %v15 = vld [vmem:[%s1 + $0x8] sm:$0xff]
  %v16 = vld [vmem:[%s1 + $0x10] sm:$0xff]
  %v17 = vld [vmem:[%s1 + $0x18] sm:$0xff]
  %v18 = vld [vmem:[%s1 + $0x20] sm:$0xff]
  %v19 = vld [vmem:[%s1 + $0x20] sm:$0x1]
  %21 = vset.pattern.permute.xlu0 0
  %22 = vperm.xlu0 %21, %v18
  %v23 = vpop.permute.xlu0 %22
  %vm25 = vcmask 64512
  %v27 = vsel %vm25, %v14, 0
  %29 = vmatprep.subr.mxu0 0.0
  %30 = vmatpush1.msra.mxu0 0.0
  %31 = vmatprep.subr.mxu0 0.0
  %32 = vmatpush1.msra.mxu0 0.0
  %33 = vmatprep.subr.mxu0 0.0
  %34 = vmatpush1.msra.mxu0 0.0
  %35 = vmatprep.subr.mxu0 0.0
  %36 = vmatpush1.msra.mxu0 0.0
  %37 = vmatprep.subr.mxu0 0.0
  %38 = vmatpush1.msra.mxu0 0.0
  %39 = vmatprep.subr.mxu0 0.0
  %40 = vmatpush1.msra.mxu0 0.0
  %41 = vmatprep.subr.mxu0 0.0
  %42 = vmatpush1.msra.mxu0 0.0
  %43 = vmatprep.subr.mxu0 0.0
  %44 = vmatpush1.msra.mxu0 0.0
  %45 = vmatprep.subr.mxu0 0.0
  %46 = vmatpush1.msra.mxu0 0.0
  %47 = vmatprep.subr.mxu0 0.0
  %48 = vmatpush1.msra.mxu0 0.0
  %49 = vmatprep.subr.mxu0 0.0
  %50 = vmatpush1.msra.mxu0 0.0
  %51 = vmatprep.subr.mxu0 0.0
  %52 = vmatpush1.msra.mxu0 0.0
  %53 = vmatprep.subr.mxu0 0.0
  %54 = vmatpush1.msra.mxu0 0.0
  %55 = vmatprep.subr.mxu0 0.0
  %56 = vmatpush1.msra.mxu0 0.0
  %57 = vmatprep.subr.mxu0 0.0
  %58 = vmatpush1.msra.mxu0 0.0
  %59 = vmatprep.subr.mxu0 0.0
  %60 = vmatpush1.msra.mxu0 %v13
  %61 = vmatprep.subr.mxu0 0.0
  %62 = vmatpush2.msra.mxu0 0.0
  %63 = vmatprep.subr.mxu0 0.0
  %64 = vmatpush2.msra.mxu0 0.0
  %65 = vmatprep.subr.mxu0 0.0
  %66 = vmatpush2.msra.mxu0 0.0
  %67 = vmatprep.subr.mxu0 0.0
  %68 = vmatpush2.msra.mxu0 0.0
  %69 = vmatprep.subr.mxu0 0.0
  %70 = vmatpush2.msra.mxu0 0.0
  %71 = vmatprep.subr.mxu0 0.0
  %72 = vmatpush2.msra.mxu0 0.0
  %73 = vmatprep.subr.mxu0 0.0
  %74 = vmatpush2.msra.mxu0 0.0
  %75 = vmatprep.subr.mxu0 0.0
  %76 = vmatpush2.msra.mxu0 0.0
  %77 = vmatprep.subr.mxu0 0.0
  %78 = vmatpush2.msra.mxu0 0.0
  %79 = vmatprep.subr.mxu0 0.0
  %80 = vmatpush2.msra.mxu0 0.0
  %81 = vmatprep.subr.mxu0 0.0
  %82 = vmatpush2.msra.mxu0 0.0
  %83 = vmatprep.subr.mxu0 0.0
  %84 = vmatpush2.msra.mxu0 0.0
  %85 = vmatprep.subr.mxu0 0.0
  %86 = vmatpush2.msra.mxu0 0.0
  %87 = vmatprep.subr.mxu0 0.0
  %88 = vmatpush2.msra.mxu0 0.0
  %89 = vmatprep.subr.mxu0 0.0
  %90 = vmatpush2.msra.mxu0 0.0
  %91 = vmatprep.subr.mxu0 0.0
  %92 = vmatpush2.msra.mxu0 0.0
  %93 = vmatprep.mubr.f32.mxu0 0.0
  %94 = vmatmul.mubr.f32.gmra.mxu0 %v27
  %v95 = vpop.f32.mrf.mxu0
  %v96 = vadd.f32 %v23, %v95
  %v97 = vpop.f32.mrf.mxu0
  %98 = vdwg.mxu0
  %99 = vset.pattern.permute.xlu0 1
  %100 = vperm.xlu0 %99, %v18
  %v101 = vpop.permute.xlu0 %100
  %v104 = vsel %vm25, %v15, 0
  %106 = vmatprep.subr.mxu0 0.0
  %107 = vmatpush1.msra.mxu0 0.0
  %108 = vmatprep.subr.mxu0 0.0
  %109 = vmatpush1.msra.mxu0 0.0
  %110 = vmatprep.subr.mxu0 0.0
  %111 = vmatpush1.msra.mxu0 0.0
  %112 = vmatprep.subr.mxu0 0.0
  %113 = vmatpush1.msra.mxu0 0.0
  %114 = vmatprep.subr.mxu0 0.0
  %115 = vmatpush1.msra.mxu0 0.0
  %116 = vmatprep.subr.mxu0 0.0
  %117 = vmatpush1.msra.mxu0 0.0
  %118 = vmatprep.subr.mxu0 0.0
  %119 = vmatpush1.msra.mxu0 0.0
  %120 = vmatprep.subr.mxu0 0.0
  %121 = vmatpush1.msra.mxu0 0.0
  %122 = vmatprep.subr.mxu0 0.0
  %123 = vmatpush1.msra.mxu0 0.0
  %124 = vmatprep.subr.mxu0 0.0
  %125 = vmatpush1.msra.mxu0 0.0
  %126 = vmatprep.subr.mxu0 0.0
  %127 = vmatpush1.msra.mxu0 0.0
  %128 = vmatprep.subr.mxu0 0.0
  %129 = vmatpush1.msra.mxu0 0.0
  %130 = vmatprep.subr.mxu0 0.0
  %131 = vmatpush1.msra.mxu0 0.0
  %132 = vmatprep.subr.mxu0 0.0
  %133 = vmatpush1.msra.mxu0 0.0
  %134 = vmatprep.subr.mxu0 0.0
  %135 = vmatpush1.msra.mxu0 0.0
  %136 = vmatprep.subr.mxu0 0.0
  %137 = vmatpush1.msra.mxu0 %v13
  %138 = vmatprep.subr.mxu0 0.0
  %139 = vmatpush2.msra.mxu0 0.0
  %140 = vmatprep.subr.mxu0 0.0
  %141 = vmatpush2.msra.mxu0 0.0
  %142 = vmatprep.subr.mxu0 0.0
  %143 = vmatpush2.msra.mxu0 0.0
  %144 = vmatprep.subr.mxu0 0.0
  %145 = vmatpush2.msra.mxu0 0.0
  %146 = vmatprep.subr.mxu0 0.0
  %147 = vmatpush2.msra.mxu0 0.0
  %148 = vmatprep.subr.mxu0 0.0
  %149 = vmatpush2.msra.mxu0 0.0
  %150 = vmatprep.subr.mxu0 0.0
  %151 = vmatpush2.msra.mxu0 0.0
  %152 = vmatprep.subr.mxu0 0.0
  %153 = vmatpush2.msra.mxu0 0.0
  %154 = vmatprep.subr.mxu0 0.0
  %155 = vmatpush2.msra.mxu0 0.0
  %156 = vmatprep.subr.mxu0 0.0
  %157 = vmatpush2.msra.mxu0 0.0
  %158 = vmatprep.subr.mxu0 0.0
  %159 = vmatpush2.msra.mxu0 0.0
  %160 = vmatprep.subr.mxu0 0.0
  %161 = vmatpush2.msra.mxu0 0.0
  %162 = vmatprep.subr.mxu0 0.0
  %163 = vmatpush2.msra.mxu0 0.0
  %164 = vmatprep.subr.mxu0 0.0
  %165 = vmatpush2.msra.mxu0 0.0
  %166 = vmatprep.subr.mxu0 0.0
  %167 = vmatpush2.msra.mxu0 0.0
  %168 = vmatprep.subr.mxu0 0.0
  %169 = vmatpush2.msra.mxu0 0.0
  %170 = vmatprep.mubr.f32.mxu0 0.0
  %171 = vmatmul.mubr.f32.gmra.mxu0 %v104
  %v172 = vpop.f32.mrf.mxu0
  %v173 = vadd.f32 %v101, %v172
  %v174 = vpop.f32.mrf.mxu0
  %175 = vdwg.mxu0
  %176 = vset.pattern.permute.xlu0 2
  %177 = vperm.xlu0 %176, %v18
  %v178 = vpop.permute.xlu0 %177
  %v181 = vsel %vm25, %v16, 0
  %183 = vmatprep.subr.mxu0 0.0
  %184 = vmatpush1.msra.mxu0 0.0
  %185 = vmatprep.subr.mxu0 0.0
  %186 = vmatpush1.msra.mxu0 0.0
  %187 = vmatprep.subr.mxu0 0.0
  %188 = vmatpush1.msra.mxu0 0.0
  %189 = vmatprep.subr.mxu0 0.0
  %190 = vmatpush1.msra.mxu0 0.0
  %191 = vmatprep.subr.mxu0 0.0
  %192 = vmatpush1.msra.mxu0 0.0
  %193 = vmatprep.subr.mxu0 0.0
  %194 = vmatpush1.msra.mxu0 0.0
  %195 = vmatprep.subr.mxu0 0.0
  %196 = vmatpush1.msra.mxu0 0.0
  %197 = vmatprep.subr.mxu0 0.0
  %198 = vmatpush1.msra.mxu0 0.0
  %199 = vmatprep.subr.mxu0 0.0
  %200 = vmatpush1.msra.mxu0 0.0
  %201 = vmatprep.subr.mxu0 0.0
  %202 = vmatpush1.msra.mxu0 0.0
  %203 = vmatprep.subr.mxu0 0.0
  %204 = vmatpush1.msra.mxu0 0.0
  %205 = vmatprep.subr.mxu0 0.0
  %206 = vmatpush1.msra.mxu0 0.0
  %207 = vmatprep.subr.mxu0 0.0
  %208 = vmatpush1.msra.mxu0 0.0
  %209 = vmatprep.subr.mxu0 0.0
  %210 = vmatpush1.msra.mxu0 0.0
  %211 = vmatprep.subr.mxu0 0.0
  %212 = vmatpush1.msra.mxu0 0.0
  %213 = vmatprep.subr.mxu0 0.0
  %214 = vmatpush1.msra.mxu0 %v13
  %215 = vmatprep.subr.mxu0 0.0
  %216 = vmatpush2.msra.mxu0 0.0
  %217 = vmatprep.subr.mxu0 0.0
  %218 = vmatpush2.msra.mxu0 0.0
  %219 = vmatprep.subr.mxu0 0.0
  %220 = vmatpush2.msra.mxu0 0.0
  %221 = vmatprep.subr.mxu0 0.0
  %222 = vmatpush2.msra.mxu0 0.0
  %223 = vmatprep.subr.mxu0 0.0
  %224 = vmatpush2.msra.mxu0 0.0
  %225 = vmatprep.subr.mxu0 0.0
  %226 = vmatpush2.msra.mxu0 0.0
  %227 = vmatprep.subr.mxu0 0.0
  %228 = vmatpush2.msra.mxu0 0.0
  %229 = vmatprep.subr.mxu0 0.0
  %230 = vmatpush2.msra.mxu0 0.0
  %231 = vmatprep.subr.mxu0 0.0
  %232 = vmatpush2.msra.mxu0 0.0
  %233 = vmatprep.subr.mxu0 0.0
  %234 = vmatpush2.msra.mxu0 0.0
  %235 = vmatprep.subr.mxu0 0.0
  %236 = vmatpush2.msra.mxu0 0.0
  %237 = vmatprep.subr.mxu0 0.0
  %238 = vmatpush2.msra.mxu0 0.0
  %239 = vmatprep.subr.mxu0 0.0
  %240 = vmatpush2.msra.mxu0 0.0
  %241 = vmatprep.subr.mxu0 0.0
  %242 = vmatpush2.msra.mxu0 0.0
  %243 = vmatprep.subr.mxu0 0.0
  %244 = vmatpush2.msra.mxu0 0.0
  %245 = vmatprep.subr.mxu0 0.0
  %246 = vmatpush2.msra.mxu0 0.0
  %247 = vmatprep.mubr.f32.mxu0 0.0
  %248 = vmatmul.mubr.f32.gmra.mxu0 %v181
  %v249 = vpop.f32.mrf.mxu0
  %v250 = vadd.f32 %v178, %v249
  %v251 = vpop.f32.mrf.mxu0
  %252 = vdwg.mxu0
  %v253 = vlaneseq
  %v254 = vshrl.u32 %v253, 7
  %v255 = vadd.s32 %v254, 8
  %v256 = vadd.s32 %v254, 16
  %v257 = vadd.s32 %v254, 24
  %v258 = vadd.s32 %v254, 32
  %v259 = vadd.s32 %v254, 40
  %v260 = vadd.s32 %v254, 48
  %v261 = vadd.s32 %v254, 56
  %v262 = vadd.s32 %v254, 64
  %v263 = vadd.s32 %v254, 72
  %v264 = vadd.s32 %v254, 80
  %v265 = vadd.s32 %v254, 88
  %v266 = vadd.s32 %v254, 96
  %v267 = vadd.s32 %v254, 104
  %v268 = vadd.s32 %v254, 112
  %v269 = vadd.s32 %v254, 120
  %vm270 = vcmp.ge.s32.totalorder %v254, 8
  %vm271 = vcmp.ge.s32.totalorder %v255, 8
  %vm272 = vcmp.ge.s32.totalorder %v256, 8
  %vm273 = vcmp.ge.s32.totalorder %v257, 8
  %vm274 = vcmp.ge.s32.totalorder %v258, 8
  %vm275 = vcmp.ge.s32.totalorder %v259, 8
  %vm276 = vcmp.ge.s32.totalorder %v260, 8
  %vm277 = vcmp.ge.s32.totalorder %v261, 8
  %vm278 = vcmp.ge.s32.totalorder %v262, 8
  %vm279 = vcmp.ge.s32.totalorder %v263, 8
  %vm280 = vcmp.ge.s32.totalorder %v264, 8
  %vm281 = vcmp.ge.s32.totalorder %v265, 8
  %vm282 = vcmp.ge.s32.totalorder %v266, 8
  %vm283 = vcmp.ge.s32.totalorder %v267, 8
  %vm284 = vcmp.ge.s32.totalorder %v268, 8
  %vm285 = vcmp.ge.s32.totalorder %v269, 8
  %v286 = vsel %vm270, -1e+30, 0.0
  %v287 = vsel %vm271, -1e+30, 0.0
  %v288 = vsel %vm272, -1e+30, 0.0
  %v289 = vsel %vm273, -1e+30, 0.0
  %v290 = vsel %vm274, -1e+30, 0.0
  %v291 = vsel %vm275, -1e+30, 0.0
  %v292 = vsel %vm276, -1e+30, 0.0
  %v293 = vsel %vm277, -1e+30, 0.0
  %v294 = vsel %vm278, -1e+30, 0.0
  %v295 = vsel %vm279, -1e+30, 0.0
  %v296 = vsel %vm280, -1e+30, 0.0
  %v297 = vsel %vm281, -1e+30, 0.0
  %v298 = vsel %vm282, -1e+30, 0.0
  %v299 = vsel %vm283, -1e+30, 0.0
  %v300 = vsel %vm284, -1e+30, 0.0
  %v301 = vsel %vm285, -1e+30, 0.0
  %vm302 = vcmp.ge.s32.totalorder %v254, 0
  %vm303 = vcmp.lt.s32.totalorder %v254, 3
  %vm304 = vmand %vm302, %vm303
  %v305 = vsel %vm304, 1, 0
  %v306 = vcvt.s32.f32 %v305
  %v307 = vmul.f32 %v96, %v306
  %v308 = vmul.f32 %v250, %v306
  %309 = vxpose.xlu0.b32.start [1/16] %v173, 128
  %310 = vxpose.xlu0.b32.cont [2/16] 0.0, 128
  %311 = vxpose.xlu0.b32.cont [3/16] 0.0, 128
  %312 = vxpose.xlu0.b32.cont [4/16] 0.0, 128
  %313 = vxpose.xlu0.b32.cont [5/16] 0.0, 128
  %314 = vxpose.xlu0.b32.cont [6/16] 0.0, 128
  %315 = vxpose.xlu0.b32.cont [7/16] 0.0, 128
  %316 = vxpose.xlu0.b32.cont [8/16] 0.0, 128
  %317 = vxpose.xlu0.b32.cont [9/16] 0.0, 128
  %318 = vxpose.xlu0.b32.cont [10/16] 0.0, 128
  %319 = vxpose.xlu0.b32.cont [11/16] 0.0, 128
  %320 = vxpose.xlu0.b32.cont [12/16] 0.0, 128
  %321 = vxpose.xlu0.b32.cont [13/16] 0.0, 128
  %322 = vxpose.xlu0.b32.cont [14/16] 0.0, 128
  %323 = vxpose.xlu0.b32.cont [15/16] 0.0, 128
  %324 = vxpose.xlu0.b32.end [16/16] 0.0, 128
  %v325 = vpop.trf.xlu0
  %v326 = vpop.trf.xlu0
  %v327 = vpop.trf.xlu0
  %v328 = vpop.trf.xlu0
  %v329 = vpop.trf.xlu0
  %v330 = vpop.trf.xlu0
  %v331 = vpop.trf.xlu0
  %v332 = vpop.trf.xlu0
  %v333 = vpop.trf.xlu0
  %v334 = vpop.trf.xlu0
  %v335 = vpop.trf.xlu0
  %v336 = vpop.trf.xlu0
  %v337 = vpop.trf.xlu0
  %v338 = vpop.trf.xlu0
  %v339 = vpop.trf.xlu0
  %v340 = vpop.trf.xlu0
  %v342 = vsel %vm25, %v325, 0
  %v345 = vsel %vm25, %v326, 0
  %v348 = vsel %vm25, %v327, 0
  %v351 = vsel %vm25, %v328, 0
  %v354 = vsel %vm25, %v329, 0
  %v357 = vsel %vm25, %v330, 0
  %v360 = vsel %vm25, %v331, 0
  %v363 = vsel %vm25, %v332, 0
  %v366 = vsel %vm25, %v333, 0
  %v369 = vsel %vm25, %v334, 0
  %v372 = vsel %vm25, %v335, 0
  %v375 = vsel %vm25, %v336, 0
  %v378 = vsel %vm25, %v337, 0
  %v381 = vsel %vm25, %v338, 0
  %v384 = vsel %vm25, %v339, 0
  %v387 = vsel %vm25, %v340, 0
  %389 = vmatprep.subr.mxu0 0.0
  %390 = vmatpush1.msra.mxu0 0.0
  %391 = vmatprep.subr.mxu0 0.0
  %392 = vmatpush1.msra.mxu0 0.0
  %393 = vmatprep.subr.mxu0 0.0
  %394 = vmatpush1.msra.mxu0 0.0
  %395 = vmatprep.subr.mxu0 0.0
  %396 = vmatpush1.msra.mxu0 0.0
  %397 = vmatprep.subr.mxu0 0.0
  %398 = vmatpush1.msra.mxu0 0.0
  %399 = vmatprep.subr.mxu0 0.0
  %400 = vmatpush1.msra.mxu0 0.0
  %401 = vmatprep.subr.mxu0 0.0
  %402 = vmatpush1.msra.mxu0 0.0
  %403 = vmatprep.subr.mxu0 0.0
  %404 = vmatpush1.msra.mxu0 0.0
  %405 = vmatprep.subr.mxu0 0.0
  %406 = vmatpush1.msra.mxu0 0.0
  %407 = vmatprep.subr.mxu0 0.0
  %408 = vmatpush1.msra.mxu0 0.0
  %409 = vmatprep.subr.mxu0 0.0
  %410 = vmatpush1.msra.mxu0 0.0
  %411 = vmatprep.subr.mxu0 0.0
  %412 = vmatpush1.msra.mxu0 0.0
  %413 = vmatprep.subr.mxu0 0.0
  %414 = vmatpush1.msra.mxu0 0.0
  %415 = vmatprep.subr.mxu0 0.0
  %416 = vmatpush1.msra.mxu0 0.0
  %417 = vmatprep.subr.mxu0 0.0
  %418 = vmatpush1.msra.mxu0 0.0
  %419 = vmatprep.subr.mxu0 0.0
  %420 = vmatpush1.msra.mxu0 %v307
  %421 = vmatprep.subr.mxu0 0.0
  %422 = vmatpush2.msra.mxu0 0.0
  %423 = vmatprep.subr.mxu0 0.0
  %424 = vmatpush2.msra.mxu0 0.0
  %425 = vmatprep.subr.mxu0 0.0
  %426 = vmatpush2.msra.mxu0 0.0
  %427 = vmatprep.subr.mxu0 0.0
  %428 = vmatpush2.msra.mxu0 0.0
  %429 = vmatprep.subr.mxu0 0.0
  %430 = vmatpush2.msra.mxu0 0.0
  %431 = vmatprep.subr.mxu0 0.0
  %432 = vmatpush2.msra.mxu0 0.0
  %433 = vmatprep.subr.mxu0 0.0
  %434 = vmatpush2.msra.mxu0 0.0
  %435 = vmatprep.subr.mxu0 0.0
  %436 = vmatpush2.msra.mxu0 0.0
  %437 = vmatprep.subr.mxu0 0.0
  %438 = vmatpush2.msra.mxu0 0.0
  %439 = vmatprep.subr.mxu0 0.0
  %440 = vmatpush2.msra.mxu0 0.0
  %441 = vmatprep.subr.mxu0 0.0
  %442 = vmatpush2.msra.mxu0 0.0
  %443 = vmatprep.subr.mxu0 0.0
  %444 = vmatpush2.msra.mxu0 0.0
  %445 = vmatprep.subr.mxu0 0.0
  %446 = vmatpush2.msra.mxu0 0.0
  %447 = vmatprep.subr.mxu0 0.0
  %448 = vmatpush2.msra.mxu0 0.0
  %449 = vmatprep.subr.mxu0 0.0
  %450 = vmatpush2.msra.mxu0 0.0
  %451 = vmatprep.subr.mxu0 0.0
  %452 = vmatpush2.msra.mxu0 0.0
  %453 = vmatprep.mubr.f32.mxu0 0.0
  %454 = vmatmul.mubr.f32.gmra.mxu0 %v342
  %v455 = vpop.f32.mrf.mxu0
  %v456 = vadd.f32 %v286, %v455
  %v457 = vpop.f32.mrf.mxu0
  %458 = vmatprep.mubr.f32.mxu0 0.0
  %459 = vmatmul.mubr.f32.gmra.mxu0 %v345
  %v460 = vpop.f32.mrf.mxu0
  %v461 = vadd.f32 %v287, %v460
  %v462 = vpop.f32.mrf.mxu0
  %463 = vmatprep.mubr.f32.mxu0 0.0
  %464 = vmatmul.mubr.f32.gmra.mxu0 %v348
  %v465 = vpop.f32.mrf.mxu0
  %v466 = vadd.f32 %v288, %v465
  %v467 = vpop.f32.mrf.mxu0
  %468 = vmatprep.mubr.f32.mxu0 0.0
  %469 = vmatmul.mubr.f32.gmra.mxu0 %v351
  %v470 = vpop.f32.mrf.mxu0
  %v471 = vadd.f32 %v289, %v470
  %v472 = vpop.f32.mrf.mxu0
  %473 = vmatprep.mubr.f32.mxu0 0.0
  %474 = vmatmul.mubr.f32.gmra.mxu0 %v354
  %v475 = vpop.f32.mrf.mxu0
  %v476 = vadd.f32 %v290, %v475
  %v477 = vpop.f32.mrf.mxu0
  %478 = vmatprep.mubr.f32.mxu0 0.0
  %479 = vmatmul.mubr.f32.gmra.mxu0 %v357
  %v480 = vpop.f32.mrf.mxu0
  %v481 = vadd.f32 %v291, %v480
  %v482 = vpop.f32.mrf.mxu0
  %483 = vmatprep.mubr.f32.mxu0 0.0
  %484 = vmatmul.mubr.f32.gmra.mxu0 %v360
  %v485 = vpop.f32.mrf.mxu0
  %v486 = vadd.f32 %v292, %v485
  %v487 = vpop.f32.mrf.mxu0
  %488 = vmatprep.mubr.f32.mxu0 0.0
  %489 = vmatmul.mubr.f32.gmra.mxu0 %v363
  %v490 = vpop.f32.mrf.mxu0
  %v491 = vadd.f32 %v293, %v490
  %v492 = vpop.f32.mrf.mxu0
  %493 = vmatprep.mubr.f32.mxu0 0.0
  %494 = vmatmul.mubr.f32.gmra.mxu0 %v366
  %v495 = vpop.f32.mrf.mxu0
  %v496 = vadd.f32 %v294, %v495
  %v497 = vpop.f32.mrf.mxu0
  %498 = vmatprep.mubr.f32.mxu0 0.0
  %499 = vmatmul.mubr.f32.gmra.mxu0 %v369
  %v500 = vpop.f32.mrf.mxu0
  %v501 = vadd.f32 %v295, %v500
  %v502 = vpop.f32.mrf.mxu0
  %503 = vmatprep.mubr.f32.mxu0 0.0
  %504 = vmatmul.mubr.f32.gmra.mxu0 %v372
  %v505 = vpop.f32.mrf.mxu0
  %v506 = vadd.f32 %v296, %v505
  %v507 = vpop.f32.mrf.mxu0
  %508 = vmatprep.mubr.f32.mxu0 0.0
  %509 = vmatmul.mubr.f32.gmra.mxu0 %v375
  %v510 = vpop.f32.mrf.mxu0
  %v511 = vadd.f32 %v297, %v510
  %v512 = vpop.f32.mrf.mxu0
  %513 = vmatprep.mubr.f32.mxu0 0.0
  %514 = vmatmul.mubr.f32.gmra.mxu0 %v378
  %v515 = vpop.f32.mrf.mxu0
  %v516 = vadd.f32 %v298, %v515
  %v517 = vpop.f32.mrf.mxu0
  %518 = vmatprep.mubr.f32.mxu0 0.0
  %519 = vmatmul.mubr.f32.gmra.mxu0 %v381
  %v520 = vpop.f32.mrf.mxu0
  %v521 = vadd.f32 %v299, %v520
  %v522 = vpop.f32.mrf.mxu0
  %523 = vmatprep.mubr.f32.mxu0 0.0
  %524 = vmatmul.mubr.f32.gmra.mxu0 %v384
  %v525 = vpop.f32.mrf.mxu0
  %v526 = vadd.f32 %v300, %v525
  %v527 = vpop.f32.mrf.mxu0
  %528 = vmatprep.mubr.f32.mxu0 0.0
  %529 = vmatmul.mubr.f32.gmra.mxu0 %v387
  %v530 = vpop.f32.mrf.mxu0
  %v531 = vadd.f32 %v301, %v530
  %v532 = vpop.f32.mrf.mxu0
  %533 = vdwg.mxu0
  %v534 = vmax.f32 %v456, %v476
  %v535 = vmax.f32 %v461, %v481
  %v536 = vmax.f32 %v466, %v486
  %v537 = vmax.f32 %v471, %v491
  %v538 = vmax.f32 %v534, %v496
  %v539 = vmax.f32 %v535, %v501
  %v540 = vmax.f32 %v536, %v506
  %v541 = vmax.f32 %v537, %v511
  %v542 = vmax.f32 %v538, %v516
  %v543 = vmax.f32 %v539, %v521
  %v544 = vmax.f32 %v540, %v526
  %v545 = vmax.f32 %v541, %v531
  %v546 = vmax.f32 %v542, %v543
  %v547 = vmax.f32 %v544, %v545
  %v548 = vmax.f32 %v546, %v547
  %v549 = vrot.slane %v548, 4
  %v550 = vmax.f32 %v548, %v549
  %v551 = vrot.slane %v550, 2
  %v552 = vmax.f32 %v550, %v551
  %v553 = vrot.slane %v552, 1
  %v554 = vmax.f32 %v552, %v553
  %v555 = vsub.f32 %v456, %v554
  %v556 = vsub.f32 %v461, %v554
  %v557 = vsub.f32 %v466, %v554
  %v558 = vsub.f32 %v471, %v554
  %v559 = vsub.f32 %v476, %v554
  %v560 = vsub.f32 %v481, %v554
  %v561 = vsub.f32 %v486, %v554
  %v562 = vsub.f32 %v491, %v554
  %v563 = vsub.f32 %v496, %v554
  %v564 = vsub.f32 %v501, %v554
  %v565 = vsub.f32 %v506, %v554
  %v566 = vsub.f32 %v511, %v554
  %v567 = vsub.f32 %v516, %v554
  %v568 = vsub.f32 %v521, %v554
  %v569 = vsub.f32 %v526, %v554
  %v570 = vsub.f32 %v531, %v554
  %v571 = vmul.f32 %v555, 1.442695
  %v572 = vpow.pop %v571
  %v573 = vmul.f32 %v556, 1.442695
  %v574 = vpow.pop %v573
  %v575 = vmul.f32 %v557, 1.442695
  %v576 = vpow.pop %v575
  %v577 = vmul.f32 %v558, 1.442695
  %v578 = vpow.pop %v577
  %v579 = vmul.f32 %v559, 1.442695
  %v580 = vpow.pop %v579
  %v581 = vmul.f32 %v560, 1.442695
  %v582 = vpow.pop %v581
  %v583 = vmul.f32 %v561, 1.442695
  %v584 = vpow.pop %v583
  %v585 = vmul.f32 %v562, 1.442695
  %v586 = vpow.pop %v585
  %v587 = vmul.f32 %v563, 1.442695
  %v588 = vpow.pop %v587
  %v589 = vmul.f32 %v564, 1.442695
  %v590 = vpow.pop %v589
  %v591 = vmul.f32 %v565, 1.442695
  %v592 = vpow.pop %v591
  %v593 = vmul.f32 %v566, 1.442695
  %v594 = vpow.pop %v593
  %v595 = vmul.f32 %v567, 1.442695
  %v596 = vpow.pop %v595
  %v597 = vmul.f32 %v568, 1.442695
  %v598 = vpow.pop %v597
  %v599 = vmul.f32 %v569, 1.442695
  %v600 = vpow.pop %v599
  %v601 = vmul.f32 %v570, 1.442695
  %v602 = vpow.pop %v601
  %v603 = vadd.f32 %v572, %v574
  %v604 = vadd.f32 %v603, %v576
  %v605 = vadd.f32 %v604, %v578
  %v606 = vadd.f32 %v605, %v580
  %v607 = vadd.f32 %v606, %v582
  %v608 = vadd.f32 %v607, %v584
  %v609 = vadd.f32 %v608, %v586
  %v610 = vadd.f32 %v609, %v588
  %v611 = vadd.f32 %v610, %v590
  %v612 = vadd.f32 %v611, %v592
  %v613 = vadd.f32 %v612, %v594
  %v614 = vadd.f32 %v613, %v596
  %v615 = vadd.f32 %v614, %v598
  %v616 = vadd.f32 %v615, %v600
  %v617 = vadd.f32 %v616, %v602
  %v618 = vrot.slane %v617, 4
  %v619 = vadd.f32 %v617, %v618
  %v620 = vrot.slane %v619, 2
  %v621 = vadd.f32 %v619, %v620
  %v622 = vrot.slane %v621, 1
  %v623 = vadd.f32 %v621, %v622
  %624 = vmatprep.subr.mxu0 0.0
  %625 = vmatpush1.msra.mxu0 %v602
  %626 = vmatprep.subr.mxu0 0.0
  %627 = vmatpush1.msra.mxu0 %v600
  %628 = vmatprep.subr.mxu0 0.0
  %629 = vmatpush1.msra.mxu0 %v598
  %630 = vmatprep.subr.mxu0 0.0
  %631 = vmatpush1.msra.mxu0 %v596
  %632 = vmatprep.subr.mxu0 0.0
  %633 = vmatpush1.msra.mxu0 %v594
  %634 = vmatprep.subr.mxu0 0.0
  %635 = vmatpush1.msra.mxu0 %v592
  %636 = vmatprep.subr.mxu0 0.0
  %637 = vmatpush1.msra.mxu0 %v590
  %638 = vmatprep.subr.mxu0 0.0
  %639 = vmatpush1.msra.mxu0 %v588
  %640 = vmatprep.subr.mxu0 0.0
  %641 = vmatpush1.msra.mxu0 %v586
  %642 = vmatprep.subr.mxu0 0.0
  %643 = vmatpush1.msra.mxu0 %v584
  %644 = vmatprep.subr.mxu0 0.0
  %645 = vmatpush1.msra.mxu0 %v582
  %646 = vmatprep.subr.mxu0 0.0
  %647 = vmatpush1.msra.mxu0 %v580
  %648 = vmatprep.subr.mxu0 0.0
  %649 = vmatpush1.msra.mxu0 %v578
  %650 = vmatprep.subr.mxu0 0.0
  %651 = vmatpush1.msra.mxu0 %v576
  %652 = vmatprep.subr.mxu0 0.0
  %653 = vmatpush1.msra.mxu0 %v574
  %654 = vmatprep.subr.mxu0 0.0
  %655 = vmatpush1.msra.mxu0 %v572
  %656 = vmatprep.subr.mxu0 0.0
  %657 = vmatpush2.msra.mxu0 0.0
  %658 = vmatprep.subr.mxu0 0.0
  %659 = vmatpush2.msra.mxu0 0.0
  %660 = vmatprep.subr.mxu0 0.0
  %661 = vmatpush2.msra.mxu0 0.0
  %662 = vmatprep.subr.mxu0 0.0
  %663 = vmatpush2.msra.mxu0 0.0
  %664 = vmatprep.subr.mxu0 0.0
  %665 = vmatpush2.msra.mxu0 0.0
  %666 = vmatprep.subr.mxu0 0.0
  %667 = vmatpush2.msra.mxu0 0.0
  %668 = vmatprep.subr.mxu0 0.0
  %669 = vmatpush2.msra.mxu0 0.0
  %670 = vmatprep.subr.mxu0 0.0
  %671 = vmatpush2.msra.mxu0 0.0
  %672 = vmatprep.subr.mxu0 0.0
  %673 = vmatpush2.msra.mxu0 0.0
  %674 = vmatprep.subr.mxu0 0.0
  %675 = vmatpush2.msra.mxu0 0.0
  %676 = vmatprep.subr.mxu0 0.0
  %677 = vmatpush2.msra.mxu0 0.0
  %678 = vmatprep.subr.mxu0 0.0
  %679 = vmatpush2.msra.mxu0 0.0
  %680 = vmatprep.subr.mxu0 0.0
  %681 = vmatpush2.msra.mxu0 0.0
  %682 = vmatprep.subr.mxu0 0.0
  %683 = vmatpush2.msra.mxu0 0.0
  %684 = vmatprep.subr.mxu0 0.0
  %685 = vmatpush2.msra.mxu0 0.0
  %686 = vmatprep.subr.mxu0 0.0
  %687 = vmatpush2.msra.mxu0 0.0
  %688 = vmatprep.mubr.f32.mxu0 0.0
  %689 = vmatmul.mubr.f32.gmra.mxu0 %v308
  %v690 = vpop.f32.mrf.mxu0
  %v691 = vadd.f32 0.0, %v690
  %v692 = vpop.f32.mrf.mxu0
  %693 = vdwg.mxu0
  %v694 = vrcp.pop %v623
  %v695 = vmul.f32 %v691, %v694
  %v696 = vadd.f32 %v695, 0.0
  %vm697 = vcmp.ge.s32.totalorder %v254, 3
  %vm698 = vcmp.lt.s32.totalorder %v254, 6
  %vm699 = vmand %vm697, %vm698
  %v700 = vsel %vm699, 1, 0
  %v701 = vcvt.s32.f32 %v700
  %v702 = vmul.f32 %v96, %v701
  %v703 = vmul.f32 %v250, %v701
  %704 = vmatprep.subr.mxu0 0.0
  %705 = vmatpush1.msra.mxu0 0.0
  %706 = vmatprep.subr.mxu0 0.0
  %707 = vmatpush1.msra.mxu0 0.0
  %708 = vmatprep.subr.mxu0 0.0
  %709 = vmatpush1.msra.mxu0 0.0
  %710 = vmatprep.subr.mxu0 0.0
  %711 = vmatpush1.msra.mxu0 0.0
  %712 = vmatprep.subr.mxu0 0.0
  %713 = vmatpush1.msra.mxu0 0.0
  %714 = vmatprep.subr.mxu0 0.0
  %715 = vmatpush1.msra.mxu0 0.0
  %716 = vmatprep.subr.mxu0 0.0
  %717 = vmatpush1.msra.mxu0 0.0
  %718 = vmatprep.subr.mxu0 0.0
  %719 = vmatpush1.msra.mxu0 0.0
  %720 = vmatprep.subr.mxu0 0.0
  %721 = vmatpush1.msra.mxu0 0.0
  %722 = vmatprep.subr.mxu0 0.0
  %723 = vmatpush1.msra.mxu0 0.0
  %724 = vmatprep.subr.mxu0 0.0
  %725 = vmatpush1.msra.mxu0 0.0
  %726 = vmatprep.subr.mxu0 0.0
  %727 = vmatpush1.msra.mxu0 0.0
  %728 = vmatprep.subr.mxu0 0.0
  %729 = vmatpush1.msra.mxu0 0.0
  %730 = vmatprep.subr.mxu0 0.0
  %731 = vmatpush1.msra.mxu0 0.0
  %732 = vmatprep.subr.mxu0 0.0
  %733 = vmatpush1.msra.mxu0 0.0
  %734 = vmatprep.subr.mxu0 0.0
  %735 = vmatpush1.msra.mxu0 %v702
  %736 = vmatprep.subr.mxu0 0.0
  %737 = vmatpush2.msra.mxu0 0.0
  %738 = vmatprep.subr.mxu0 0.0
  %739 = vmatpush2.msra.mxu0 0.0
  %740 = vmatprep.subr.mxu0 0.0
  %741 = vmatpush2.msra.mxu0 0.0
  %742 = vmatprep.subr.mxu0 0.0
  %743 = vmatpush2.msra.mxu0 0.0
  %744 = vmatprep.subr.mxu0 0.0
  %745 = vmatpush2.msra.mxu0 0.0
  %746 = vmatprep.subr.mxu0 0.0
  %747 = vmatpush2.msra.mxu0 0.0
  %748 = vmatprep.subr.mxu0 0.0
  %749 = vmatpush2.msra.mxu0 0.0
  %750 = vmatprep.subr.mxu0 0.0
  %751 = vmatpush2.msra.mxu0 0.0
  %752 = vmatprep.subr.mxu0 0.0
  %753 = vmatpush2.msra.mxu0 0.0
  %754 = vmatprep.subr.mxu0 0.0
  %755 = vmatpush2.msra.mxu0 0.0
  %756 = vmatprep.subr.mxu0 0.0
  %757 = vmatpush2.msra.mxu0 0.0
  %758 = vmatprep.subr.mxu0 0.0
  %759 = vmatpush2.msra.mxu0 0.0
  %760 = vmatprep.subr.mxu0 0.0
  %761 = vmatpush2.msra.mxu0 0.0
  %762 = vmatprep.subr.mxu0 0.0
  %763 = vmatpush2.msra.mxu0 0.0
  %764 = vmatprep.subr.mxu0 0.0
  %765 = vmatpush2.msra.mxu0 0.0
  %766 = vmatprep.subr.mxu0 0.0
  %767 = vmatpush2.msra.mxu0 0.0
  %768 = vmatprep.mubr.f32.mxu0 0.0
  %769 = vmatmul.mubr.f32.gmra.mxu0 %v342
  %v770 = vpop.f32.mrf.mxu0
  %v771 = vadd.f32 %v286, %v770
  %v772 = vpop.f32.mrf.mxu0
  %773 = vmatprep.mubr.f32.mxu0 0.0
  %774 = vmatmul.mubr.f32.gmra.mxu0 %v345
  %v775 = vpop.f32.mrf.mxu0
  %v776 = vadd.f32 %v287, %v775
  %v777 = vpop.f32.mrf.mxu0
  %778 = vmatprep.mubr.f32.mxu0 0.0
  %779 = vmatmul.mubr.f32.gmra.mxu0 %v348
  %v780 = vpop.f32.mrf.mxu0
  %v781 = vadd.f32 %v288, %v780
  %v782 = vpop.f32.mrf.mxu0
  %783 = vmatprep.mubr.f32.mxu0 0.0
  %784 = vmatmul.mubr.f32.gmra.mxu0 %v351
  %v785 = vpop.f32.mrf.mxu0
  %v786 = vadd.f32 %v289, %v785
  %v787 = vpop.f32.mrf.mxu0
  %788 = vmatprep.mubr.f32.mxu0 0.0
  %789 = vmatmul.mubr.f32.gmra.mxu0 %v354
  %v790 = vpop.f32.mrf.mxu0
  %v791 = vadd.f32 %v290, %v790
  %v792 = vpop.f32.mrf.mxu0
  %793 = vmatprep.mubr.f32.mxu0 0.0
  %794 = vmatmul.mubr.f32.gmra.mxu0 %v357
  %v795 = vpop.f32.mrf.mxu0
  %v796 = vadd.f32 %v291, %v795
  %v797 = vpop.f32.mrf.mxu0
  %798 = vmatprep.mubr.f32.mxu0 0.0
  %799 = vmatmul.mubr.f32.gmra.mxu0 %v360
  %v800 = vpop.f32.mrf.mxu0
  %v801 = vadd.f32 %v292, %v800
  %v802 = vpop.f32.mrf.mxu0
  %803 = vmatprep.mubr.f32.mxu0 0.0
  %804 = vmatmul.mubr.f32.gmra.mxu0 %v363
  %v805 = vpop.f32.mrf.mxu0
  %v806 = vadd.f32 %v293, %v805
  %v807 = vpop.f32.mrf.mxu0
  %808 = vmatprep.mubr.f32.mxu0 0.0
  %809 = vmatmul.mubr.f32.gmra.mxu0 %v366
  %v810 = vpop.f32.mrf.mxu0
  %v811 = vadd.f32 %v294, %v810
  %v812 = vpop.f32.mrf.mxu0
  %813 = vmatprep.mubr.f32.mxu0 0.0
  %814 = vmatmul.mubr.f32.gmra.mxu0 %v369
  %v815 = vpop.f32.mrf.mxu0
  %v816 = vadd.f32 %v295, %v815
  %v817 = vpop.f32.mrf.mxu0
  %818 = vmatprep.mubr.f32.mxu0 0.0
  %819 = vmatmul.mubr.f32.gmra.mxu0 %v372
  %v820 = vpop.f32.mrf.mxu0
  %v821 = vadd.f32 %v296, %v820
  %v822 = vpop.f32.mrf.mxu0
  %823 = vmatprep.mubr.f32.mxu0 0.0
  %824 = vmatmul.mubr.f32.gmra.mxu0 %v375
  %v825 = vpop.f32.mrf.mxu0
  %v826 = vadd.f32 %v297, %v825
  %v827 = vpop.f32.mrf.mxu0
  %828 = vmatprep.mubr.f32.mxu0 0.0
  %829 = vmatmul.mubr.f32.gmra.mxu0 %v378
  %v830 = vpop.f32.mrf.mxu0
  %v831 = vadd.f32 %v298, %v830
  %v832 = vpop.f32.mrf.mxu0
  %833 = vmatprep.mubr.f32.mxu0 0.0
  %834 = vmatmul.mubr.f32.gmra.mxu0 %v381
  %v835 = vpop.f32.mrf.mxu0
  %v836 = vadd.f32 %v299, %v835
  %v837 = vpop.f32.mrf.mxu0
  %838 = vmatprep.mubr.f32.mxu0 0.0
  %839 = vmatmul.mubr.f32.gmra.mxu0 %v384
  %v840 = vpop.f32.mrf.mxu0
  %v841 = vadd.f32 %v300, %v840
  %v842 = vpop.f32.mrf.mxu0
  %843 = vmatprep.mubr.f32.mxu0 0.0
  %844 = vmatmul.mubr.f32.gmra.mxu0 %v387
  %v845 = vpop.f32.mrf.mxu0
  %v846 = vadd.f32 %v301, %v845
  %v847 = vpop.f32.mrf.mxu0
  %848 = vdwg.mxu0
  %v849 = vmax.f32 %v771, %v791
  %v850 = vmax.f32 %v776, %v796
  %v851 = vmax.f32 %v781, %v801
  %v852 = vmax.f32 %v786, %v806
  %v853 = vmax.f32 %v849, %v811
  %v854 = vmax.f32 %v850, %v816
  %v855 = vmax.f32 %v851, %v821
  %v856 = vmax.f32 %v852, %v826
  %v857 = vmax.f32 %v853, %v831
  %v858 = vmax.f32 %v854, %v836
  %v859 = vmax.f32 %v855, %v841
  %v860 = vmax.f32 %v856, %v846
  %v861 = vmax.f32 %v857, %v858
  %v862 = vmax.f32 %v859, %v860
  %v863 = vmax.f32 %v861, %v862
  %v864 = vrot.slane %v863, 4
  %v865 = vmax.f32 %v863, %v864
  %v866 = vrot.slane %v865, 2
  %v867 = vmax.f32 %v865, %v866
  %v868 = vrot.slane %v867, 1
  %v869 = vmax.f32 %v867, %v868
  %v870 = vsub.f32 %v771, %v869
  %v871 = vsub.f32 %v776, %v869
  %v872 = vsub.f32 %v781, %v869
  %v873 = vsub.f32 %v786, %v869
  %v874 = vsub.f32 %v791, %v869
  %v875 = vsub.f32 %v796, %v869
  %v876 = vsub.f32 %v801, %v869
  %v877 = vsub.f32 %v806, %v869
  %v878 = vsub.f32 %v811, %v869
  %v879 = vsub.f32 %v816, %v869
  %v880 = vsub.f32 %v821, %v869
  %v881 = vsub.f32 %v826, %v869
  %v882 = vsub.f32 %v831, %v869
  %v883 = vsub.f32 %v836, %v869
  %v884 = vsub.f32 %v841, %v869
  %v885 = vsub.f32 %v846, %v869
  %v886 = vmul.f32 %v870, 1.442695
  %v887 = vpow.pop %v886
  %v888 = vmul.f32 %v871, 1.442695
  %v889 = vpow.pop %v888
  %v890 = vmul.f32 %v872, 1.442695
  %v891 = vpow.pop %v890
  %v892 = vmul.f32 %v873, 1.442695
  %v893 = vpow.pop %v892
  %v894 = vmul.f32 %v874, 1.442695
  %v895 = vpow.pop %v894
  %v896 = vmul.f32 %v875, 1.442695
  %v897 = vpow.pop %v896
  %v898 = vmul.f32 %v876, 1.442695
  %v899 = vpow.pop %v898
  %v900 = vmul.f32 %v877, 1.442695
  %v901 = vpow.pop %v900
  %v902 = vmul.f32 %v878, 1.442695
  %v903 = vpow.pop %v902
  %v904 = vmul.f32 %v879, 1.442695
  %v905 = vpow.pop %v904
  %v906 = vmul.f32 %v880, 1.442695
  %v907 = vpow.pop %v906
  %v908 = vmul.f32 %v881, 1.442695
  %v909 = vpow.pop %v908
  %v910 = vmul.f32 %v882, 1.442695
  %v911 = vpow.pop %v910
  %v912 = vmul.f32 %v883, 1.442695
  %v913 = vpow.pop %v912
  %v914 = vmul.f32 %v884, 1.442695
  %v915 = vpow.pop %v914
  %v916 = vmul.f32 %v885, 1.442695
  %v917 = vpow.pop %v916
  %v918 = vadd.f32 %v887, %v889
  %v919 = vadd.f32 %v918, %v891
  %v920 = vadd.f32 %v919, %v893
  %v921 = vadd.f32 %v920, %v895
  %v922 = vadd.f32 %v921, %v897
  %v923 = vadd.f32 %v922, %v899
  %v924 = vadd.f32 %v923, %v901
  %v925 = vadd.f32 %v924, %v903
  %v926 = vadd.f32 %v925, %v905
  %v927 = vadd.f32 %v926, %v907
  %v928 = vadd.f32 %v927, %v909
  %v929 = vadd.f32 %v928, %v911
  %v930 = vadd.f32 %v929, %v913
  %v931 = vadd.f32 %v930, %v915
  %v932 = vadd.f32 %v931, %v917
  %v933 = vrot.slane %v932, 4
  %v934 = vadd.f32 %v932, %v933
  %v935 = vrot.slane %v934, 2
  %v936 = vadd.f32 %v934, %v935
  %v937 = vrot.slane %v936, 1
  %v938 = vadd.f32 %v936, %v937
  %939 = vmatprep.subr.mxu0 0.0
  %940 = vmatpush1.msra.mxu0 %v917
  %941 = vmatprep.subr.mxu0 0.0
  %942 = vmatpush1.msra.mxu0 %v915
  %943 = vmatprep.subr.mxu0 0.0
  %944 = vmatpush1.msra.mxu0 %v913
  %945 = vmatprep.subr.mxu0 0.0
  %946 = vmatpush1.msra.mxu0 %v911
  %947 = vmatprep.subr.mxu0 0.0
  %948 = vmatpush1.msra.mxu0 %v909
  %949 = vmatprep.subr.mxu0 0.0
  %950 = vmatpush1.msra.mxu0 %v907
  %951 = vmatprep.subr.mxu0 0.0
  %952 = vmatpush1.msra.mxu0 %v905
  %953 = vmatprep.subr.mxu0 0.0
  %954 = vmatpush1.msra.mxu0 %v903
  %955 = vmatprep.subr.mxu0 0.0
  %956 = vmatpush1.msra.mxu0 %v901
  %957 = vmatprep.subr.mxu0 0.0
  %958 = vmatpush1.msra.mxu0 %v899
  %959 = vmatprep.subr.mxu0 0.0
  %960 = vmatpush1.msra.mxu0 %v897
  %961 = vmatprep.subr.mxu0 0.0
  %962 = vmatpush1.msra.mxu0 %v895
  %963 = vmatprep.subr.mxu0 0.0
  %964 = vmatpush1.msra.mxu0 %v893
  %965 = vmatprep.subr.mxu0 0.0
  %966 = vmatpush1.msra.mxu0 %v891
  %967 = vmatprep.subr.mxu0 0.0
  %968 = vmatpush1.msra.mxu0 %v889
  %969 = vmatprep.subr.mxu0 0.0
  %970 = vmatpush1.msra.mxu0 %v887
  %971 = vmatprep.subr.mxu0 0.0
  %972 = vmatpush2.msra.mxu0 0.0
  %973 = vmatprep.subr.mxu0 0.0
  %974 = vmatpush2.msra.mxu0 0.0
  %975 = vmatprep.subr.mxu0 0.0
  %976 = vmatpush2.msra.mxu0 0.0
  %977 = vmatprep.subr.mxu0 0.0
  %978 = vmatpush2.msra.mxu0 0.0
  %979 = vmatprep.subr.mxu0 0.0
  %980 = vmatpush2.msra.mxu0 0.0
  %981 = vmatprep.subr.mxu0 0.0
  %982 = vmatpush2.msra.mxu0 0.0
  %983 = vmatprep.subr.mxu0 0.0
  %984 = vmatpush2.msra.mxu0 0.0
  %985 = vmatprep.subr.mxu0 0.0
  %986 = vmatpush2.msra.mxu0 0.0
  %987 = vmatprep.subr.mxu0 0.0
  %988 = vmatpush2.msra.mxu0 0.0
  %989 = vmatprep.subr.mxu0 0.0
  %990 = vmatpush2.msra.mxu0 0.0
  %991 = vmatprep.subr.mxu0 0.0
  %992 = vmatpush2.msra.mxu0 0.0
  %993 = vmatprep.subr.mxu0 0.0
  %994 = vmatpush2.msra.mxu0 0.0
  %995 = vmatprep.subr.mxu0 0.0
  %996 = vmatpush2.msra.mxu0 0.0
  %997 = vmatprep.subr.mxu0 0.0
  %998 = vmatpush2.msra.mxu0 0.0
  %999 = vmatprep.subr.mxu0 0.0
  %1000 = vmatpush2.msra.mxu0 0.0
  %1001 = vmatprep.subr.mxu0 0.0
  %1002 = vmatpush2.msra.mxu0 0.0
  %1003 = vmatprep.mubr.f32.mxu0 0.0
  %1004 = vmatmul.mubr.f32.gmra.mxu0 %v703
  %v1005 = vpop.f32.mrf.mxu0
  %v1006 = vadd.f32 0.0, %v1005
  %v1007 = vpop.f32.mrf.mxu0
  %1008 = vdwg.mxu0
  %v1009 = vrcp.pop %v938
  %v1010 = vmul.f32 %v1006, %v1009
  %v1011 = vadd.f32 %v696, %v1010
  %1012 = vset.pattern.permute.xlu0 3
  %1013 = vperm.xlu0 %1012, %v18
  %v1014 = vpop.permute.xlu0 %1013
  %v1017 = vsel %vm25, %v17, 0
  %1019 = vmatprep.subr.mxu0 0.0
  %1020 = vmatpush1.msra.mxu0 0.0
  %1021 = vmatprep.subr.mxu0 0.0
  %1022 = vmatpush1.msra.mxu0 0.0
  %1023 = vmatprep.subr.mxu0 0.0
  %1024 = vmatpush1.msra.mxu0 0.0
  %1025 = vmatprep.subr.mxu0 0.0
  %1026 = vmatpush1.msra.mxu0 0.0
  %1027 = vmatprep.subr.mxu0 0.0
  %1028 = vmatpush1.msra.mxu0 0.0
  %1029 = vmatprep.subr.mxu0 0.0
  %1030 = vmatpush1.msra.mxu0 0.0
  %1031 = vmatprep.subr.mxu0 0.0
  %1032 = vmatpush1.msra.mxu0 0.0
  %1033 = vmatprep.subr.mxu0 0.0
  %1034 = vmatpush1.msra.mxu0 0.0
  %1035 = vmatprep.subr.mxu0 0.0
  %1036 = vmatpush1.msra.mxu0 0.0
  %1037 = vmatprep.subr.mxu0 0.0
  %1038 = vmatpush1.msra.mxu0 0.0
  %1039 = vmatprep.subr.mxu0 0.0
  %1040 = vmatpush1.msra.mxu0 0.0
  %1041 = vmatprep.subr.mxu0 0.0
  %1042 = vmatpush1.msra.mxu0 0.0
  %1043 = vmatprep.subr.mxu0 0.0
  %1044 = vmatpush1.msra.mxu0 0.0
  %1045 = vmatprep.subr.mxu0 0.0
  %1046 = vmatpush1.msra.mxu0 0.0
  %1047 = vmatprep.subr.mxu0 0.0
  %1048 = vmatpush1.msra.mxu0 0.0
  %1049 = vmatprep.subr.mxu0 0.0
  %1050 = vmatpush1.msra.mxu0 %v1011
  %1051 = vmatprep.subr.mxu0 0.0
  %1052 = vmatpush2.msra.mxu0 0.0
  %1053 = vmatprep.subr.mxu0 0.0
  %1054 = vmatpush2.msra.mxu0 0.0
  %1055 = vmatprep.subr.mxu0 0.0
  %1056 = vmatpush2.msra.mxu0 0.0
  %1057 = vmatprep.subr.mxu0 0.0
  %1058 = vmatpush2.msra.mxu0 0.0
  %1059 = vmatprep.subr.mxu0 0.0
  %1060 = vmatpush2.msra.mxu0 0.0
  %1061 = vmatprep.subr.mxu0 0.0
  %1062 = vmatpush2.msra.mxu0 0.0
  %1063 = vmatprep.subr.mxu0 0.0
  %1064 = vmatpush2.msra.mxu0 0.0
  %1065 = vmatprep.subr.mxu0 0.0
  %1066 = vmatpush2.msra.mxu0 0.0
  %1067 = vmatprep.subr.mxu0 0.0
  %1068 = vmatpush2.msra.mxu0 0.0
  %1069 = vmatprep.subr.mxu0 0.0
  %1070 = vmatpush2.msra.mxu0 0.0
  %1071 = vmatprep.subr.mxu0 0.0
  %1072 = vmatpush2.msra.mxu0 0.0
  %1073 = vmatprep.subr.mxu0 0.0
  %1074 = vmatpush2.msra.mxu0 0.0
  %1075 = vmatprep.subr.mxu0 0.0
  %1076 = vmatpush2.msra.mxu0 0.0
  %1077 = vmatprep.subr.mxu0 0.0
  %1078 = vmatpush2.msra.mxu0 0.0
  %1079 = vmatprep.subr.mxu0 0.0
  %1080 = vmatpush2.msra.mxu0 0.0
  %1081 = vmatprep.subr.mxu0 0.0
  %1082 = vmatpush2.msra.mxu0 0.0
  %1083 = vmatprep.mubr.f32.mxu0 0.0
  %1084 = vmatmul.mubr.f32.gmra.mxu0 %v1017
  %v1085 = vpop.f32.mrf.mxu0
  %v1086 = vadd.f32 %v1014, %v1085
  %v1087 = vpop.f32.mrf.mxu0
  %1088 = vdwg.mxu0
  %1089 = vset.pattern.permute.xlu0 4
  %1090 = vperm.xlu0 %1089, %v18
  %v1091 = vpop.permute.xlu0 %1090
  %v1093 = vmul.f32 %v1086, %v1091
  %v1094 = vrot.slane %v1093, 4
  %v1095 = vadd.f32 %v1093, %v1094
  %v1096 = vrot.slane %v1095, 2
  %v1097 = vadd.f32 %v1095, %v1096
  %v1098 = vrot.slane %v1097, 1
  %v1099 = vadd.f32 %v1097, %v1098
  %1101 = vset.pattern.permute.xlu0 5
  %1102 = vperm.xlu0 %1101, %v19
  %v1103 = vpop.permute.xlu0 %1102
  %v1105 = vadd.f32 %v1099, %v1103
  %v1106 = vlaneseq
  %v1107 = vand.u32 %v1106, 127
  %vm1108 = vcmp.eq.f32.partialorder %v13, 0.0
  %vm1109 = vcmp.ge.s32.totalorder %v1107, 8
  %vm1110 = vmor %vm1108, %vm1109
  %v1111 = vsel %vm1110, -3.4028235e+38, %v1105
  %1112 = vst [vmem:[%s2] sm:$0x1] %v1111
  %vm1113 = vcmask 1040384
  %v1114 = vsel %vm1113, %v1111, -inf
  %1115 = vmax.xlane.f32.xlu0 %v1114
  %v1116 = vpop.xlane.xlu0 %1115
  %v1117 = vsub.f32 %v1111, %v1116
  %v1118 = vmul.f32 %v1117, 1.442695
  %v1119 = vpow.pop %v1118
  %v1120 = vsel %vm1113, %v1119, 0.0
  %1121 = vadd.xlane.f32.xlu0 %v1120
  %v1122 = vpop.xlane.xlu0 %1121
  %v1123 = vrcp.pop %v1122
  %v1124 = vmul.f32 %v1119, %v1123
  %1125 = vst [vmem:[%s3] sm:$0x1] %v1124
  // Predicated region
  $region10: #{net_forward.2} parent=0 // pred_check
    _
  $region11: #{net_forward.2} parent=0 // pred_check_branch
    %1127 = sbr.rel (0) target = $region13
  $region12: #{net_forward.2} parent=0 // pred_region
    _
  $region13: #{net_forward.2} parent=0 // pred_fallthru
    _
  // Predicated region
  $region14: #{net_forward.2} parent=0 // pred_check
    _
  $region15: #{net_forward.2} parent=0 // pred_check_branch
    %1129 = sbr.rel (0) target = $region17
  $region16: #{net_forward.2} parent=0 // pred_region
    _
  $region17: #{net_forward.2} parent=0 // pred_fallthru
    _
  // Predicated region
  $region18: #{net_forward.2} parent=0 // pred_check
    _
  $region19: #{net_forward.2} parent=0 // pred_check_branch
    %1131 = sbr.rel (0) target = $region21
  $region20: #{net_forward.2} parent=0 // pred_region
    _
  $region21: #{net_forward.2} parent=0 // pred_fallthru
    _
  // Predicated region
  $region22: #{net_forward.2} parent=0 // pred_check
    _
  $region23: #{net_forward.2} parent=0 // pred_check_branch
    %1133 = sbr.rel (0) target = $region25
  $region24: #{net_forward.2} parent=0 // pred_region
    _
  $region25: #{net_forward.2} parent=0 // pred_fallthru
    _

// kernel: net_forward.3
$region0: #{net_forward.3}
  #allocation0 [shape = 'u32[]', space=smem, size = 0x4, offset = 0x4, fixed_abs, tag = 'smem constant byte address 0x4 - core index']
  #allocation1 [shape = 'u32[144,128]{1,0:T(1,128)}', space=vmem, size = 0x12000, scoped, tag = 'internal scratch']
  #allocation2 [shape = 's32[1]{0:T(128)S(6)}', space=smem, size = 0x200, scoped, tag = 'scoped memory for net_forward.3']
  %s0 = inlined_call_operand.vmem [shape: f32[8,128], index: 0, kind: input, shape index: {}]
  %s1 = inlined_call_operand.vmem [shape: f32[40,8], index: 1, kind: input, shape index: {}]
  %s2 = inlined_call_operand.vmem [shape: f32[512,1], index: 2, kind: input, shape index: {}]
  %s3 = inlined_call_operand.<no memory space> [shape: s32[1], index: 3, kind: input, shape index: {}]
  %s4 = inlined_call_operand.vmem [shape: f32[1,128], index: 4, kind: output, shape index: {0}]
  %s5 = inlined_call_operand.vmem [shape: f32[512,512], index: 5, kind: output, shape index: {1}]
  %6 = xla_tuple %s4, %s5
  %s7 = sld [smem:[#allocation0]]
  $region34: #{net_forward.3} parent=0
    _
  %s9 = ssub.s32 1, %s7
  %s10 = scalar_select 0, %s9, %s7
  %11 = sst [smem:[#allocation2]] %s3
  // Predicated region
  $region2: #{net_forward.3} parent=0 // pred_check
    _
  $region3: #{net_forward.3} parent=0 // pred_check_branch
    %13 = sbr.rel (0) target = $region5
  $region4: #{net_forward.3} parent=0 // pred_region
    _
  $region5: #{net_forward.3} parent=0 // pred_fallthru
    _
  // Predicated region
  $region6: #{net_forward.3} parent=0 // pred_check
    _
  $region7: #{net_forward.3} parent=0 // pred_check_branch
    %15 = sbr.rel (0) target = $region9
  $region8: #{net_forward.3} parent=0 // pred_region
    _
  $region9: #{net_forward.3} parent=0 // pred_fallthru
    _
  // Predicated region
  $region10: #{net_forward.3} parent=0 // pred_check
    _
  $region11: #{net_forward.3} parent=0 // pred_check_branch
    %17 = sbr.rel (0) target = $region13
  $region12: #{net_forward.3} parent=0 // pred_region
    _
  $region13: #{net_forward.3} parent=0 // pred_fallthru
    _
  // Predicated region
  $region14: #{net_forward.3} parent=0 // pred_check
    _
  $region15: #{net_forward.3} parent=0 // pred_check_branch
    %19 = sbr.rel (0) target = $region17
  $region16: #{net_forward.3} parent=0 // pred_region
    _
  $region17: #{net_forward.3} parent=0 // pred_fallthru
    _
  %v20 = vld [vmem:[%s0] sm:$0xff]
  %s21 = sld [smem:[#allocation2]]
  %v22 = vlaneseq
  %v23 = vand.u32 %v22, 127
  %v24 = vstv %s21
  %vm25 = vcmp.eq.s32.totalorder %v23, %v24
  %v26 = vsel %vm25, 1, 0
  %v27 = vcvt.s32.f32 %v26
  %v28 = vmul.f32 %v20, %v27
  %29 = vadd.xlane.f32.xlu0 %v28
  %v30 = vpop.xlane.xlu0 %29
  %v31 = vadd.f32 %v20, %v30
  %v32 = vld [vmem:[%s1] sm:$0xff]
  %v33 = vld [vmem:[%s1 + $0x8] sm:$0xff]
  %v34 = vld [vmem:[%s1 + $0x10] sm:$0xff]
  %v35 = vld [vmem:[%s1 + $0x18] sm:$0xff]
  %v36 = vld [vmem:[%s1 + $0x20] sm:$0xff]
  %v37 = vld [vmem:[%s1 + $0x20] sm:$0x1]
  %39 = vset.pattern.permute.xlu0 0
  %40 = vperm.xlu0 %39, %v36
  %v41 = vpop.permute.xlu0 %40
  %vm43 = vcmask 64512
  %v45 = vsel %vm43, %v32, 0
  %47 = vmatprep.subr.mxu0 0.0
  %48 = vmatpush1.msra.mxu0 0.0
  %49 = vmatprep.subr.mxu0 0.0
  %50 = vmatpush1.msra.mxu0 0.0
  %51 = vmatprep.subr.mxu0 0.0
  %52 = vmatpush1.msra.mxu0 0.0
  %53 = vmatprep.subr.mxu0 0.0
  %54 = vmatpush1.msra.mxu0 0.0
  %55 = vmatprep.subr.mxu0 0.0
  %56 = vmatpush1.msra.mxu0 0.0
  %57 = vmatprep.subr.mxu0 0.0
  %58 = vmatpush1.msra.mxu0 0.0
  %59 = vmatprep.subr.mxu0 0.0
  %60 = vmatpush1.msra.mxu0 0.0
  %61 = vmatprep.subr.mxu0 0.0
  %62 = vmatpush1.msra.mxu0 0.0
  %63 = vmatprep.subr.mxu0 0.0
  %64 = vmatpush1.msra.mxu0 0.0
  %65 = vmatprep.subr.mxu0 0.0
  %66 = vmatpush1.msra.mxu0 0.0
  %67 = vmatprep.subr.mxu0 0.0
  %68 = vmatpush1.msra.mxu0 0.0
  %69 = vmatprep.subr.mxu0 0.0
  %70 = vmatpush1.msra.mxu0 0.0
  %71 = vmatprep.subr.mxu0 0.0
  %72 = vmatpush1.msra.mxu0 0.0
  %73 = vmatprep.subr.mxu0 0.0
  %74 = vmatpush1.msra.mxu0 0.0
  %75 = vmatprep.subr.mxu0 0.0
  %76 = vmatpush1.msra.mxu0 0.0
  %77 = vmatprep.subr.mxu0 0.0
  %78 = vmatpush1.msra.mxu0 %v31
  %79 = vmatprep.subr.mxu0 0.0
  %80 = vmatpush2.msra.mxu0 0.0
  %81 = vmatprep.subr.mxu0 0.0
  %82 = vmatpush2.msra.mxu0 0.0
  %83 = vmatprep.subr.mxu0 0.0
  %84 = vmatpush2.msra.mxu0 0.0
  %85 = vmatprep.subr.mxu0 0.0
  %86 = vmatpush2.msra.mxu0 0.0
  %87 = vmatprep.subr.mxu0 0.0
  %88 = vmatpush2.msra.mxu0 0.0
  %89 = vmatprep.subr.mxu0 0.0
  %90 = vmatpush2.msra.mxu0 0.0
  %91 = vmatprep.subr.mxu0 0.0
  %92 = vmatpush2.msra.mxu0 0.0
  %93 = vmatprep.subr.mxu0 0.0
  %94 = vmatpush2.msra.mxu0 0.0
  %95 = vmatprep.subr.mxu0 0.0
  %96 = vmatpush2.msra.mxu0 0.0
  %97 = vmatprep.subr.mxu0 0.0
  %98 = vmatpush2.msra.mxu0 0.0
  %99 = vmatprep.subr.mxu0 0.0
  %100 = vmatpush2.msra.mxu0 0.0
  %101 = vmatprep.subr.mxu0 0.0
  %102 = vmatpush2.msra.mxu0 0.0
  %103 = vmatprep.subr.mxu0 0.0
  %104 = vmatpush2.msra.mxu0 0.0
  %105 = vmatprep.subr.mxu0 0.0
  %106 = vmatpush2.msra.mxu0 0.0
  %107 = vmatprep.subr.mxu0 0.0
  %108 = vmatpush2.msra.mxu0 0.0
  %109 = vmatprep.subr.mxu0 0.0
  %110 = vmatpush2.msra.mxu0 0.0
  %111 = vmatprep.mubr.f32.mxu0 0.0
  %112 = vmatmul.mubr.f32.gmra.mxu0 %v45
  %v113 = vpop.f32.mrf.mxu0
  %v114 = vadd.f32 %v41, %v113
  %v115 = vpop.f32.mrf.mxu0
  %116 = vdwg.mxu0
  %117 = vset.pattern.permute.xlu0 1
  %118 = vperm.xlu0 %117, %v36
  %v119 = vpop.permute.xlu0 %118
  %v122 = vsel %vm43, %v33, 0
  %124 = vmatprep.subr.mxu0 0.0
  %125 = vmatpush1.msra.mxu0 0.0
  %126 = vmatprep.subr.mxu0 0.0
  %127 = vmatpush1.msra.mxu0 0.0
  %128 = vmatprep.subr.mxu0 0.0
  %129 = vmatpush1.msra.mxu0 0.0
  %130 = vmatprep.subr.mxu0 0.0
  %131 = vmatpush1.msra.mxu0 0.0
  %132 = vmatprep.subr.mxu0 0.0
  %133 = vmatpush1.msra.mxu0 0.0
  %134 = vmatprep.subr.mxu0 0.0
  %135 = vmatpush1.msra.mxu0 0.0
  %136 = vmatprep.subr.mxu0 0.0
  %137 = vmatpush1.msra.mxu0 0.0
  %138 = vmatprep.subr.mxu0 0.0
  %139 = vmatpush1.msra.mxu0 0.0
  %140 = vmatprep.subr.mxu0 0.0
  %141 = vmatpush1.msra.mxu0 0.0
  %142 = vmatprep.subr.mxu0 0.0
  %143 = vmatpush1.msra.mxu0 0.0
  %144 = vmatprep.subr.mxu0 0.0
  %145 = vmatpush1.msra.mxu0 0.0
  %146 = vmatprep.subr.mxu0 0.0
  %147 = vmatpush1.msra.mxu0 0.0
  %148 = vmatprep.subr.mxu0 0.0
  %149 = vmatpush1.msra.mxu0 0.0
  %150 = vmatprep.subr.mxu0 0.0
  %151 = vmatpush1.msra.mxu0 0.0
  %152 = vmatprep.subr.mxu0 0.0
  %153 = vmatpush1.msra.mxu0 0.0
  %154 = vmatprep.subr.mxu0 0.0
  %155 = vmatpush1.msra.mxu0 %v20
  %156 = vmatprep.subr.mxu0 0.0
  %157 = vmatpush2.msra.mxu0 0.0
  %158 = vmatprep.subr.mxu0 0.0
  %159 = vmatpush2.msra.mxu0 0.0
  %160 = vmatprep.subr.mxu0 0.0
  %161 = vmatpush2.msra.mxu0 0.0
  %162 = vmatprep.subr.mxu0 0.0
  %163 = vmatpush2.msra.mxu0 0.0
  %164 = vmatprep.subr.mxu0 0.0
  %165 = vmatpush2.msra.mxu0 0.0
  %166 = vmatprep.subr.mxu0 0.0
  %167 = vmatpush2.msra.mxu0 0.0
  %168 = vmatprep.subr.mxu0 0.0
  %169 = vmatpush2.msra.mxu0 0.0
  %170 = vmatprep.subr.mxu0 0.0
  %171 = vmatpush2.msra.mxu0 0.0
  %172 = vmatprep.subr.mxu0 0.0
  %173 = vmatpush2.msra.mxu0 0.0
  %174 = vmatprep.subr.mxu0 0.0
  %175 = vmatpush2.msra.mxu0 0.0
  %176 = vmatprep.subr.mxu0 0.0
  %177 = vmatpush2.msra.mxu0 0.0
  %178 = vmatprep.subr.mxu0 0.0
  %179 = vmatpush2.msra.mxu0 0.0
  %180 = vmatprep.subr.mxu0 0.0
  %181 = vmatpush2.msra.mxu0 0.0
  %182 = vmatprep.subr.mxu0 0.0
  %183 = vmatpush2.msra.mxu0 0.0
  %184 = vmatprep.subr.mxu0 0.0
  %185 = vmatpush2.msra.mxu0 0.0
  %186 = vmatprep.subr.mxu0 0.0
  %187 = vmatpush2.msra.mxu0 0.0
  %188 = vmatprep.mubr.f32.mxu0 0.0
  %189 = vmatmul.mubr.f32.gmra.mxu0 %v122
  %v190 = vpop.f32.mrf.mxu0
  %v191 = vadd.f32 %v119, %v190
  %v192 = vpop.f32.mrf.mxu0
  %193 = vdwg.mxu0
  %194 = vset.pattern.permute.xlu0 2
  %195 = vperm.xlu0 %194, %v36
  %v196 = vpop.permute.xlu0 %195
  %v199 = vsel %vm43, %v34, 0
  %201 = vmatprep.subr.mxu0 0.0
  %202 = vmatpush1.msra.mxu0 0.0
  %203 = vmatprep.subr.mxu0 0.0
  %204 = vmatpush1.msra.mxu0 0.0
  %205 = vmatprep.subr.mxu0 0.0
  %206 = vmatpush1.msra.mxu0 0.0
  %207 = vmatprep.subr.mxu0 0.0
  %208 = vmatpush1.msra.mxu0 0.0
  %209 = vmatprep.subr.mxu0 0.0
  %210 = vmatpush1.msra.mxu0 0.0
  %211 = vmatprep.subr.mxu0 0.0
  %212 = vmatpush1.msra.mxu0 0.0
  %213 = vmatprep.subr.mxu0 0.0
  %214 = vmatpush1.msra.mxu0 0.0
  %215 = vmatprep.subr.mxu0 0.0
  %216 = vmatpush1.msra.mxu0 0.0
  %217 = vmatprep.subr.mxu0 0.0
  %218 = vmatpush1.msra.mxu0 0.0
  %219 = vmatprep.subr.mxu0 0.0
  %220 = vmatpush1.msra.mxu0 0.0
  %221 = vmatprep.subr.mxu0 0.0
  %222 = vmatpush1.msra.mxu0 0.0
  %223 = vmatprep.subr.mxu0 0.0
  %224 = vmatpush1.msra.mxu0 0.0
  %225 = vmatprep.subr.mxu0 0.0
  %226 = vmatpush1.msra.mxu0 0.0
  %227 = vmatprep.subr.mxu0 0.0
  %228 = vmatpush1.msra.mxu0 0.0
  %229 = vmatprep.subr.mxu0 0.0
  %230 = vmatpush1.msra.mxu0 0.0
  %231 = vmatprep.subr.mxu0 0.0
  %232 = vmatpush1.msra.mxu0 %v20
  %233 = vmatprep.subr.mxu0 0.0
  %234 = vmatpush2.msra.mxu0 0.0
  %235 = vmatprep.subr.mxu0 0.0
  %236 = vmatpush2.msra.mxu0 0.0
  %237 = vmatprep.subr.mxu0 0.0
  %238 = vmatpush2.msra.mxu0 0.0
  %239 = vmatprep.subr.mxu0 0.0
  %240 = vmatpush2.msra.mxu0 0.0
  %241 = vmatprep.subr.mxu0 0.0
  %242 = vmatpush2.msra.mxu0 0.0
  %243 = vmatprep.subr.mxu0 0.0
  %244 = vmatpush2.msra.mxu0 0.0
  %245 = vmatprep.subr.mxu0 0.0
  %246 = vmatpush2.msra.mxu0 0.0
  %247 = vmatprep.subr.mxu0 0.0
  %248 = vmatpush2.msra.mxu0 0.0
  %249 = vmatprep.subr.mxu0 0.0
  %250 = vmatpush2.msra.mxu0 0.0
  %251 = vmatprep.subr.mxu0 0.0
  %252 = vmatpush2.msra.mxu0 0.0
  %253 = vmatprep.subr.mxu0 0.0
  %254 = vmatpush2.msra.mxu0 0.0
  %255 = vmatprep.subr.mxu0 0.0
  %256 = vmatpush2.msra.mxu0 0.0
  %257 = vmatprep.subr.mxu0 0.0
  %258 = vmatpush2.msra.mxu0 0.0
  %259 = vmatprep.subr.mxu0 0.0
  %260 = vmatpush2.msra.mxu0 0.0
  %261 = vmatprep.subr.mxu0 0.0
  %262 = vmatpush2.msra.mxu0 0.0
  %263 = vmatprep.subr.mxu0 0.0
  %264 = vmatpush2.msra.mxu0 0.0
  %265 = vmatprep.mubr.f32.mxu0 0.0
  %266 = vmatmul.mubr.f32.gmra.mxu0 %v199
  %v267 = vpop.f32.mrf.mxu0
  %v268 = vadd.f32 %v196, %v267
  %v269 = vpop.f32.mrf.mxu0
  %270 = vdwg.mxu0
  %v271 = vlaneseq
  %v272 = vshrl.u32 %v271, 7
  %v273 = vadd.s32 %v272, 8
  %v274 = vadd.s32 %v272, 16
  %v275 = vadd.s32 %v272, 24
  %v276 = vadd.s32 %v272, 32
  %v277 = vadd.s32 %v272, 40
  %v278 = vadd.s32 %v272, 48
  %v279 = vadd.s32 %v272, 56
  %v280 = vadd.s32 %v272, 64
  %v281 = vadd.s32 %v272, 72
  %v282 = vadd.s32 %v272, 80
  %v283 = vadd.s32 %v272, 88
  %v284 = vadd.s32 %v272, 96
  %v285 = vadd.s32 %v272, 104
  %v286 = vadd.s32 %v272, 112
  %v287 = vadd.s32 %v272, 120
  %vm288 = vcmp.ge.s32.totalorder %v272, 8
  %vm289 = vcmp.ge.s32.totalorder %v273, 8
  %vm290 = vcmp.ge.s32.totalorder %v274, 8
  %vm291 = vcmp.ge.s32.totalorder %v275, 8
  %vm292 = vcmp.ge.s32.totalorder %v276, 8
  %vm293 = vcmp.ge.s32.totalorder %v277, 8
  %vm294 = vcmp.ge.s32.totalorder %v278, 8
  %vm295 = vcmp.ge.s32.totalorder %v279, 8
  %vm296 = vcmp.ge.s32.totalorder %v280, 8
  %vm297 = vcmp.ge.s32.totalorder %v281, 8
  %vm298 = vcmp.ge.s32.totalorder %v282, 8
  %vm299 = vcmp.ge.s32.totalorder %v283, 8
  %vm300 = vcmp.ge.s32.totalorder %v284, 8
  %vm301 = vcmp.ge.s32.totalorder %v285, 8
  %vm302 = vcmp.ge.s32.totalorder %v286, 8
  %vm303 = vcmp.ge.s32.totalorder %v287, 8
  %v304 = vsel %vm288, -1e+30, 0.0
  %v305 = vsel %vm289, -1e+30, 0.0
  %v306 = vsel %vm290, -1e+30, 0.0
  %v307 = vsel %vm291, -1e+30, 0.0
  %v308 = vsel %vm292, -1e+30, 0.0
  %v309 = vsel %vm293, -1e+30, 0.0
  %v310 = vsel %vm294, -1e+30, 0.0
  %v311 = vsel %vm295, -1e+30, 0.0
  %v312 = vsel %vm296, -1e+30, 0.0
  %v313 = vsel %vm297, -1e+30, 0.0
  %v314 = vsel %vm298, -1e+30, 0.0
  %v315 = vsel %vm299, -1e+30, 0.0
  %v316 = vsel %vm300, -1e+30, 0.0
  %v317 = vsel %vm301, -1e+30, 0.0
  %v318 = vsel %vm302, -1e+30, 0.0
  %v319 = vsel %vm303, -1e+30, 0.0
  %vm320 = vcmp.ge.s32.totalorder %v272, 0
  %vm321 = vcmp.lt.s32.totalorder %v272, 3
  %vm322 = vmand %vm320, %vm321
  %v323 = vsel %vm322, 1, 0
  %v324 = vcvt.s32.f32 %v323
  %v325 = vmul.f32 %v114, %v324
  %v326 = vmul.f32 %v268, %v324
  %327 = vxpose.xlu0.b32.start [1/16] %v191, 128
  %328 = vxpose.xlu0.b32.cont [2/16] 0.0, 128
  %329 = vxpose.xlu0.b32.cont [3/16] 0.0, 128
  %330 = vxpose.xlu0.b32.cont [4/16] 0.0, 128
  %331 = vxpose.xlu0.b32.cont [5/16] 0.0, 128
  %332 = vxpose.xlu0.b32.cont [6/16] 0.0, 128
  %333 = vxpose.xlu0.b32.cont [7/16] 0.0, 128
  %334 = vxpose.xlu0.b32.cont [8/16] 0.0, 128
  %335 = vxpose.xlu0.b32.cont [9/16] 0.0, 128
  %336 = vxpose.xlu0.b32.cont [10/16] 0.0, 128
  %337 = vxpose.xlu0.b32.cont [11/16] 0.0, 128
  %338 = vxpose.xlu0.b32.cont [12/16] 0.0, 128
  %339 = vxpose.xlu0.b32.cont [13/16] 0.0, 128
  %340 = vxpose.xlu0.b32.cont [14/16] 0.0, 128
  %341 = vxpose.xlu0.b32.cont [15/16] 0.0, 128
  %342 = vxpose.xlu0.b32.end [16/16] 0.0, 128
  %v343 = vpop.trf.xlu0
  %v344 = vpop.trf.xlu0
  %v345 = vpop.trf.xlu0
  %v346 = vpop.trf.xlu0
  %v347 = vpop.trf.xlu0
  %v348 = vpop.trf.xlu0
  %v349 = vpop.trf.xlu0
  %v350 = vpop.trf.xlu0
  %v351 = vpop.trf.xlu0
  %v352 = vpop.trf.xlu0
  %v353 = vpop.trf.xlu0
  %v354 = vpop.trf.xlu0
  %v355 = vpop.trf.xlu0
  %v356 = vpop.trf.xlu0
  %v357 = vpop.trf.xlu0
  %v358 = vpop.trf.xlu0
  %v360 = vsel %vm43, %v343, 0
  %v363 = vsel %vm43, %v344, 0
  %v366 = vsel %vm43, %v345, 0
  %v369 = vsel %vm43, %v346, 0
  %v372 = vsel %vm43, %v347, 0
  %v375 = vsel %vm43, %v348, 0
  %v378 = vsel %vm43, %v349, 0
  %v381 = vsel %vm43, %v350, 0
  %v384 = vsel %vm43, %v351, 0
  %v387 = vsel %vm43, %v352, 0
  %v390 = vsel %vm43, %v353, 0
  %v393 = vsel %vm43, %v354, 0
  %v396 = vsel %vm43, %v355, 0
  %v399 = vsel %vm43, %v356, 0
  %v402 = vsel %vm43, %v357, 0
  %v405 = vsel %vm43, %v358, 0
  %407 = vmatprep.subr.mxu0 0.0
  %408 = vmatpush1.msra.mxu0 0.0
  %409 = vmatprep.subr.mxu0 0.0
  %410 = vmatpush1.msra.mxu0 0.0
  %411 = vmatprep.subr.mxu0 0.0
  %412 = vmatpush1.msra.mxu0 0.0
  %413 = vmatprep.subr.mxu0 0.0
  %414 = vmatpush1.msra.mxu0 0.0
  %415 = vmatprep.subr.mxu0 0.0
  %416 = vmatpush1.msra.mxu0 0.0
  %417 = vmatprep.subr.mxu0 0.0
  %418 = vmatpush1.msra.mxu0 0.0
  %419 = vmatprep.subr.mxu0 0.0
  %420 = vmatpush1.msra.mxu0 0.0
  %421 = vmatprep.subr.mxu0 0.0
  %422 = vmatpush1.msra.mxu0 0.0
  %423 = vmatprep.subr.mxu0 0.0
  %424 = vmatpush1.msra.mxu0 0.0
  %425 = vmatprep.subr.mxu0 0.0
  %426 = vmatpush1.msra.mxu0 0.0
  %427 = vmatprep.subr.mxu0 0.0
  %428 = vmatpush1.msra.mxu0 0.0
  %429 = vmatprep.subr.mxu0 0.0
  %430 = vmatpush1.msra.mxu0 0.0
  %431 = vmatprep.subr.mxu0 0.0
  %432 = vmatpush1.msra.mxu0 0.0
  %433 = vmatprep.subr.mxu0 0.0
  %434 = vmatpush1.msra.mxu0 0.0
  %435 = vmatprep.subr.mxu0 0.0
  %436 = vmatpush1.msra.mxu0 0.0
  %437 = vmatprep.subr.mxu0 0.0
  %438 = vmatpush1.msra.mxu0 %v325
  %439 = vmatprep.subr.mxu0 0.0
  %440 = vmatpush2.msra.mxu0 0.0
  %441 = vmatprep.subr.mxu0 0.0
  %442 = vmatpush2.msra.mxu0 0.0
  %443 = vmatprep.subr.mxu0 0.0
  %444 = vmatpush2.msra.mxu0 0.0
  %445 = vmatprep.subr.mxu0 0.0
  %446 = vmatpush2.msra.mxu0 0.0
  %447 = vmatprep.subr.mxu0 0.0
  %448 = vmatpush2.msra.mxu0 0.0
  %449 = vmatprep.subr.mxu0 0.0
  %450 = vmatpush2.msra.mxu0 0.0
  %451 = vmatprep.subr.mxu0 0.0
  %452 = vmatpush2.msra.mxu0 0.0
  %453 = vmatprep.subr.mxu0 0.0
  %454 = vmatpush2.msra.mxu0 0.0
  %455 = vmatprep.subr.mxu0 0.0
  %456 = vmatpush2.msra.mxu0 0.0
  %457 = vmatprep.subr.mxu0 0.0
  %458 = vmatpush2.msra.mxu0 0.0
  %459 = vmatprep.subr.mxu0 0.0
  %460 = vmatpush2.msra.mxu0 0.0
  %461 = vmatprep.subr.mxu0 0.0
  %462 = vmatpush2.msra.mxu0 0.0
  %463 = vmatprep.subr.mxu0 0.0
  %464 = vmatpush2.msra.mxu0 0.0
  %465 = vmatprep.subr.mxu0 0.0
  %466 = vmatpush2.msra.mxu0 0.0
  %467 = vmatprep.subr.mxu0 0.0
  %468 = vmatpush2.msra.mxu0 0.0
  %469 = vmatprep.subr.mxu0 0.0
  %470 = vmatpush2.msra.mxu0 0.0
  %471 = vmatprep.mubr.f32.mxu0 0.0
  %472 = vmatmul.mubr.f32.gmra.mxu0 %v360
  %v473 = vpop.f32.mrf.mxu0
  %v474 = vadd.f32 %v304, %v473
  %v475 = vpop.f32.mrf.mxu0
  %476 = vmatprep.mubr.f32.mxu0 0.0
  %477 = vmatmul.mubr.f32.gmra.mxu0 %v363
  %v478 = vpop.f32.mrf.mxu0
  %v479 = vadd.f32 %v305, %v478
  %v480 = vpop.f32.mrf.mxu0
  %481 = vmatprep.mubr.f32.mxu0 0.0
  %482 = vmatmul.mubr.f32.gmra.mxu0 %v366
  %v483 = vpop.f32.mrf.mxu0
  %v484 = vadd.f32 %v306, %v483
  %v485 = vpop.f32.mrf.mxu0
  %486 = vmatprep.mubr.f32.mxu0 0.0
  %487 = vmatmul.mubr.f32.gmra.mxu0 %v369
  %v488 = vpop.f32.mrf.mxu0
  %v489 = vadd.f32 %v307, %v488
  %v490 = vpop.f32.mrf.mxu0
  %491 = vmatprep.mubr.f32.mxu0 0.0
  %492 = vmatmul.mubr.f32.gmra.mxu0 %v372
  %v493 = vpop.f32.mrf.mxu0
  %v494 = vadd.f32 %v308, %v493
  %v495 = vpop.f32.mrf.mxu0
  %496 = vmatprep.mubr.f32.mxu0 0.0
  %497 = vmatmul.mubr.f32.gmra.mxu0 %v375
  %v498 = vpop.f32.mrf.mxu0
  %v499 = vadd.f32 %v309, %v498
  %v500 = vpop.f32.mrf.mxu0
  %501 = vmatprep.mubr.f32.mxu0 0.0
  %502 = vmatmul.mubr.f32.gmra.mxu0 %v378
  %v503 = vpop.f32.mrf.mxu0
  %v504 = vadd.f32 %v310, %v503
  %v505 = vpop.f32.mrf.mxu0
  %506 = vmatprep.mubr.f32.mxu0 0.0
  %507 = vmatmul.mubr.f32.gmra.mxu0 %v381
  %v508 = vpop.f32.mrf.mxu0
  %v509 = vadd.f32 %v311, %v508
  %v510 = vpop.f32.mrf.mxu0
  %511 = vmatprep.mubr.f32.mxu0 0.0
  %512 = vmatmul.mubr.f32.gmra.mxu0 %v384
  %v513 = vpop.f32.mrf.mxu0
  %v514 = vadd.f32 %v312, %v513
  %v515 = vpop.f32.mrf.mxu0
  %516 = vmatprep.mubr.f32.mxu0 0.0
  %517 = vmatmul.mubr.f32.gmra.mxu0 %v387
  %v518 = vpop.f32.mrf.mxu0
  %v519 = vadd.f32 %v313, %v518
  %v520 = vpop.f32.mrf.mxu0
  %521 = vmatprep.mubr.f32.mxu0 0.0
  %522 = vmatmul.mubr.f32.gmra.mxu0 %v390
  %v523 = vpop.f32.mrf.mxu0
  %v524 = vadd.f32 %v314, %v523
  %v525 = vpop.f32.mrf.mxu0
  %526 = vmatprep.mubr.f32.mxu0 0.0
  %527 = vmatmul.mubr.f32.gmra.mxu0 %v393
  %v528 = vpop.f32.mrf.mxu0
  %v529 = vadd.f32 %v315, %v528
  %v530 = vpop.f32.mrf.mxu0
  %531 = vmatprep.mubr.f32.mxu0 0.0
  %532 = vmatmul.mubr.f32.gmra.mxu0 %v396
  %v533 = vpop.f32.mrf.mxu0
  %v534 = vadd.f32 %v316, %v533
  %v535 = vpop.f32.mrf.mxu0
  %536 = vmatprep.mubr.f32.mxu0 0.0
  %537 = vmatmul.mubr.f32.gmra.mxu0 %v399
  %v538 = vpop.f32.mrf.mxu0
  %v539 = vadd.f32 %v317, %v538
  %v540 = vpop.f32.mrf.mxu0
  %541 = vmatprep.mubr.f32.mxu0 0.0
  %542 = vmatmul.mubr.f32.gmra.mxu0 %v402
  %v543 = vpop.f32.mrf.mxu0
  %v544 = vadd.f32 %v318, %v543
  %v545 = vpop.f32.mrf.mxu0
  %546 = vmatprep.mubr.f32.mxu0 0.0
  %547 = vmatmul.mubr.f32.gmra.mxu0 %v405
  %v548 = vpop.f32.mrf.mxu0
  %v549 = vadd.f32 %v319, %v548
  %v550 = vpop.f32.mrf.mxu0
  %551 = vdwg.mxu0
  %v552 = vmax.f32 %v474, %v494
  %v553 = vmax.f32 %v479, %v499
  %v554 = vmax.f32 %v484, %v504
  %v555 = vmax.f32 %v489, %v509
  %v556 = vmax.f32 %v552, %v514
  %v557 = vmax.f32 %v553, %v519
  %v558 = vmax.f32 %v554, %v524
  %v559 = vmax.f32 %v555, %v529
  %v560 = vmax.f32 %v556, %v534
  %v561 = vmax.f32 %v557, %v539
  %v562 = vmax.f32 %v558, %v544
  %v563 = vmax.f32 %v559, %v549
  %v564 = vmax.f32 %v560, %v561
  %v565 = vmax.f32 %v562, %v563
  %v566 = vmax.f32 %v564, %v565
  %v567 = vrot.slane %v566, 4
  %v568 = vmax.f32 %v566, %v567
  %v569 = vrot.slane %v568, 2
  %v570 = vmax.f32 %v568, %v569
  %v571 = vrot.slane %v570, 1
  %v572 = vmax.f32 %v570, %v571
  %v573 = vsub.f32 %v474, %v572
  %v574 = vsub.f32 %v479, %v572
  %v575 = vsub.f32 %v484, %v572
  %v576 = vsub.f32 %v489, %v572
  %v577 = vsub.f32 %v494, %v572
  %v578 = vsub.f32 %v499, %v572
  %v579 = vsub.f32 %v504, %v572
  %v580 = vsub.f32 %v509, %v572
  %v581 = vsub.f32 %v514, %v572
  %v582 = vsub.f32 %v519, %v572
  %v583 = vsub.f32 %v524, %v572
  %v584 = vsub.f32 %v529, %v572
  %v585 = vsub.f32 %v534, %v572
  %v586 = vsub.f32 %v539, %v572
  %v587 = vsub.f32 %v544, %v572
  %v588 = vsub.f32 %v549, %v572
  %v589 = vmul.f32 %v573, 1.442695
  %v590 = vpow.pop %v589
  %v591 = vmul.f32 %v574, 1.442695
  %v592 = vpow.pop %v591
  %v593 = vmul.f32 %v575, 1.442695
  %v594 = vpow.pop %v593
  %v595 = vmul.f32 %v576, 1.442695
  %v596 = vpow.pop %v595
  %v597 = vmul.f32 %v577, 1.442695
  %v598 = vpow.pop %v597
  %v599 = vmul.f32 %v578, 1.442695
  %v600 = vpow.pop %v599
  %v601 = vmul.f32 %v579, 1.442695
  %v602 = vpow.pop %v601
  %v603 = vmul.f32 %v580, 1.442695
  %v604 = vpow.pop %v603
  %v605 = vmul.f32 %v581, 1.442695
  %v606 = vpow.pop %v605
  %v607 = vmul.f32 %v582, 1.442695
  %v608 = vpow.pop %v607
  %v609 = vmul.f32 %v583, 1.442695
  %v610 = vpow.pop %v609
  %v611 = vmul.f32 %v584, 1.442695
  %v612 = vpow.pop %v611
  %v613 = vmul.f32 %v585, 1.442695
  %v614 = vpow.pop %v613
  %v615 = vmul.f32 %v586, 1.442695
  %v616 = vpow.pop %v615
  %v617 = vmul.f32 %v587, 1.442695
  %v618 = vpow.pop %v617
  %v619 = vmul.f32 %v588, 1.442695
  %v620 = vpow.pop %v619
  %v621 = vadd.f32 %v590, %v592
  %v622 = vadd.f32 %v621, %v594
  %v623 = vadd.f32 %v622, %v596
  %v624 = vadd.f32 %v623, %v598
  %v625 = vadd.f32 %v624, %v600
  %v626 = vadd.f32 %v625, %v602
  %v627 = vadd.f32 %v626, %v604
  %v628 = vadd.f32 %v627, %v606
  %v629 = vadd.f32 %v628, %v608
  %v630 = vadd.f32 %v629, %v610
  %v631 = vadd.f32 %v630, %v612
  %v632 = vadd.f32 %v631, %v614
  %v633 = vadd.f32 %v632, %v616
  %v634 = vadd.f32 %v633, %v618
  %v635 = vadd.f32 %v634, %v620
  %v636 = vrot.slane %v635, 4
  %v637 = vadd.f32 %v635, %v636
  %v638 = vrot.slane %v637, 2
  %v639 = vadd.f32 %v637, %v638
  %v640 = vrot.slane %v639, 1
  %v641 = vadd.f32 %v639, %v640
  %642 = vmatprep.subr.mxu0 0.0
  %643 = vmatpush1.msra.mxu0 %v620
  %644 = vmatprep.subr.mxu0 0.0
  %645 = vmatpush1.msra.mxu0 %v618
  %646 = vmatprep.subr.mxu0 0.0
  %647 = vmatpush1.msra.mxu0 %v616
  %648 = vmatprep.subr.mxu0 0.0
  %649 = vmatpush1.msra.mxu0 %v614
  %650 = vmatprep.subr.mxu0 0.0
  %651 = vmatpush1.msra.mxu0 %v612
  %652 = vmatprep.subr.mxu0 0.0
  %653 = vmatpush1.msra.mxu0 %v610
  %654 = vmatprep.subr.mxu0 0.0
  %655 = vmatpush1.msra.mxu0 %v608
  %656 = vmatprep.subr.mxu0 0.0
  %657 = vmatpush1.msra.mxu0 %v606
  %658 = vmatprep.subr.mxu0 0.0
  %659 = vmatpush1.msra.mxu0 %v604
  %660 = vmatprep.subr.mxu0 0.0
  %661 = vmatpush1.msra.mxu0 %v602
  %662 = vmatprep.subr.mxu0 0.0
  %663 = vmatpush1.msra.mxu0 %v600
  %664 = vmatprep.subr.mxu0 0.0
  %665 = vmatpush1.msra.mxu0 %v598
  %666 = vmatprep.subr.mxu0 0.0
  %667 = vmatpush1.msra.mxu0 %v596
  %668 = vmatprep.subr.mxu0 0.0
  %669 = vmatpush1.msra.mxu0 %v594
  %670 = vmatprep.subr.mxu0 0.0
  %671 = vmatpush1.msra.mxu0 %v592
  %672 = vmatprep.subr.mxu0 0.0
  %673 = vmatpush1.msra.mxu0 %v590
  %674 = vmatprep.subr.mxu0 0.0
  %675 = vmatpush2.msra.mxu0 0.0
  %676 = vmatprep.subr.mxu0 0.0
  %677 = vmatpush2.msra.mxu0 0.0
  %678 = vmatprep.subr.mxu0 0.0
  %679 = vmatpush2.msra.mxu0 0.0
  %680 = vmatprep.subr.mxu0 0.0
  %681 = vmatpush2.msra.mxu0 0.0
  %682 = vmatprep.subr.mxu0 0.0
  %683 = vmatpush2.msra.mxu0 0.0
  %684 = vmatprep.subr.mxu0 0.0
  %685 = vmatpush2.msra.mxu0 0.0
  %686 = vmatprep.subr.mxu0 0.0
  %687 = vmatpush2.msra.mxu0 0.0
  %688 = vmatprep.subr.mxu0 0.0
  %689 = vmatpush2.msra.mxu0 0.0
  %690 = vmatprep.subr.mxu0 0.0
  %691 = vmatpush2.msra.mxu0 0.0
  %692 = vmatprep.subr.mxu0 0.0
  %693 = vmatpush2.msra.mxu0 0.0
  %694 = vmatprep.subr.mxu0 0.0
  %695 = vmatpush2.msra.mxu0 0.0
  %696 = vmatprep.subr.mxu0 0.0
  %697 = vmatpush2.msra.mxu0 0.0
  %698 = vmatprep.subr.mxu0 0.0
  %699 = vmatpush2.msra.mxu0 0.0
  %700 = vmatprep.subr.mxu0 0.0
  %701 = vmatpush2.msra.mxu0 0.0
  %702 = vmatprep.subr.mxu0 0.0
  %703 = vmatpush2.msra.mxu0 0.0
  %704 = vmatprep.subr.mxu0 0.0
  %705 = vmatpush2.msra.mxu0 0.0
  %706 = vmatprep.mubr.f32.mxu0 0.0
  %707 = vmatmul.mubr.f32.gmra.mxu0 %v326
  %v708 = vpop.f32.mrf.mxu0
  %v709 = vadd.f32 0.0, %v708
  %v710 = vpop.f32.mrf.mxu0
  %711 = vdwg.mxu0
  %v712 = vrcp.pop %v641
  %v713 = vmul.f32 %v709, %v712
  %v714 = vadd.f32 %v713, 0.0
  %vm715 = vcmp.ge.s32.totalorder %v272, 3
  %vm716 = vcmp.lt.s32.totalorder %v272, 6
  %vm717 = vmand %vm715, %vm716
  %v718 = vsel %vm717, 1, 0
  %v719 = vcvt.s32.f32 %v718
  %v720 = vmul.f32 %v114, %v719
  %v721 = vmul.f32 %v268, %v719
  %722 = vmatprep.subr.mxu0 0.0
  %723 = vmatpush1.msra.mxu0 0.0
  %724 = vmatprep.subr.mxu0 0.0
  %725 = vmatpush1.msra.mxu0 0.0
  %726 = vmatprep.subr.mxu0 0.0
  %727 = vmatpush1.msra.mxu0 0.0
  %728 = vmatprep.subr.mxu0 0.0
  %729 = vmatpush1.msra.mxu0 0.0
  %730 = vmatprep.subr.mxu0 0.0
  %731 = vmatpush1.msra.mxu0 0.0
  %732 = vmatprep.subr.mxu0 0.0
  %733 = vmatpush1.msra.mxu0 0.0
  %734 = vmatprep.subr.mxu0 0.0
  %735 = vmatpush1.msra.mxu0 0.0
  %736 = vmatprep.subr.mxu0 0.0
  %737 = vmatpush1.msra.mxu0 0.0
  %738 = vmatprep.subr.mxu0 0.0
  %739 = vmatpush1.msra.mxu0 0.0
  %740 = vmatprep.subr.mxu0 0.0
  %741 = vmatpush1.msra.mxu0 0.0
  %742 = vmatprep.subr.mxu0 0.0
  %743 = vmatpush1.msra.mxu0 0.0
  %744 = vmatprep.subr.mxu0 0.0
  %745 = vmatpush1.msra.mxu0 0.0
  %746 = vmatprep.subr.mxu0 0.0
  %747 = vmatpush1.msra.mxu0 0.0
  %748 = vmatprep.subr.mxu0 0.0
  %749 = vmatpush1.msra.mxu0 0.0
  %750 = vmatprep.subr.mxu0 0.0
  %751 = vmatpush1.msra.mxu0 0.0
  %752 = vmatprep.subr.mxu0 0.0
  %753 = vmatpush1.msra.mxu0 %v720
  %754 = vmatprep.subr.mxu0 0.0
  %755 = vmatpush2.msra.mxu0 0.0
  %756 = vmatprep.subr.mxu0 0.0
  %757 = vmatpush2.msra.mxu0 0.0
  %758 = vmatprep.subr.mxu0 0.0
  %759 = vmatpush2.msra.mxu0 0.0
  %760 = vmatprep.subr.mxu0 0.0
  %761 = vmatpush2.msra.mxu0 0.0
  %762 = vmatprep.subr.mxu0 0.0
  %763 = vmatpush2.msra.mxu0 0.0
  %764 = vmatprep.subr.mxu0 0.0
  %765 = vmatpush2.msra.mxu0 0.0
  %766 = vmatprep.subr.mxu0 0.0
  %767 = vmatpush2.msra.mxu0 0.0
  %768 = vmatprep.subr.mxu0 0.0
  %769 = vmatpush2.msra.mxu0 0.0
  %770 = vmatprep.subr.mxu0 0.0
  %771 = vmatpush2.msra.mxu0 0.0
  %772 = vmatprep.subr.mxu0 0.0
  %773 = vmatpush2.msra.mxu0 0.0
  %774 = vmatprep.subr.mxu0 0.0
  %775 = vmatpush2.msra.mxu0 0.0
  %776 = vmatprep.subr.mxu0 0.0
  %777 = vmatpush2.msra.mxu0 0.0
  %778 = vmatprep.subr.mxu0 0.0
  %779 = vmatpush2.msra.mxu0 0.0
  %780 = vmatprep.subr.mxu0 0.0
  %781 = vmatpush2.msra.mxu0 0.0
  %782 = vmatprep.subr.mxu0 0.0
  %783 = vmatpush2.msra.mxu0 0.0
  %784 = vmatprep.subr.mxu0 0.0
  %785 = vmatpush2.msra.mxu0 0.0
  %786 = vmatprep.mubr.f32.mxu0 0.0
  %787 = vmatmul.mubr.f32.gmra.mxu0 %v360
  %v788 = vpop.f32.mrf.mxu0
  %v789 = vadd.f32 %v304, %v788
  %v790 = vpop.f32.mrf.mxu0
  %791 = vmatprep.mubr.f32.mxu0 0.0
  %792 = vmatmul.mubr.f32.gmra.mxu0 %v363
  %v793 = vpop.f32.mrf.mxu0
  %v794 = vadd.f32 %v305, %v793
  %v795 = vpop.f32.mrf.mxu0
  %796 = vmatprep.mubr.f32.mxu0 0.0
  %797 = vmatmul.mubr.f32.gmra.mxu0 %v366
  %v798 = vpop.f32.mrf.mxu0
  %v799 = vadd.f32 %v306, %v798
  %v800 = vpop.f32.mrf.mxu0
  %801 = vmatprep.mubr.f32.mxu0 0.0
  %802 = vmatmul.mubr.f32.gmra.mxu0 %v369
  %v803 = vpop.f32.mrf.mxu0
  %v804 = vadd.f32 %v307, %v803
  %v805 = vpop.f32.mrf.mxu0
  %806 = vmatprep.mubr.f32.mxu0 0.0
  %807 = vmatmul.mubr.f32.gmra.mxu0 %v372
  %v808 = vpop.f32.mrf.mxu0
  %v809 = vadd.f32 %v308, %v808
  %v810 = vpop.f32.mrf.mxu0
  %811 = vmatprep.mubr.f32.mxu0 0.0
  %812 = vmatmul.mubr.f32.gmra.mxu0 %v375
  %v813 = vpop.f32.mrf.mxu0
  %v814 = vadd.f32 %v309, %v813
  %v815 = vpop.f32.mrf.mxu0
  %816 = vmatprep.mubr.f32.mxu0 0.0
  %817 = vmatmul.mubr.f32.gmra.mxu0 %v378
  %v818 = vpop.f32.mrf.mxu0
  %v819 = vadd.f32 %v310, %v818
  %v820 = vpop.f32.mrf.mxu0
  %821 = vmatprep.mubr.f32.mxu0 0.0
  %822 = vmatmul.mubr.f32.gmra.mxu0 %v381
  %v823 = vpop.f32.mrf.mxu0
  %v824 = vadd.f32 %v311, %v823
  %v825 = vpop.f32.mrf.mxu0
  %826 = vmatprep.mubr.f32.mxu0 0.0
  %827 = vmatmul.mubr.f32.gmra.mxu0 %v384
  %v828 = vpop.f32.mrf.mxu0
  %v829 = vadd.f32 %v312, %v828
  %v830 = vpop.f32.mrf.mxu0
  %831 = vmatprep.mubr.f32.mxu0 0.0
  %832 = vmatmul.mubr.f32.gmra.mxu0 %v387
  %v833 = vpop.f32.mrf.mxu0
  %v834 = vadd.f32 %v313, %v833
  %v835 = vpop.f32.mrf.mxu0
  %836 = vmatprep.mubr.f32.mxu0 0.0
  %837 = vmatmul.mubr.f32.gmra.mxu0 %v390
  %v838 = vpop.f32.mrf.mxu0
  %v839 = vadd.f32 %v314, %v838
  %v840 = vpop.f32.mrf.mxu0
  %841 = vmatprep.mubr.f32.mxu0 0.0
  %842 = vmatmul.mubr.f32.gmra.mxu0 %v393
  %v843 = vpop.f32.mrf.mxu0
  %v844 = vadd.f32 %v315, %v843
  %v845 = vpop.f32.mrf.mxu0
  %846 = vmatprep.mubr.f32.mxu0 0.0
  %847 = vmatmul.mubr.f32.gmra.mxu0 %v396
  %v848 = vpop.f32.mrf.mxu0
  %v849 = vadd.f32 %v316, %v848
  %v850 = vpop.f32.mrf.mxu0
  %851 = vmatprep.mubr.f32.mxu0 0.0
  %852 = vmatmul.mubr.f32.gmra.mxu0 %v399
  %v853 = vpop.f32.mrf.mxu0
  %v854 = vadd.f32 %v317, %v853
  %v855 = vpop.f32.mrf.mxu0
  %856 = vmatprep.mubr.f32.mxu0 0.0
  %857 = vmatmul.mubr.f32.gmra.mxu0 %v402
  %v858 = vpop.f32.mrf.mxu0
  %v859 = vadd.f32 %v318, %v858
  %v860 = vpop.f32.mrf.mxu0
  %861 = vmatprep.mubr.f32.mxu0 0.0
  %862 = vmatmul.mubr.f32.gmra.mxu0 %v405
  %v863 = vpop.f32.mrf.mxu0
  %v864 = vadd.f32 %v319, %v863
  %v865 = vpop.f32.mrf.mxu0
  %866 = vdwg.mxu0
  %v867 = vmax.f32 %v789, %v809
  %v868 = vmax.f32 %v794, %v814
  %v869 = vmax.f32 %v799, %v819
  %v870 = vmax.f32 %v804, %v824
  %v871 = vmax.f32 %v867, %v829
  %v872 = vmax.f32 %v868, %v834
  %v873 = vmax.f32 %v869, %v839
  %v874 = vmax.f32 %v870, %v844
  %v875 = vmax.f32 %v871, %v849
  %v876 = vmax.f32 %v872, %v854
  %v877 = vmax.f32 %v873, %v859
  %v878 = vmax.f32 %v874, %v864
  %v879 = vmax.f32 %v875, %v876
  %v880 = vmax.f32 %v877, %v878
  %v881 = vmax.f32 %v879, %v880
  %v882 = vrot.slane %v881, 4
  %v883 = vmax.f32 %v881, %v882
  %v884 = vrot.slane %v883, 2
  %v885 = vmax.f32 %v883, %v884
  %v886 = vrot.slane %v885, 1
  %v887 = vmax.f32 %v885, %v886
  %v888 = vsub.f32 %v789, %v887
  %v889 = vsub.f32 %v794, %v887
  %v890 = vsub.f32 %v799, %v887
  %v891 = vsub.f32 %v804, %v887
  %v892 = vsub.f32 %v809, %v887
  %v893 = vsub.f32 %v814, %v887
  %v894 = vsub.f32 %v819, %v887
  %v895 = vsub.f32 %v824, %v887
  %v896 = vsub.f32 %v829, %v887
  %v897 = vsub.f32 %v834, %v887
  %v898 = vsub.f32 %v839, %v887
  %v899 = vsub.f32 %v844, %v887
  %v900 = vsub.f32 %v849, %v887
  %v901 = vsub.f32 %v854, %v887
  %v902 = vsub.f32 %v859, %v887
  %v903 = vsub.f32 %v864, %v887
  %v904 = vmul.f32 %v888, 1.442695
  %v905 = vpow.pop %v904
  %v906 = vmul.f32 %v889, 1.442695
  %v907 = vpow.pop %v906
  %v908 = vmul.f32 %v890, 1.442695
  %v909 = vpow.pop %v908
  %v910 = vmul.f32 %v891, 1.442695
  %v911 = vpow.pop %v910
  %v912 = vmul.f32 %v892, 1.442695
  %v913 = vpow.pop %v912
  %v914 = vmul.f32 %v893, 1.442695
  %v915 = vpow.pop %v914
  %v916 = vmul.f32 %v894, 1.442695
  %v917 = vpow.pop %v916
  %v918 = vmul.f32 %v895, 1.442695
  %v919 = vpow.pop %v918
  %v920 = vmul.f32 %v896, 1.442695
  %v921 = vpow.pop %v920
  %v922 = vmul.f32 %v897, 1.442695
  %v923 = vpow.pop %v922
  %v924 = vmul.f32 %v898, 1.442695
  %v925 = vpow.pop %v924
  %v926 = vmul.f32 %v899, 1.442695
  %v927 = vpow.pop %v926
  %v928 = vmul.f32 %v900, 1.442695
  %v929 = vpow.pop %v928
  %v930 = vmul.f32 %v901, 1.442695
  %v931 = vpow.pop %v930
  %v932 = vmul.f32 %v902, 1.442695
  %v933 = vpow.pop %v932
  %v934 = vmul.f32 %v903, 1.442695
  %v935 = vpow.pop %v934
  %v936 = vadd.f32 %v905, %v907
  %v937 = vadd.f32 %v936, %v909
  %v938 = vadd.f32 %v937, %v911
  %v939 = vadd.f32 %v938, %v913
  %v940 = vadd.f32 %v939, %v915
  %v941 = vadd.f32 %v940, %v917
  %v942 = vadd.f32 %v941, %v919
  %v943 = vadd.f32 %v942, %v921
  %v944 = vadd.f32 %v943, %v923
  %v945 = vadd.f32 %v944, %v925
  %v946 = vadd.f32 %v945, %v927
  %v947 = vadd.f32 %v946, %v929
  %v948 = vadd.f32 %v947, %v931
  %v949 = vadd.f32 %v948, %v933
  %v950 = vadd.f32 %v949, %v935
  %v951 = vrot.slane %v950, 4
  %v952 = vadd.f32 %v950, %v951
  %v953 = vrot.slane %v952, 2
  %v954 = vadd.f32 %v952, %v953
  %v955 = vrot.slane %v954, 1
  %v956 = vadd.f32 %v954, %v955
  %957 = vmatprep.subr.mxu0 0.0
  %958 = vmatpush1.msra.mxu0 %v935
  %959 = vmatprep.subr.mxu0 0.0
  %960 = vmatpush1.msra.mxu0 %v933
  %961 = vmatprep.subr.mxu0 0.0
  %962 = vmatpush1.msra.mxu0 %v931
  %963 = vmatprep.subr.mxu0 0.0
  %964 = vmatpush1.msra.mxu0 %v929
  %965 = vmatprep.subr.mxu0 0.0
  %966 = vmatpush1.msra.mxu0 %v927
  %967 = vmatprep.subr.mxu0 0.0
  %968 = vmatpush1.msra.mxu0 %v925
  %969 = vmatprep.subr.mxu0 0.0
  %970 = vmatpush1.msra.mxu0 %v923
  %971 = vmatprep.subr.mxu0 0.0
  %972 = vmatpush1.msra.mxu0 %v921
  %973 = vmatprep.subr.mxu0 0.0
  %974 = vmatpush1.msra.mxu0 %v919
  %975 = vmatprep.subr.mxu0 0.0
  %976 = vmatpush1.msra.mxu0 %v917
  %977 = vmatprep.subr.mxu0 0.0
  %978 = vmatpush1.msra.mxu0 %v915
  %979 = vmatprep.subr.mxu0 0.0
  %980 = vmatpush1.msra.mxu0 %v913
  %981 = vmatprep.subr.mxu0 0.0
  %982 = vmatpush1.msra.mxu0 %v911
  %983 = vmatprep.subr.mxu0 0.0
  %984 = vmatpush1.msra.mxu0 %v909
  %985 = vmatprep.subr.mxu0 0.0
  %986 = vmatpush1.msra.mxu0 %v907
  %987 = vmatprep.subr.mxu0 0.0
  %988 = vmatpush1.msra.mxu0 %v905
  %989 = vmatprep.subr.mxu0 0.0
  %990 = vmatpush2.msra.mxu0 0.0
  %991 = vmatprep.subr.mxu0 0.0
  %992 = vmatpush2.msra.mxu0 0.0
  %993 = vmatprep.subr.mxu0 0.0
  %994 = vmatpush2.msra.mxu0 0.0
  %995 = vmatprep.subr.mxu0 0.0
  %996 = vmatpush2.msra.mxu0 0.0
  %997 = vmatprep.subr.mxu0 0.0
  %998 = vmatpush2.msra.mxu0 0.0
  %999 = vmatprep.subr.mxu0 0.0
  %1000 = vmatpush2.msra.mxu0 0.0
  %1001 = vmatprep.subr.mxu0 0.0
  %1002 = vmatpush2.msra.mxu0 0.0
  %1003 = vmatprep.subr.mxu0 0.0
  %1004 = vmatpush2.msra.mxu0 0.0
  %1005 = vmatprep.subr.mxu0 0.0
  %1006 = vmatpush2.msra.mxu0 0.0
  %1007 = vmatprep.subr.mxu0 0.0
  %1008 = vmatpush2.msra.mxu0 0.0
  %1009 = vmatprep.subr.mxu0 0.0
  %1010 = vmatpush2.msra.mxu0 0.0
  %1011 = vmatprep.subr.mxu0 0.0
  %1012 = vmatpush2.msra.mxu0 0.0
  %1013 = vmatprep.subr.mxu0 0.0
  %1014 = vmatpush2.msra.mxu0 0.0
  %1015 = vmatprep.subr.mxu0 0.0
  %1016 = vmatpush2.msra.mxu0 0.0
  %1017 = vmatprep.subr.mxu0 0.0
  %1018 = vmatpush2.msra.mxu0 0.0
  %1019 = vmatprep.subr.mxu0 0.0
  %1020 = vmatpush2.msra.mxu0 0.0
  %1021 = vmatprep.mubr.f32.mxu0 0.0
  %1022 = vmatmul.mubr.f32.gmra.mxu0 %v721
  %v1023 = vpop.f32.mrf.mxu0
  %v1024 = vadd.f32 0.0, %v1023
  %v1025 = vpop.f32.mrf.mxu0
  %1026 = vdwg.mxu0
  %v1027 = vrcp.pop %v956
  %v1028 = vmul.f32 %v1024, %v1027
  %v1029 = vadd.f32 %v714, %v1028
  %1030 = vset.pattern.permute.xlu0 3
  %1031 = vperm.xlu0 %1030, %v36
  %v1032 = vpop.permute.xlu0 %1031
  %v1035 = vsel %vm43, %v35, 0
  %1037 = vmatprep.subr.mxu0 0.0
  %1038 = vmatpush1.msra.mxu0 0.0
  %1039 = vmatprep.subr.mxu0 0.0
  %1040 = vmatpush1.msra.mxu0 0.0
  %1041 = vmatprep.subr.mxu0 0.0
  %1042 = vmatpush1.msra.mxu0 0.0
  %1043 = vmatprep.subr.mxu0 0.0
  %1044 = vmatpush1.msra.mxu0 0.0
  %1045 = vmatprep.subr.mxu0 0.0
  %1046 = vmatpush1.msra.mxu0 0.0
  %1047 = vmatprep.subr.mxu0 0.0
  %1048 = vmatpush1.msra.mxu0 0.0
  %1049 = vmatprep.subr.mxu0 0.0
  %1050 = vmatpush1.msra.mxu0 0.0
  %1051 = vmatprep.subr.mxu0 0.0
  %1052 = vmatpush1.msra.mxu0 0.0
  %1053 = vmatprep.subr.mxu0 0.0
  %1054 = vmatpush1.msra.mxu0 0.0
  %1055 = vmatprep.subr.mxu0 0.0
  %1056 = vmatpush1.msra.mxu0 0.0
  %1057 = vmatprep.subr.mxu0 0.0
  %1058 = vmatpush1.msra.mxu0 0.0
  %1059 = vmatprep.subr.mxu0 0.0
  %1060 = vmatpush1.msra.mxu0 0.0
  %1061 = vmatprep.subr.mxu0 0.0
  %1062 = vmatpush1.msra.mxu0 0.0
  %1063 = vmatprep.subr.mxu0 0.0
  %1064 = vmatpush1.msra.mxu0 0.0
  %1065 = vmatprep.subr.mxu0 0.0
  %1066 = vmatpush1.msra.mxu0 0.0
  %1067 = vmatprep.subr.mxu0 0.0
  %1068 = vmatpush1.msra.mxu0 %v1029
  %1069 = vmatprep.subr.mxu0 0.0
  %1070 = vmatpush2.msra.mxu0 0.0
  %1071 = vmatprep.subr.mxu0 0.0
  %1072 = vmatpush2.msra.mxu0 0.0
  %1073 = vmatprep.subr.mxu0 0.0
  %1074 = vmatpush2.msra.mxu0 0.0
  %1075 = vmatprep.subr.mxu0 0.0
  %1076 = vmatpush2.msra.mxu0 0.0
  %1077 = vmatprep.subr.mxu0 0.0
  %1078 = vmatpush2.msra.mxu0 0.0
  %1079 = vmatprep.subr.mxu0 0.0
  %1080 = vmatpush2.msra.mxu0 0.0
  %1081 = vmatprep.subr.mxu0 0.0
  %1082 = vmatpush2.msra.mxu0 0.0
  %1083 = vmatprep.subr.mxu0 0.0
  %1084 = vmatpush2.msra.mxu0 0.0
  %1085 = vmatprep.subr.mxu0 0.0
  %1086 = vmatpush2.msra.mxu0 0.0
  %1087 = vmatprep.subr.mxu0 0.0
  %1088 = vmatpush2.msra.mxu0 0.0
  %1089 = vmatprep.subr.mxu0 0.0
  %1090 = vmatpush2.msra.mxu0 0.0
  %1091 = vmatprep.subr.mxu0 0.0
  %1092 = vmatpush2.msra.mxu0 0.0
  %1093 = vmatprep.subr.mxu0 0.0
  %1094 = vmatpush2.msra.mxu0 0.0
  %1095 = vmatprep.subr.mxu0 0.0
  %1096 = vmatpush2.msra.mxu0 0.0
  %1097 = vmatprep.subr.mxu0 0.0
  %1098 = vmatpush2.msra.mxu0 0.0
  %1099 = vmatprep.subr.mxu0 0.0
  %1100 = vmatpush2.msra.mxu0 0.0
  %1101 = vmatprep.mubr.f32.mxu0 0.0
  %1102 = vmatmul.mubr.f32.gmra.mxu0 %v1035
  %v1103 = vpop.f32.mrf.mxu0
  %v1104 = vadd.f32 %v1032, %v1103
  %v1105 = vpop.f32.mrf.mxu0
  %1106 = vdwg.mxu0
  %1107 = vset.pattern.permute.xlu0 4
  %1108 = vperm.xlu0 %1107, %v36
  %v1109 = vpop.permute.xlu0 %1108
  %v1111 = vmul.f32 %v1104, %v1109
  %v1112 = vrot.slane %v1111, 4
  %v1113 = vadd.f32 %v1111, %v1112
  %v1114 = vrot.slane %v1113, 2
  %v1115 = vadd.f32 %v1113, %v1114
  %v1116 = vrot.slane %v1115, 1
  %v1117 = vadd.f32 %v1115, %v1116
  %1119 = vset.pattern.permute.xlu0 5
  %1120 = vperm.xlu0 %1119, %v37
  %v1121 = vpop.permute.xlu0 %1120
  %v1123 = vadd.f32 %v1117, %v1121
  %vm1124 = vcmp.ge.s32.totalorder %v23, 8
  %vm1125 = vmor %vm25, %vm1124
  %v1126 = vsel %vm1125, -3.4028235e+38, %v1123
  %1127 = vst [vmem:[%s4] sm:$0x1] %v1126
  %vm1128 = vcmask 1040384
  %v1129 = vsel %vm1128, %v1126, -inf
  %1130 = vmax.xlane.f32.xlu0 %v1129
  %v1131 = vpop.xlane.xlu0 %1130
  %v1132 = vsub.f32 %v1126, %v1131
  %v1133 = vmul.f32 %v1132, 1.442695
  %v1134 = vpow.pop %v1133
  %v1135 = vsel %vm1128, %v1134, 0.0
  %1136 = vadd.xlane.f32.xlu0 %v1135
  %v1137 = vpop.xlane.xlu0 %1136
  %v1138 = vrcp.pop %v1137
  %v1139 = vmul.f32 %v1134, %v1138
  %v1140 = vld [vmem:[%s2] sm:$0xff]
  %v1141 = vld [vmem:[%s2 + $0x8] sm:$0xff]
  %v1142 = vld [vmem:[%s2 + $0x10] sm:$0xff]
  %v1143 = vld [vmem:[%s2 + $0x18] sm:$0xff]
  %v1144 = vld [vmem:[%s2 + $0x20] sm:$0xff]
  %v1145 = vld [vmem:[%s2 + $0x28] sm:$0xff]
  %v1146 = vld [vmem:[%s2 + $0x30] sm:$0xff]
  %v1147 = vld [vmem:[%s2 + $0x38] sm:$0xff]
  %v1148 = vld [vmem:[%s2 + $0x40] sm:$0xff]
  %v1149 = vld [vmem:[%s2 + $0x48] sm:$0xff]
  %v1150 = vld [vmem:[%s2 + $0x50] sm:$0xff]
  %v1151 = vld [vmem:[%s2 + $0x58] sm:$0xff]
  %v1152 = vld [vmem:[%s2 + $0x60] sm:$0xff]
  %v1153 = vld [vmem:[%s2 + $0x68] sm:$0xff]
  %v1154 = vld [vmem:[%s2 + $0x70] sm:$0xff]
  %v1155 = vld [vmem:[%s2 + $0x78] sm:$0xff]
  %v1156 = vld [vmem:[%s2 + $0x80] sm:$0xff]
  %v1157 = vld [vmem:[%s2 + $0x88] sm:$0xff]
  %v1158 = vld [vmem:[%s2 + $0x90] sm:$0xff]
  %v1159 = vld [vmem:[%s2 + $0x98] sm:$0xff]
  %v1160 = vld [vmem:[%s2 + $0xa0] sm:$0xff]
  %v1161 = vld [vmem:[%s2 + $0xa8] sm:$0xff]
  %v1162 = vld [vmem:[%s2 + $0xb0] sm:$0xff]
  %v1163 = vld [vmem:[%s2 + $0xb8] sm:$0xff]
  %v1164 = vld [vmem:[%s2 + $0xc0] sm:$0xff]
  %v1165 = vld [vmem:[%s2 + $0xc8] sm:$0xff]
  %v1166 = vld [vmem:[%s2 + $0xd0] sm:$0xff]
  %v1167 = vld [vmem:[%s2 + $0xd8] sm:$0xff]
  %v1168 = vld [vmem:[%s2 + $0xe0] sm:$0xff]
  %v1169 = vld [vmem:[%s2 + $0xe8] sm:$0xff]
  %v1170 = vld [vmem:[%s2 + $0xf0] sm:$0xff]
  %v1171 = vld [vmem:[%s2 + $0xf8] sm:$0xff]
  %v1172 = vld [vmem:[%s2 + $0x100] sm:$0xff]
  %v1173 = vld [vmem:[%s2 + $0x108] sm:$0xff]
  %v1174 = vld [vmem:[%s2 + $0x110] sm:$0xff]
  %v1175 = vld [vmem:[%s2 + $0x118] sm:$0xff]
  %v1176 = vld [vmem:[%s2 + $0x120] sm:$0xff]
  %v1177 = vld [vmem:[%s2 + $0x128] sm:$0xff]
  %v1178 = vld [vmem:[%s2 + $0x130] sm:$0xff]
  %v1179 = vld [vmem:[%s2 + $0x138] sm:$0xff]
  %v1180 = vld [vmem:[%s2 + $0x140] sm:$0xff]
  %v1181 = vld [vmem:[%s2 + $0x148] sm:$0xff]
  %v1182 = vld [vmem:[%s2 + $0x150] sm:$0xff]
  %v1183 = vld [vmem:[%s2 + $0x158] sm:$0xff]
  %v1184 = vld [vmem:[%s2 + $0x160] sm:$0xff]
  %v1185 = vld [vmem:[%s2 + $0x168] sm:$0xff]
  %v1186 = vld [vmem:[%s2 + $0x170] sm:$0xff]
  %v1187 = vld [vmem:[%s2 + $0x178] sm:$0xff]
  %v1188 = vld [vmem:[%s2 + $0x180] sm:$0xff]
  %v1189 = vld [vmem:[%s2 + $0x188] sm:$0xff]
  %v1190 = vld [vmem:[%s2 + $0x190] sm:$0xff]
  %v1191 = vld [vmem:[%s2 + $0x198] sm:$0xff]
  %v1192 = vld [vmem:[%s2 + $0x1a0] sm:$0xff]
  %v1193 = vld [vmem:[%s2 + $0x1a8] sm:$0xff]
  %v1194 = vld [vmem:[%s2 + $0x1b0] sm:$0xff]
  %v1195 = vld [vmem:[%s2 + $0x1b8] sm:$0xff]
  %v1196 = vld [vmem:[%s2 + $0x1c0] sm:$0xff]
  %v1197 = vld [vmem:[%s2 + $0x1c8] sm:$0xff]
  %v1198 = vld [vmem:[%s2 + $0x1d0] sm:$0xff]
  %v1199 = vld [vmem:[%s2 + $0x1d8] sm:$0xff]
  %v1200 = vld [vmem:[%s2 + $0x1e0] sm:$0xff]
  %v1201 = vld [vmem:[%s2 + $0x1e8] sm:$0xff]
  %v1202 = vld [vmem:[%s2 + $0x1f0] sm:$0xff]
  %v1203 = vld [vmem:[%s2 + $0x1f8] sm:$0xff]
  %1205 = vset.pattern.permute.xlu0 0
  %1206 = vperm.xlu0 %1205, %v1140
  %v1207 = vpop.permute.xlu0 %1206
  %1210 = vset.pattern.permute.xlu0 0
  %1211 = vperm.xlu0 %1210, %v1141
  %v1212 = vpop.permute.xlu0 %1211
  %1215 = vset.pattern.permute.xlu0 0
  %1216 = vperm.xlu0 %1215, %v1142
  %v1217 = vpop.permute.xlu0 %1216
  %1220 = vset.pattern.permute.xlu0 0
  %1221 = vperm.xlu0 %1220, %v1143
  %v1222 = vpop.permute.xlu0 %1221
  %1225 = vset.pattern.permute.xlu0 0
  %1226 = vperm.xlu0 %1225, %v1144
  %v1227 = vpop.permute.xlu0 %1226
  %1230 = vset.pattern.permute.xlu0 0
  %1231 = vperm.xlu0 %1230, %v1145
  %v1232 = vpop.permute.xlu0 %1231
  %1235 = vset.pattern.permute.xlu0 0
  %1236 = vperm.xlu0 %1235, %v1146
  %v1237 = vpop.permute.xlu0 %1236
  %1240 = vset.pattern.permute.xlu0 0
  %1241 = vperm.xlu0 %1240, %v1147
  %v1242 = vpop.permute.xlu0 %1241
  %1245 = vset.pattern.permute.xlu0 0
  %1246 = vperm.xlu0 %1245, %v1148
  %v1247 = vpop.permute.xlu0 %1246
  %1250 = vset.pattern.permute.xlu0 0
  %1251 = vperm.xlu0 %1250, %v1149
  %v1252 = vpop.permute.xlu0 %1251
  %1255 = vset.pattern.permute.xlu0 0
  %1256 = vperm.xlu0 %1255, %v1150
  %v1257 = vpop.permute.xlu0 %1256
  %1260 = vset.pattern.permute.xlu0 0
  %1261 = vperm.xlu0 %1260, %v1151
  %v1262 = vpop.permute.xlu0 %1261
  %1265 = vset.pattern.permute.xlu0 0
  %1266 = vperm.xlu0 %1265, %v1152
  %v1267 = vpop.permute.xlu0 %1266
  %1270 = vset.pattern.permute.xlu0 0
  %1271 = vperm.xlu0 %1270, %v1153
  %v1272 = vpop.permute.xlu0 %1271
  %1275 = vset.pattern.permute.xlu0 0
  %1276 = vperm.xlu0 %1275, %v1154
  %v1277 = vpop.permute.xlu0 %1276
  %1280 = vset.pattern.permute.xlu0 0
  %1281 = vperm.xlu0 %1280, %v1155
  %v1282 = vpop.permute.xlu0 %1281
  %1285 = vset.pattern.permute.xlu0 0
  %1286 = vperm.xlu0 %1285, %v1156
  %v1287 = vpop.permute.xlu0 %1286
  %1290 = vset.pattern.permute.xlu0 0
  %1291 = vperm.xlu0 %1290, %v1157
  %v1292 = vpop.permute.xlu0 %1291
  %1295 = vset.pattern.permute.xlu0 0
  %1296 = vperm.xlu0 %1295, %v1158
  %v1297 = vpop.permute.xlu0 %1296
  %1300 = vset.pattern.permute.xlu0 0
  %1301 = vperm.xlu0 %1300, %v1159
  %v1302 = vpop.permute.xlu0 %1301
  %1305 = vset.pattern.permute.xlu0 0
  %1306 = vperm.xlu0 %1305, %v1160
  %v1307 = vpop.permute.xlu0 %1306
  %1310 = vset.pattern.permute.xlu0 0
  %1311 = vperm.xlu0 %1310, %v1161
  %v1312 = vpop.permute.xlu0 %1311
  %1315 = vset.pattern.permute.xlu0 0
  %1316 = vperm.xlu0 %1315, %v1162
  %v1317 = vpop.permute.xlu0 %1316
  %1320 = vset.pattern.permute.xlu0 0
  %1321 = vperm.xlu0 %1320, %v1163
  %v1322 = vpop.permute.xlu0 %1321
  %1325 = vset.pattern.permute.xlu0 0
  %1326 = vperm.xlu0 %1325, %v1164
  %v1327 = vpop.permute.xlu0 %1326
  %1330 = vset.pattern.permute.xlu0 0
  %1331 = vperm.xlu0 %1330, %v1165
  %v1332 = vpop.permute.xlu0 %1331
  %1335 = vset.pattern.permute.xlu0 0
  %1336 = vperm.xlu0 %1335, %v1166
  %v1337 = vpop.permute.xlu0 %1336
  %1340 = vset.pattern.permute.xlu0 0
  %1341 = vperm.xlu0 %1340, %v1167
  %v1342 = vpop.permute.xlu0 %1341
  %1345 = vset.pattern.permute.xlu0 0
  %1346 = vperm.xlu0 %1345, %v1168
  %v1347 = vpop.permute.xlu0 %1346
  %1350 = vset.pattern.permute.xlu0 0
  %1351 = vperm.xlu0 %1350, %v1169
  %v1352 = vpop.permute.xlu0 %1351
  %1355 = vset.pattern.permute.xlu0 0
  %1356 = vperm.xlu0 %1355, %v1170
  %v1357 = vpop.permute.xlu0 %1356
  %1360 = vset.pattern.permute.xlu0 0
  %1361 = vperm.xlu0 %1360, %v1171
  %v1362 = vpop.permute.xlu0 %1361
  %1365 = vset.pattern.permute.xlu0 0
  %1366 = vperm.xlu0 %1365, %v1172
  %v1367 = vpop.permute.xlu0 %1366
  %1370 = vset.pattern.permute.xlu0 0
  %1371 = vperm.xlu0 %1370, %v1173
  %v1372 = vpop.permute.xlu0 %1371
  %1375 = vset.pattern.permute.xlu0 0
  %1376 = vperm.xlu0 %1375, %v1174
  %v1377 = vpop.permute.xlu0 %1376
  %1380 = vset.pattern.permute.xlu0 0
  %1381 = vperm.xlu0 %1380, %v1175
  %v1382 = vpop.permute.xlu0 %1381
  %1385 = vset.pattern.permute.xlu0 0
  %1386 = vperm.xlu0 %1385, %v1176
  %v1387 = vpop.permute.xlu0 %1386
  %1390 = vset.pattern.permute.xlu0 0
  %1391 = vperm.xlu0 %1390, %v1177
  %v1392 = vpop.permute.xlu0 %1391
  %1395 = vset.pattern.permute.xlu0 0
  %1396 = vperm.xlu0 %1395, %v1178
  %v1397 = vpop.permute.xlu0 %1396
  %1400 = vset.pattern.permute.xlu0 0
  %1401 = vperm.xlu0 %1400, %v1179
  %v1402 = vpop.permute.xlu0 %1401
  %1405 = vset.pattern.permute.xlu0 0
  %1406 = vperm.xlu0 %1405, %v1180
  %v1407 = vpop.permute.xlu0 %1406
  %1410 = vset.pattern.permute.xlu0 0
  %1411 = vperm.xlu0 %1410, %v1181
  %v1412 = vpop.permute.xlu0 %1411
  %1415 = vset.pattern.permute.xlu0 0
  %1416 = vperm.xlu0 %1415, %v1182
  %v1417 = vpop.permute.xlu0 %1416
  %1420 = vset.pattern.permute.xlu0 0
  %1421 = vperm.xlu0 %1420, %v1183
  %v1422 = vpop.permute.xlu0 %1421
  %1425 = vset.pattern.permute.xlu0 0
  %1426 = vperm.xlu0 %1425, %v1184
  %v1427 = vpop.permute.xlu0 %1426
  %1430 = vset.pattern.permute.xlu0 0
  %1431 = vperm.xlu0 %1430, %v1185
  %v1432 = vpop.permute.xlu0 %1431
  %1435 = vset.pattern.permute.xlu0 0
  %1436 = vperm.xlu0 %1435, %v1186
  %v1437 = vpop.permute.xlu0 %1436
  %1440 = vset.pattern.permute.xlu0 0
  %1441 = vperm.xlu0 %1440, %v1187
  %v1442 = vpop.permute.xlu0 %1441
  %1445 = vset.pattern.permute.xlu0 0
  %1446 = vperm.xlu0 %1445, %v1188
  %v1447 = vpop.permute.xlu0 %1446
  %1450 = vset.pattern.permute.xlu0 0
  %1451 = vperm.xlu0 %1450, %v1189
  %v1452 = vpop.permute.xlu0 %1451
  %1455 = vset.pattern.permute.xlu0 0
  %1456 = vperm.xlu0 %1455, %v1190
  %v1457 = vpop.permute.xlu0 %1456
  %1460 = vset.pattern.permute.xlu0 0
  %1461 = vperm.xlu0 %1460, %v1191
  %v1462 = vpop.permute.xlu0 %1461
  %1465 = vset.pattern.permute.xlu0 0
  %1466 = vperm.xlu0 %1465, %v1192
  %v1467 = vpop.permute.xlu0 %1466
  %1470 = vset.pattern.permute.xlu0 0
  %1471 = vperm.xlu0 %1470, %v1193
  %v1472 = vpop.permute.xlu0 %1471
  %1475 = vset.pattern.permute.xlu0 0
  %1476 = vperm.xlu0 %1475, %v1194
  %v1477 = vpop.permute.xlu0 %1476
  %1480 = vset.pattern.permute.xlu0 0
  %1481 = vperm.xlu0 %1480, %v1195
  %v1482 = vpop.permute.xlu0 %1481
  %1485 = vset.pattern.permute.xlu0 0
  %1486 = vperm.xlu0 %1485, %v1196
  %v1487 = vpop.permute.xlu0 %1486
  %1490 = vset.pattern.permute.xlu0 0
  %1491 = vperm.xlu0 %1490, %v1197
  %v1492 = vpop.permute.xlu0 %1491
  %1495 = vset.pattern.permute.xlu0 0
  %1496 = vperm.xlu0 %1495, %v1198
  %v1497 = vpop.permute.xlu0 %1496
  %1500 = vset.pattern.permute.xlu0 0
  %1501 = vperm.xlu0 %1500, %v1199
  %v1502 = vpop.permute.xlu0 %1501
  %1505 = vset.pattern.permute.xlu0 0
  %1506 = vperm.xlu0 %1505, %v1200
  %v1507 = vpop.permute.xlu0 %1506
  %1510 = vset.pattern.permute.xlu0 0
  %1511 = vperm.xlu0 %1510, %v1201
  %v1512 = vpop.permute.xlu0 %1511
  %1515 = vset.pattern.permute.xlu0 0
  %1516 = vperm.xlu0 %1515, %v1202
  %v1517 = vpop.permute.xlu0 %1516
  %1520 = vset.pattern.permute.xlu0 0
  %1521 = vperm.xlu0 %1520, %v1203
  %v1522 = vpop.permute.xlu0 %1521
  %v1524 = vlaneseq
  %v1525 = vshrl.u32 %v1524, 7
  %v1526 = vsub.s32 0, %v1525
  %v1527 = vrot.slane %v1139, %v1526
  %v1528 = vmul.f32 %v1207, %v1527
  %v1529 = vmul.f32 %v1212, %v1527
  %v1530 = vmul.f32 %v1217, %v1527
  %v1531 = vmul.f32 %v1222, %v1527
  %v1532 = vmul.f32 %v1227, %v1527
  %v1533 = vmul.f32 %v1232, %v1527
  %v1534 = vmul.f32 %v1237, %v1527
  %v1535 = vmul.f32 %v1242, %v1527
  %v1536 = vmul.f32 %v1247, %v1527
  %v1537 = vmul.f32 %v1252, %v1527
  %v1538 = vmul.f32 %v1257, %v1527
  %v1539 = vmul.f32 %v1262, %v1527
  %v1540 = vmul.f32 %v1267, %v1527
  %v1541 = vmul.f32 %v1272, %v1527
  %v1542 = vmul.f32 %v1277, %v1527
  %v1543 = vmul.f32 %v1282, %v1527
  %v1544 = vmul.f32 %v1287, %v1527
  %v1545 = vmul.f32 %v1292, %v1527
  %v1546 = vmul.f32 %v1297, %v1527
  %v1547 = vmul.f32 %v1302, %v1527
  %v1548 = vmul.f32 %v1307, %v1527
  %v1549 = vmul.f32 %v1312, %v1527
  %v1550 = vmul.f32 %v1317, %v1527
  %v1551 = vmul.f32 %v1322, %v1527
  %v1552 = vmul.f32 %v1327, %v1527
  %v1553 = vmul.f32 %v1332, %v1527
  %v1554 = vmul.f32 %v1337, %v1527
  %v1555 = vmul.f32 %v1342, %v1527
  %v1556 = vmul.f32 %v1347, %v1527
  %v1557 = vmul.f32 %v1352, %v1527
  %v1558 = vmul.f32 %v1357, %v1527
  %v1559 = vmul.f32 %v1362, %v1527
  %v1560 = vmul.f32 %v1367, %v1527
  %v1561 = vmul.f32 %v1372, %v1527
  %v1562 = vmul.f32 %v1377, %v1527
  %v1563 = vmul.f32 %v1382, %v1527
  %v1564 = vmul.f32 %v1387, %v1527
  %v1565 = vmul.f32 %v1392, %v1527
  %v1566 = vmul.f32 %v1397, %v1527
  %v1567 = vmul.f32 %v1402, %v1527
  %v1568 = vmul.f32 %v1407, %v1527
  %v1569 = vmul.f32 %v1412, %v1527
  %v1570 = vmul.f32 %v1417, %v1527
  %v1571 = vmul.f32 %v1422, %v1527
  %v1572 = vmul.f32 %v1427, %v1527
  %v1573 = vmul.f32 %v1432, %v1527
  %v1574 = vmul.f32 %v1437, %v1527
  %v1575 = vmul.f32 %v1442, %v1527
  %v1576 = vmul.f32 %v1447, %v1527
  %v1577 = vmul.f32 %v1452, %v1527
  %v1578 = vmul.f32 %v1457, %v1527
  %v1579 = vmul.f32 %v1462, %v1527
  %v1580 = vmul.f32 %v1467, %v1527
  %v1581 = vmul.f32 %v1472, %v1527
  %v1582 = vmul.f32 %v1477, %v1527
  %v1583 = vmul.f32 %v1482, %v1527
  %v1584 = vmul.f32 %v1487, %v1527
  %v1585 = vmul.f32 %v1492, %v1527
  %v1586 = vmul.f32 %v1497, %v1527
  %v1587 = vmul.f32 %v1502, %v1527
  %v1588 = vmul.f32 %v1507, %v1527
  %v1589 = vmul.f32 %v1512, %v1527
  %v1590 = vmul.f32 %v1517, %v1527
  %v1591 = vmul.f32 %v1522, %v1527
  %1592 = vst [vmem:[%s5] sm:$0xff] %v1528
  %1593 = vst [vmem:[%s5 + $0x20] sm:$0xff] %v1529
  %1594 = vst [vmem:[%s5 + $0x40] sm:$0xff] %v1530
  %1595 = vst [vmem:[%s5 + $0x60] sm:$0xff] %v1531
  %1596 = vst [vmem:[%s5 + $0x80] sm:$0xff] %v1532
  %1597 = vst [vmem:[%s5 + $0xa0] sm:$0xff] %v1533
  %1598 = vst [vmem:[%s5 + $0xc0] sm:$0xff] %v1534
  %1599 = vst [vmem:[%s5 + $0xe0] sm:$0xff] %v1535
  %1600 = vst [vmem:[%s5 + $0x100] sm:$0xff] %v1536
  %1601 = vst [vmem:[%s5 + $0x120] sm:$0xff] %v1537
  %1602 = vst [vmem:[%s5 + $0x140] sm:$0xff] %v1538
  %1603 = vst [vmem:[%s5 + $0x160] sm:$0xff] %v1539
  %1604 = vst [vmem:[%s5 + $0x180] sm:$0xff] %v1540
  %1605 = vst [vmem:[%s5 + $0x1a0] sm:$0xff] %v1541
  %1606 = vst [vmem:[%s5 + $0x1c0] sm:$0xff] %v1542
  %1607 = vst [vmem:[%s5 + $0x1e0] sm:$0xff] %v1543
  %1608 = vst [vmem:[%s5 + $0x200] sm:$0xff] %v1544
  %1609 = vst [vmem:[%s5 + $0x220] sm:$0xff] %v1545
  %1610 = vst [vmem:[%s5 + $0x240] sm:$0xff] %v1546
  %1611 = vst [vmem:[%s5 + $0x260] sm:$0xff] %v1547
  %1612 = vst [vmem:[%s5 + $0x280] sm:$0xff] %v1548
  %1613 = vst [vmem:[%s5 + $0x2a0] sm:$0xff] %v1549
  %1614 = vst [vmem:[%s5 + $0x2c0] sm:$0xff] %v1550
  %1615 = vst [vmem:[%s5 + $0x2e0] sm:$0xff] %v1551
  %1616 = vst [vmem:[%s5 + $0x300] sm:$0xff] %v1552
  %1617 = vst [vmem:[%s5 + $0x320] sm:$0xff] %v1553
  %1618 = vst [vmem:[%s5 + $0x340] sm:$0xff] %v1554
  %1619 = vst [vmem:[%s5 + $0x360] sm:$0xff] %v1555
  %1620 = vst [vmem:[%s5 + $0x380] sm:$0xff] %v1556
  %1621 = vst [vmem:[%s5 + $0x3a0] sm:$0xff] %v1557
  %1622 = vst [vmem:[%s5 + $0x3c0] sm:$0xff] %v1558
  %1623 = vst [vmem:[%s5 + $0x3e0] sm:$0xff] %v1559
  %1624 = vst [vmem:[%s5 + $0x400] sm:$0xff] %v1560
  %1625 = vst [vmem:[%s5 + $0x420] sm:$0xff] %v1561
  %1626 = vst [vmem:[%s5 + $0x440] sm:$0xff] %v1562
  %1627 = vst [vmem:[%s5 + $0x460] sm:$0xff] %v1563
  %1628 = vst [vmem:[%s5 + $0x480] sm:$0xff] %v1564
  %1629 = vst [vmem:[%s5 + $0x4a0] sm:$0xff] %v1565
  %1630 = vst [vmem:[%s5 + $0x4c0] sm:$0xff] %v1566
  %1631 = vst [vmem:[%s5 + $0x4e0] sm:$0xff] %v1567
  %1632 = vst [vmem:[%s5 + $0x500] sm:$0xff] %v1568
  %1633 = vst [vmem:[%s5 + $0x520] sm:$0xff] %v1569
  %1634 = vst [vmem:[%s5 + $0x540] sm:$0xff] %v1570
  %1635 = vst [vmem:[%s5 + $0x560] sm:$0xff] %v1571
  %1636 = vst [vmem:[%s5 + $0x580] sm:$0xff] %v1572
  %1637 = vst [vmem:[%s5 + $0x5a0] sm:$0xff] %v1573
  %1638 = vst [vmem:[%s5 + $0x5c0] sm:$0xff] %v1574
  %1639 = vst [vmem:[%s5 + $0x5e0] sm:$0xff] %v1575
  %1640 = vst [vmem:[%s5 + $0x600] sm:$0xff] %v1576
  %1641 = vst [vmem:[%s5 + $0x620] sm:$0xff] %v1577
  %1642 = vst [vmem:[%s5 + $0x640] sm:$0xff] %v1578
  %1643 = vst [vmem:[%s5 + $0x660] sm:$0xff] %v1579
  %1644 = vst [vmem:[%s5 + $0x680] sm:$0xff] %v1580
  %1645 = vst [vmem:[%s5 + $0x6a0] sm:$0xff] %v1581
  %1646 = vst [vmem:[%s5 + $0x6c0] sm:$0xff] %v1582
  %1647 = vst [vmem:[%s5 + $0x6e0] sm:$0xff] %v1583
  %1648 = vst [vmem:[%s5 + $0x700] sm:$0xff] %v1584
  %1649 = vst [vmem:[%s5 + $0x720] sm:$0xff] %v1585
  %1650 = vst [vmem:[%s5 + $0x740] sm:$0xff] %v1586
  %1651 = vst [vmem:[%s5 + $0x760] sm:$0xff] %v1587
  %1652 = vst [vmem:[%s5 + $0x780] sm:$0xff] %v1588
  %1653 = vst [vmem:[%s5 + $0x7a0] sm:$0xff] %v1589
  %1654 = vst [vmem:[%s5 + $0x7c0] sm:$0xff] %v1590
  %1655 = vst [vmem:[%s5 + $0x7e0] sm:$0xff] %v1591
  %1656 = vst [vmem:[%s5 + $0x8] sm:$0xff] 0.0
  %1657 = vst [vmem:[%s5 + $0x10] sm:$0xff] 0.0
  %1658 = vst [vmem:[%s5 + $0x18] sm:$0xff] 0.0
  %1659 = vst [vmem:[%s5 + $0x28] sm:$0xff] 0.0
  %1660 = vst [vmem:[%s5 + $0x30] sm:$0xff] 0.0
  %1661 = vst [vmem:[%s5 + $0x38] sm:$0xff] 0.0
  %1662 = vst [vmem:[%s5 + $0x48] sm:$0xff] 0.0
  %1663 = vst [vmem:[%s5 + $0x50] sm:$0xff] 0.0
  %1664 = vst [vmem:[%s5 + $0x58] sm:$0xff] 0.0
  %1665 = vst [vmem:[%s5 + $0x68] sm:$0xff] 0.0
  %1666 = vst [vmem:[%s5 + $0x70] sm:$0xff] 0.0
  %1667 = vst [vmem:[%s5 + $0x78] sm:$0xff] 0.0
  %1668 = vst [vmem:[%s5 + $0x88] sm:$0xff] 0.0
  %1669 = vst [vmem:[%s5 + $0x90] sm:$0xff] 0.0
  %1670 = vst [vmem:[%s5 + $0x98] sm:$0xff] 0.0
  %1671 = vst [vmem:[%s5 + $0xa8] sm:$0xff] 0.0
  %1672 = vst [vmem:[%s5 + $0xb0] sm:$0xff] 0.0
  %1673 = vst [vmem:[%s5 + $0xb8] sm:$0xff] 0.0
  %1674 = vst [vmem:[%s5 + $0xc8] sm:$0xff] 0.0
  %1675 = vst [vmem:[%s5 + $0xd0] sm:$0xff] 0.0
  %1676 = vst [vmem:[%s5 + $0xd8] sm:$0xff] 0.0
  %1677 = vst [vmem:[%s5 + $0xe8] sm:$0xff] 0.0
  %1678 = vst [vmem:[%s5 + $0xf0] sm:$0xff] 0.0
  %1679 = vst [vmem:[%s5 + $0xf8] sm:$0xff] 0.0
  %1680 = vst [vmem:[%s5 + $0x108] sm:$0xff] 0.0
  %1681 = vst [vmem:[%s5 + $0x110] sm:$0xff] 0.0
  %1682 = vst [vmem:[%s5 + $0x118] sm:$0xff] 0.0
  %1683 = vst [vmem:[%s5 + $0x128] sm:$0xff] 0.0
  %1684 = vst [vmem:[%s5 + $0x130] sm:$0xff] 0.0
  %1685 = vst [vmem:[%s5 + $0x138] sm:$0xff] 0.0
  %1686 = vst [vmem:[%s5 + $0x148] sm:$0xff] 0.0
  %1687 = vst [vmem:[%s5 + $0x150] sm:$0xff] 0.0
  %1688 = vst [vmem:[%s5 + $0x158] sm:$0xff] 0.0
  %1689 = vst [vmem:[%s5 + $0x168] sm:$0xff] 0.0
  %1690 = vst [vmem:[%s5 + $0x170] sm:$0xff] 0.0
  %1691 = vst [vmem:[%s5 + $0x178] sm:$0xff] 0.0
  %1692 = vst [vmem:[%s5 + $0x188] sm:$0xff] 0.0
  %1693 = vst [vmem:[%s5 + $0x190] sm:$0xff] 0.0
  %1694 = vst [vmem:[%s5 + $0x198] sm:$0xff] 0.0
  %1695 = vst [vmem:[%s5 + $0x1a8] sm:$0xff] 0.0
  %1696 = vst [vmem:[%s5 + $0x1b0] sm:$0xff] 0.0
  %1697 = vst [vmem:[%s5 + $0x1b8] sm:$0xff] 0.0
  %1698 = vst [vmem:[%s5 + $0x1c8] sm:$0xff] 0.0
  %1699 = vst [vmem:[%s5 + $0x1d0] sm:$0xff] 0.0
  %1700 = vst [vmem:[%s5 + $0x1d8] sm:$0xff] 0.0
  %1701 = vst [vmem:[%s5 + $0x1e8] sm:$0xff] 0.0
  %1702 = vst [vmem:[%s5 + $0x1f0] sm:$0xff] 0.0
  %1703 = vst [vmem:[%s5 + $0x1f8] sm:$0xff] 0.0
  %1704 = vst [vmem:[%s5 + $0x208] sm:$0xff] 0.0
  %1705 = vst [vmem:[%s5 + $0x210] sm:$0xff] 0.0
  %1706 = vst [vmem:[%s5 + $0x218] sm:$0xff] 0.0
  %1707 = vst [vmem:[%s5 + $0x228] sm:$0xff] 0.0
  %1708 = vst [vmem:[%s5 + $0x230] sm:$0xff] 0.0
  %1709 = vst [vmem:[%s5 + $0x238] sm:$0xff] 0.0
  %1710 = vst [vmem:[%s5 + $0x248] sm:$0xff] 0.0
  %1711 = vst [vmem:[%s5 + $0x250] sm:$0xff] 0.0
  %1712 = vst [vmem:[%s5 + $0x258] sm:$0xff] 0.0
  %1713 = vst [vmem:[%s5 + $0x268] sm:$0xff] 0.0
  %1714 = vst [vmem:[%s5 + $0x270] sm:$0xff] 0.0
  %1715 = vst [vmem:[%s5 + $0x278] sm:$0xff] 0.0
  %1716 = vst [vmem:[%s5 + $0x288] sm:$0xff] 0.0
  %1717 = vst [vmem:[%s5 + $0x290] sm:$0xff] 0.0
  %1718 = vst [vmem:[%s5 + $0x298] sm:$0xff] 0.0
  %1719 = vst [vmem:[%s5 + $0x2a8] sm:$0xff] 0.0
  %1720 = vst [vmem:[%s5 + $0x2b0] sm:$0xff] 0.0
  %1721 = vst [vmem:[%s5 + $0x2b8] sm:$0xff] 0.0
  %1722 = vst [vmem:[%s5 + $0x2c8] sm:$0xff] 0.0
  %1723 = vst [vmem:[%s5 + $0x2d0] sm:$0xff] 0.0
  %1724 = vst [vmem:[%s5 + $0x2d8] sm:$0xff] 0.0
  %1725 = vst [vmem:[%s5 + $0x2e8] sm:$0xff] 0.0
  %1726 = vst [vmem:[%s5 + $0x2f0] sm:$0xff] 0.0
  %1727 = vst [vmem:[%s5 + $0x2f8] sm:$0xff] 0.0
  %1728 = vst [vmem:[%s5 + $0x308] sm:$0xff] 0.0
  %1729 = vst [vmem:[%s5 + $0x310] sm:$0xff] 0.0
  %1730 = vst [vmem:[%s5 + $0x318] sm:$0xff] 0.0
  %1731 = vst [vmem:[%s5 + $0x328] sm:$0xff] 0.0
  %1732 = vst [vmem:[%s5 + $0x330] sm:$0xff] 0.0
  %1733 = vst [vmem:[%s5 + $0x338] sm:$0xff] 0.0
  %1734 = vst [vmem:[%s5 + $0x348] sm:$0xff] 0.0
  %1735 = vst [vmem:[%s5 + $0x350] sm:$0xff] 0.0
  %1736 = vst [vmem:[%s5 + $0x358] sm:$0xff] 0.0
  %1737 = vst [vmem:[%s5 + $0x368] sm:$0xff] 0.0
  %1738 = vst [vmem:[%s5 + $0x370] sm:$0xff] 0.0
  %1739 = vst [vmem:[%s5 + $0x378] sm:$0xff] 0.0
  %1740 = vst [vmem:[%s5 + $0x388] sm:$0xff] 0.0
  %1741 = vst [vmem:[%s5 + $0x390] sm:$0xff] 0.0
  %1742 = vst [vmem:[%s5 + $0x398] sm:$0xff] 0.0
  %1743 = vst [vmem:[%s5 + $0x3a8] sm:$0xff] 0.0
  %1744 = vst [vmem:[%s5 + $0x3b0] sm:$0xff] 0.0
  %1745 = vst [vmem:[%s5 + $0x3b8] sm:$0xff] 0.0
  %1746 = vst [vmem:[%s5 + $0x3c8] sm:$0xff] 0.0
  %1747 = vst [vmem:[%s5 + $0x3d0] sm:$0xff] 0.0
  %1748 = vst [vmem:[%s5 + $0x3d8] sm:$0xff] 0.0
  %1749 = vst [vmem:[%s5 + $0x3e8] sm:$0xff] 0.0
  %1750 = vst [vmem:[%s5 + $0x3f0] sm:$0xff] 0.0
  %1751 = vst [vmem:[%s5 + $0x3f8] sm:$0xff] 0.0
  %1752 = vst [vmem:[%s5 + $0x408] sm:$0xff] 0.0
  %1753 = vst [vmem:[%s5 + $0x410] sm:$0xff] 0.0
  %1754 = vst [vmem:[%s5 + $0x418] sm:$0xff] 0.0
  %1755 = vst [vmem:[%s5 + $0x428] sm:$0xff] 0.0
  %1756 = vst [vmem:[%s5 + $0x430] sm:$0xff] 0.0
  %1757 = vst [vmem:[%s5 + $0x438] sm:$0xff] 0.0
  %1758 = vst [vmem:[%s5 + $0x448] sm:$0xff] 0.0
  %1759 = vst [vmem:[%s5 + $0x450] sm:$0xff] 0.0
  %1760 = vst [vmem:[%s5 + $0x458] sm:$0xff] 0.0
  %1761 = vst [vmem:[%s5 + $0x468] sm:$0xff] 0.0
  %1762 = vst [vmem:[%s5 + $0x470] sm:$0xff] 0.0
  %1763 = vst [vmem:[%s5 + $0x478] sm:$0xff] 0.0
  %1764 = vst [vmem:[%s5 + $0x488] sm:$0xff] 0.0
  %1765 = vst [vmem:[%s5 + $0x490] sm:$0xff] 0.0
  %1766 = vst [vmem:[%s5 + $0x498] sm:$0xff] 0.0
  %1767 = vst [vmem:[%s5 + $0x4a8] sm:$0xff] 0.0
  %1768 = vst [vmem:[%s5 + $0x4b0] sm:$0xff] 0.0
  %1769 = vst [vmem:[%s5 + $0x4b8] sm:$0xff] 0.0
  %1770 = vst [vmem:[%s5 + $0x4c8] sm:$0xff] 0.0
  %1771 = vst [vmem:[%s5 + $0x4d0] sm:$0xff] 0.0
  %1772 = vst [vmem:[%s5 + $0x4d8] sm:$0xff] 0.0
  %1773 = vst [vmem:[%s5 + $0x4e8] sm:$0xff] 0.0
  %1774 = vst [vmem:[%s5 + $0x4f0] sm:$0xff] 0.0
  %1775 = vst [vmem:[%s5 + $0x4f8] sm:$0xff] 0.0
  %1776 = vst [vmem:[%s5 + $0x508] sm:$0xff] 0.0
  %1777 = vst [vmem:[%s5 + $0x510] sm:$0xff] 0.0
  %1778 = vst [vmem:[%s5 + $0x518] sm:$0xff] 0.0
  %1779 = vst [vmem:[%s5 + $0x528] sm:$0xff] 0.0
  %1780 = vst [vmem:[%s5 + $0x530] sm:$0xff] 0.0
  %1781 = vst [vmem:[%s5 + $0x538] sm:$0xff] 0.0
  %1782 = vst [vmem:[%s5 + $0x548] sm:$0xff] 0.0
  %1783 = vst [vmem:[%s5 + $0x550] sm:$0xff] 0.0
  %1784 = vst [vmem:[%s5 + $0x558] sm:$0xff] 0.0
  %1785 = vst [vmem:[%s5 + $0x568] sm:$0xff] 0.0
  %1786 = vst [vmem:[%s5 + $0x570] sm:$0xff] 0.0
  %1787 = vst [vmem:[%s5 + $0x578] sm:$0xff] 0.0
  %1788 = vst [vmem:[%s5 + $0x588] sm:$0xff] 0.0
  %1789 = vst [vmem:[%s5 + $0x590] sm:$0xff] 0.0
  %1790 = vst [vmem:[%s5 + $0x598] sm:$0xff] 0.0
  %1791 = vst [vmem:[%s5 + $0x5a8] sm:$0xff] 0.0
  %1792 = vst [vmem:[%s5 + $0x5b0] sm:$0xff] 0.0
  %1793 = vst [vmem:[%s5 + $0x5b8] sm:$0xff] 0.0
  %1794 = vst [vmem:[%s5 + $0x5c8] sm:$0xff] 0.0
  %1795 = vst [vmem:[%s5 + $0x5d0] sm:$0xff] 0.0
  %1796 = vst [vmem:[%s5 + $0x5d8] sm:$0xff] 0.0
  %1797 = vst [vmem:[%s5 + $0x5e8] sm:$0xff] 0.0
  %1798 = vst [vmem:[%s5 + $0x5f0] sm:$0xff] 0.0
  %1799 = vst [vmem:[%s5 + $0x5f8] sm:$0xff] 0.0
  %1800 = vst [vmem:[%s5 + $0x608] sm:$0xff] 0.0
  %1801 = vst [vmem:[%s5 + $0x610] sm:$0xff] 0.0
  %1802 = vst [vmem:[%s5 + $0x618] sm:$0xff] 0.0
  %1803 = vst [vmem:[%s5 + $0x628] sm:$0xff] 0.0
  %1804 = vst [vmem:[%s5 + $0x630] sm:$0xff] 0.0
  %1805 = vst [vmem:[%s5 + $0x638] sm:$0xff] 0.0
  %1806 = vst [vmem:[%s5 + $0x648] sm:$0xff] 0.0
  %1807 = vst [vmem:[%s5 + $0x650] sm:$0xff] 0.0
  %1808 = vst [vmem:[%s5 + $0x658] sm:$0xff] 0.0
  %1809 = vst [vmem:[%s5 + $0x668] sm:$0xff] 0.0
  %1810 = vst [vmem:[%s5 + $0x670] sm:$0xff] 0.0
  %1811 = vst [vmem:[%s5 + $0x678] sm:$0xff] 0.0
  %1812 = vst [vmem:[%s5 + $0x688] sm:$0xff] 0.0
  %1813 = vst [vmem:[%s5 + $0x690] sm:$0xff] 0.0
  %1814 = vst [vmem:[%s5 + $0x698] sm:$0xff] 0.0
  %1815 = vst [vmem:[%s5 + $0x6a8] sm:$0xff] 0.0
  %1816 = vst [vmem:[%s5 + $0x6b0] sm:$0xff] 0.0
  %1817 = vst [vmem:[%s5 + $0x6b8] sm:$0xff] 0.0
  %1818 = vst [vmem:[%s5 + $0x6c8] sm:$0xff] 0.0
  %1819 = vst [vmem:[%s5 + $0x6d0] sm:$0xff] 0.0
  %1820 = vst [vmem:[%s5 + $0x6d8] sm:$0xff] 0.0
  %1821 = vst [vmem:[%s5 + $0x6e8] sm:$0xff] 0.0
  %1822 = vst [vmem:[%s5 + $0x6f0] sm:$0xff] 0.0
  %1823 = vst [vmem:[%s5 + $0x6f8] sm:$0xff] 0.0
  %1824 = vst [vmem:[%s5 + $0x708] sm:$0xff] 0.0
  %1825 = vst [vmem:[%s5 + $0x710] sm:$0xff] 0.0
  %1826 = vst [vmem:[%s5 + $0x718] sm:$0xff] 0.0
  %1827 = vst [vmem:[%s5 + $0x728] sm:$0xff] 0.0
  %1828 = vst [vmem:[%s5 + $0x730] sm:$0xff] 0.0
  %1829 = vst [vmem:[%s5 + $0x738] sm:$0xff] 0.0
  %1830 = vst [vmem:[%s5 + $0x748] sm:$0xff] 0.0
  %1831 = vst [vmem:[%s5 + $0x750] sm:$0xff] 0.0
  %1832 = vst [vmem:[%s5 + $0x758] sm:$0xff] 0.0
  %1833 = vst [vmem:[%s5 + $0x768] sm:$0xff] 0.0
  %1834 = vst [vmem:[%s5 + $0x770] sm:$0xff] 0.0
  %1835 = vst [vmem:[%s5 + $0x778] sm:$0xff] 0.0
  %1836 = vst [vmem:[%s5 + $0x788] sm:$0xff] 0.0
  %1837 = vst [vmem:[%s5 + $0x790] sm:$0xff] 0.0
  %1838 = vst [vmem:[%s5 + $0x798] sm:$0xff] 0.0
  %1839 = vst [vmem:[%s5 + $0x7a8] sm:$0xff] 0.0
  %1840 = vst [vmem:[%s5 + $0x7b0] sm:$0xff] 0.0
  %1841 = vst [vmem:[%s5 + $0x7b8] sm:$0xff] 0.0
  %1842 = vst [vmem:[%s5 + $0x7c8] sm:$0xff] 0.0
  %1843 = vst [vmem:[%s5 + $0x7d0] sm:$0xff] 0.0
  %1844 = vst [vmem:[%s5 + $0x7d8] sm:$0xff] 0.0
  %1845 = vst [vmem:[%s5 + $0x7e8] sm:$0xff] 0.0
  %1846 = vst [vmem:[%s5 + $0x7f0] sm:$0xff] 0.0
  %1847 = vst [vmem:[%s5 + $0x7f8] sm:$0xff] 0.0
  // Predicated region
  $region18: #{net_forward.3} parent=0 // pred_check
    _
  $region19: #{net_forward.3} parent=0 // pred_check_branch
    %1849 = sbr.rel (0) target = $region21
  $region20: #{net_forward.3} parent=0 // pred_region
    _
  $region21: #{net_forward.3} parent=0 // pred_fallthru
    _
  // Predicated region
  $region22: #{net_forward.3} parent=0 // pred_check
    _
  $region23: #{net_forward.3} parent=0 // pred_check_branch
    %1851 = sbr.rel (0) target = $region25
  $region24: #{net_forward.3} parent=0 // pred_region
    _
  $region25: #{net_forward.3} parent=0 // pred_fallthru
    _
  // Predicated region
  $region26: #{net_forward.3} parent=0 // pred_check
    _
  $region27: #{net_forward.3} parent=0 // pred_check_branch
    %1853 = sbr.rel (0) target = $region29
  $region28: #{net_forward.3} parent=0 // pred_region
    _
  $region29: #{net_forward.3} parent=0 // pred_fallthru
    _
  // Predicated region
  $region30: #{net_forward.3} parent=0 // pred_check
    _
  $region31: #{net_forward.3} parent=0 // pred_check_branch
    %1855 = sbr.rel (0) target = $region33
  $region32: #{net_forward.3} parent=0 // pred_region
    _
  $region33: #{net_forward.3} parent=0 // pred_fallthru
    _

</llo_original>
